<compile_context>
chip_gen: v6e
topology: v6e:2x2x1
jax: 0.10.0
libtpu: 0.0.40
codegen_flags: <defaults>
</compile_context>

<pallas_src>
import functools
import math

import jax
import jax.numpy as jnp
from jax.experimental import pallas as pl
from jax.experimental.pallas import tpu as pltpu

PROJ_DIM = 16384          # projDim / output_dim of the CBP module
N1 = 128                  # 16384 = 128 * 128  (Cooley-Tukey split)
N2 = 128
THRESH = 1e-8             # CBP thresh
L2_EPS = 1e-12            # F.normalize eps


# --------------------------------------------------------------------------
# Kernel A: sketch spectra (matmul with Q) + complex product + per-sample
#           spatial sum (segment-sum matmul).  Grid: (D // d_tile,)
# --------------------------------------------------------------------------
def _sketch_spectrum_product_kernel(x_ref, seg_ref, q1r_ref, q1i_ref,
                                    q2r_ref, q2i_ref, pr_ref, pi_ref):
    xb = x_ref[...]                                        # (M, C), M = B*HW
    f1r = jnp.dot(xb, q1r_ref[...], preferred_element_type=jnp.float32)
    f1i = jnp.dot(xb, q1i_ref[...], preferred_element_type=jnp.float32)
    f2r = jnp.dot(xb, q2r_ref[...], preferred_element_type=jnp.float32)
    f2i = jnp.dot(xb, q2i_ref[...], preferred_element_type=jnp.float32)
    # complex product FFT(s1)*FFT(s2) per spatial row (f32)
    prod_r = f1r * f2r - f1i * f2i                         # (M, d_tile)
    prod_i = f1r * f2i + f1i * f2r
    # per-sample sum over spatial rows via 0/1 segment matrix (B, M)
    seg = seg_ref[...]
    pr_ref[...] = jnp.dot(seg, prod_r, preferred_element_type=jnp.float32)
    pi_ref[...] = jnp.dot(seg, prod_i, preferred_element_type=jnp.float32)


# --------------------------------------------------------------------------
# Kernel B: radix-128 inverse FFT (two complex matmul stages + twiddle),
#           signed sqrt, per-sample L2 normalization.  bt samples / step.
# --------------------------------------------------------------------------
def _ifft_sqrt_l2_kernel(br_ref, bi_ref, er_ref, ei_ref, tr_ref, ti_ref,
                         o_ref, *, bt):
    Br = br_ref[...]               # (N2, bt*N1): col block b is B_b[k2, k1]
    Bi = bi_ref[...]
    Er = er_ref[...]               # (N1, N1)  cos(+2*pi*n*k/128)  (symmetric)
    Ei = ei_ref[...]               # (N1, N1)  sin(+2*pi*n*k/128)  (symmetric)
    Tr = tr_ref[...]               # (N2, bt*N1) tiled cos(+2*pi*n2*k1/16384)
    Ti = ti_ref[...]

    # stage 1 (batched across bt samples): C1[n2, k1] = sum_k2 E[n2,k2] B[k2,k1]
    c1r = (jnp.dot(Er, Br, preferred_element_type=jnp.float32)
           - jnp.dot(Ei, Bi, preferred_element_type=jnp.float32))
    c1i = (jnp.dot(Er, Bi, preferred_element_type=jnp.float32)
           + jnp.dot(Ei, Br, preferred_element_type=jnp.float32))

    # twiddle
    c2r = c1r * Tr - c1i * Ti
    c2i = c1r * Ti + c1i * Tr

    # stage 2 + epilogue per sample (lane slices at multiples of 128)
    for b in range(bt):
        c2r_b = c2r[:, b * N1:(b + 1) * N1]
        c2i_b = c2i[:, b * N1:(b + 1) * N1]
        c3r = (jnp.dot(c2r_b, Er, preferred_element_type=jnp.float32)
               - jnp.dot(c2i_b, Ei, preferred_element_type=jnp.float32))

        # y[128*n1 + n2] = C3[n2, n1] / D  -> store as [n1, n2]
        y = jnp.transpose(c3r) * (1.0 / PROJ_DIM)

        # signed sqrt (torch.sign convention: sign(0) = 0)
        sgn = jnp.where(y > 0.0, 1.0, jnp.where(y < 0.0, -1.0, 0.0))
        ys = sgn * jnp.sqrt(jnp.abs(y) + THRESH)

        # per-sample L2 normalize (F.normalize, p=2, eps=1e-12)
        norm = jnp.sqrt(jnp.sum(ys * ys))
        o_ref[b] = ys / jnp.maximum(norm, L2_EPS)


# --------------------------------------------------------------------------
# Parameter setup (deterministic, in-script)
# --------------------------------------------------------------------------
def make_cbp_params(input_dim, key, q_dtype=jnp.bfloat16):
    """Count-sketch hashes/signs and precomputed DFT/twiddle tables.

    The big sketch-spectrum tables Q* are stored in `q_dtype` (bf16 by default
    to halve HBM traffic and hit the native bf16 MXU path); the small 128x128
    IDFT/twiddle tables stay f32.
    """
    D = PROJ_DIM
    kh1, kh2, kw1, kw2 = jax.random.split(key, 4)
    h1 = jax.random.randint(kh1, (input_dim,), 0, D, dtype=jnp.int32)
    h2 = jax.random.randint(kh2, (input_dim,), 0, D, dtype=jnp.int32)
    w1 = (2 * jax.random.randint(kw1, (input_dim,), 0, 2, dtype=jnp.int32) - 1
          ).astype(jnp.float32)
    w2 = (2 * jax.random.randint(kw2, (input_dim,), 0, 2, dtype=jnp.int32) - 1
          ).astype(jnp.float32)

    k = jnp.arange(D, dtype=jnp.int32)

    def spectrum(h, w):
        # FFT of the count-sketch matrix rows: w[c]*exp(-2i*pi*h[c]*k/D)
        phase = (h[:, None] * k[None, :]) % D                 # exact in int32
        ang = (-2.0 * math.pi / D) * phase.astype(jnp.float32)
        return ((w[:, None] * jnp.cos(ang)).astype(q_dtype),
                (w[:, None] * jnp.sin(ang)).astype(q_dtype))

    q1r, q1i = spectrum(h1, w1)
    q2r, q2i = spectrum(h2, w2)

    n = jnp.arange(N1, dtype=jnp.int32)
    ph_e = (n[:, None] * n[None, :]) % N1
    ang_e = (2.0 * math.pi / N1) * ph_e.astype(jnp.float32)   # inverse-DFT sign
    er, ei = jnp.cos(ang_e), jnp.sin(ang_e)

    ang_t = (2.0 * math.pi / PROJ_DIM) * (n[:, None] * n[None, :]).astype(jnp.float32)
    tr, ti = jnp.cos(ang_t), jnp.sin(ang_t)

    return dict(h1=h1, h2=h2, w1=w1, w2=w2,
                q1r=q1r, q1i=q1i, q2r=q2r, q2i=q2i,
                er=er, ei=ei, tr=tr, ti=ti)


# --------------------------------------------------------------------------
# Forward wrapper
# --------------------------------------------------------------------------
def pooling_cbp_forward(x, params, *, d_tile=512,
                        vmem_limit_bytes=56 * 1024 * 1024):
    """PoolingCBP.forward.  x: (B, C, H, W) float32 -> (B, 16384) float32.

    d_tile=512 keeps the double-buffered Q tiles within VMEM at realistic
    input_dim (e.g. C=2048) on all generations incl. v7x; it can be raised to
    1024-2048 on v5e/v6e (128 MiB VMEM) for slightly fewer grid steps.
    """
    B, C, H, W = x.shape
    HW = H * W
    M = B * HW
    D = PROJ_DIM
    assert D % d_tile == 0 and d_tile % 128 == 0

    cdt = params["q1r"].dtype   # compute dtype of the sketch matmuls (bf16/f32)

    # glue: x.view(B, C, H, -1) -> channels-last rows (row m = b*HW + p)
    xf = jnp.transpose(x.reshape(B, C, H, -1), (0, 2, 3, 1)).reshape(M, C)
    xf = xf.astype(cdt)

    # 0/1 segment-sum matrix: seg[b, m] = 1 iff row m belongs to sample b
    row_batch = jnp.arange(M, dtype=jnp.int32) // HW
    seg = (jnp.arange(B, dtype=jnp.int32)[:, None] == row_batch[None, :]
           ).astype(jnp.float32)

    # ---- Kernel A: sketch spectra + complex product + per-sample sum -------
    pr, pi = pl.pallas_call(
        _sketch_spectrum_product_kernel,
        out_shape=(jax.ShapeDtypeStruct((B, D), jnp.float32),
                   jax.ShapeDtypeStruct((B, D), jnp.float32)),
        grid_spec=pltpu.PrefetchScalarGridSpec(
            num_scalar_prefetch=0,
            grid=(D // d_tile,),
            in_specs=[
                pl.BlockSpec((M, C), lambda d: (0, 0)),      # x: resident
                pl.BlockSpec((B, M), lambda d: (0, 0)),      # seg: resident
                pl.BlockSpec((C, d_tile), lambda d: (0, d)),  # Q streamed once
                pl.BlockSpec((C, d_tile), lambda d: (0, d)),
                pl.BlockSpec((C, d_tile), lambda d: (0, d)),
                pl.BlockSpec((C, d_tile), lambda d: (0, d)),
            ],
            out_specs=[
                pl.BlockSpec((B, d_tile), lambda d: (0, d)),
                pl.BlockSpec((B, d_tile), lambda d: (0, d)),
            ]),
        compiler_params=pltpu.CompilerParams(
            dimension_semantics=("parallel",),
            vmem_limit_bytes=vmem_limit_bytes),
    )(xf, seg, params["q1r"], params["q1i"], params["q2r"], params["q2i"])

    # glue: column-stack per-sample spectra for Kernel B
    # brg[k2, b*N1 + k1] = P_b[128*k2 + k1]
    brg = pr.reshape(B, N2, N1).transpose(1, 0, 2).reshape(N2, B * N1)
    big = pi.reshape(B, N2, N1).transpose(1, 0, 2).reshape(N2, B * N1)

    bt = max(g for g in (4, 2, 1) if B % g == 0)   # samples per Kernel B step
    trt = jnp.tile(params["tr"], (1, bt))
    tit = jnp.tile(params["ti"], (1, bt))

    # ---- Kernel B: inverse FFT + signed sqrt + L2 normalize ----------------
    y = pl.pallas_call(
        functools.partial(_ifft_sqrt_l2_kernel, bt=bt),
        out_shape=jax.ShapeDtypeStruct((B, N1, N2), jnp.float32),
        grid_spec=pltpu.PrefetchScalarGridSpec(
            num_scalar_prefetch=0,
            grid=(B // bt,),
            in_specs=[
                pl.BlockSpec((N2, bt * N1), lambda g: (0, g)),
                pl.BlockSpec((N2, bt * N1), lambda g: (0, g)),
                pl.BlockSpec((N1, N1), lambda g: (0, 0)),
                pl.BlockSpec((N1, N1), lambda g: (0, 0)),
                pl.BlockSpec((N2, bt * N1), lambda g: (0, 0)),
                pl.BlockSpec((N2, bt * N1), lambda g: (0, 0)),
            ],
            out_specs=pl.BlockSpec((bt, N1, N2), lambda g: (g, 0, 0))),
        compiler_params=pltpu.CompilerParams(
            dimension_semantics=("parallel",)),
    )(brg, big, params["er"], params["ei"], trt, tit)

    # glue: torch.flatten(..., 1)
    return y.reshape(B, D)


# --------------------------------------------------------------------------
# Pure-JAX reference (uses jnp.fft) for correctness verification
# --------------------------------------------------------------------------
def pooling_cbp_reference(x, params):
    B, C, H, W = x.shape
    D = PROJ_DIM
    xf = jnp.transpose(x.reshape(B, C, H, -1), (0, 2, 3, 1)).reshape(B, H * W, C)
    m1 = jnp.zeros((C, D), jnp.float32).at[jnp.arange(C), params["h1"]].set(params["w1"])
    m2 = jnp.zeros((C, D), jnp.float32).at[jnp.arange(C), params["h2"]].set(params["w2"])
    s1 = jnp.einsum("bpc,cd->bpd", xf, m1, precision=jax.lax.Precision.HIGHEST)
    s2 = jnp.einsum("bpc,cd->bpd", xf, m2, precision=jax.lax.Precision.HIGHEST)
    f1 = jnp.fft.fft(s1)
    f2 = jnp.fft.fft(s2)
    y = jnp.real(jnp.fft.ifft(f1 * f2)).sum(axis=1)
    sgn = jnp.where(y > 0.0, 1.0, jnp.where(y < 0.0, -1.0, 0.0))
    ys = sgn * jnp.sqrt(jnp.abs(y) + THRESH)
    n = jnp.sqrt(jnp.sum(ys * ys, axis=1, keepdims=True))
    return ys / jnp.maximum(n, L2_EPS)


if __name__ == "__main__":
    # Small, deterministic example (input_dim = C = 8 instead of 2048).
    B, C, H, W = 2, 8, 4, 4
    key = jax.random.PRNGKey(0)
    kx, kp = jax.random.split(key)
    x = jax.random.normal(kx, (B, C, H, W), dtype=jnp.float32)

    params_f32 = make_cbp_params(C, kp, q_dtype=jnp.float32)
    params_bf16 = make_cbp_params(C, kp, q_dtype=jnp.bfloat16)   # default fast path

    fwd = jax.jit(pooling_cbp_forward)

    out_f32 = jax.block_until_ready(fwd(x, params_f32))
    out_bf16 = jax.block_until_ready(fwd(x, params_bf16))

    assert out_f32.shape == (B, PROJ_DIM), out_f32.shape
    assert out_f32.dtype == jnp.float32, out_f32.dtype
    assert out_bf16.shape == (B, PROJ_DIM), out_bf16.shape
    assert out_bf16.dtype == jnp.float32, out_bf16.dtype

    ref = pooling_cbp_reference(x, params_f32)

    # strict check of the algorithm (f32 Q path)
    err32 = float(jnp.max(jnp.abs(out_f32 - ref)))
    assert jnp.allclose(out_f32, ref, atol=1e-3, rtol=1e-2), f"f32 max abs err {err32}"

    # bf16-Q fast path: looser tolerance (bf16 table rounding gets amplified by
    # the signed-sqrt at near-zero bins for this tiny C; harmless at real C).
    err16 = float(jnp.max(jnp.abs(out_bf16 - ref)))
    assert jnp.allclose(out_bf16, ref, atol=3e-2, rtol=5e-2), f"bf16 max abs err {err16}"

    print("KERNEL_OK")
</pallas_src>

<mosaic_0001>
module attributes {stable_mosaic.version = 11 : i64} {
  func.func @_sketch_spectrum_product_kernel(%arg0: i32, %arg1: memref<32x8xf32, #tpu.memory_space<vmem>>, %arg2: memref<2x32xf32, #tpu.memory_space<vmem>>, %arg3: memref<8x512xf32, #tpu.memory_space<vmem>>, %arg4: memref<8x512xf32, #tpu.memory_space<vmem>>, %arg5: memref<8x512xf32, #tpu.memory_space<vmem>>, %arg6: memref<8x512xf32, #tpu.memory_space<vmem>>, %arg7: memref<2x512xf32, #tpu.memory_space<vmem>>, %arg8: memref<2x512xf32, #tpu.memory_space<vmem>>) attributes {dimension_semantics = [#tpu.dimension_semantics<parallel>], iteration_bounds = array<i64: 32>, scalar_prefetch = 0 : i64, scratch_operands = 0 : i64, tpu.core_type = #tpu.core_type<tc>, window_params = [{pipeline_mode = #tpu.pipeline_mode<synchronous>, transform_indices = @transform_0, window_bounds = array<i64: 32, 8>}, {pipeline_mode = #tpu.pipeline_mode<synchronous>, transform_indices = @transform_1, window_bounds = array<i64: 2, 32>}, {transform_indices = @transform_2, window_bounds = array<i64: 8, 512>}, {transform_indices = @transform_3, window_bounds = array<i64: 8, 512>}, {transform_indices = @transform_4, window_bounds = array<i64: 8, 512>}, {transform_indices = @transform_5, window_bounds = array<i64: 8, 512>}, {transform_indices = @transform_6, window_bounds = array<i64: 2, 512>}, {transform_indices = @transform_7, window_bounds = array<i64: 2, 512>}]} {
    %c0 = arith.constant 0 : index
    %c0_0 = arith.constant 0 : index
    %0 = vector.load %arg1[%c0, %c0_0] : memref<32x8xf32, #tpu.memory_space<vmem>>, vector<32x8xf32>
    %c0_1 = arith.constant 0 : index
    %c0_2 = arith.constant 0 : index
    %1 = vector.load %arg3[%c0_1, %c0_2] : memref<8x512xf32, #tpu.memory_space<vmem>>, vector<8x512xf32>
    %cst = arith.constant dense<0.000000e+00> : vector<32x512xf32>
    %2 = tpu.matmul %0, %1, %cst {dimension_numbers = #tpu.dot_dimension_numbers<[1], [0], [0], [1], [0, 0, 1, 1], [], []>} : vector<32x8xf32>, vector<8x512xf32>, vector<32x512xf32> -> vector<32x512xf32>
    %c0_3 = arith.constant 0 : index
    %c0_4 = arith.constant 0 : index
    %3 = vector.load %arg4[%c0_3, %c0_4] : memref<8x512xf32, #tpu.memory_space<vmem>>, vector<8x512xf32>
    %cst_5 = arith.constant dense<0.000000e+00> : vector<32x512xf32>
    %4 = tpu.matmul %0, %3, %cst_5 {dimension_numbers = #tpu.dot_dimension_numbers<[1], [0], [0], [1], [0, 0, 1, 1], [], []>} : vector<32x8xf32>, vector<8x512xf32>, vector<32x512xf32> -> vector<32x512xf32>
    %c0_6 = arith.constant 0 : index
    %c0_7 = arith.constant 0 : index
    %5 = vector.load %arg5[%c0_6, %c0_7] : memref<8x512xf32, #tpu.memory_space<vmem>>, vector<8x512xf32>
    %cst_8 = arith.constant dense<0.000000e+00> : vector<32x512xf32>
    %6 = tpu.matmul %0, %5, %cst_8 {dimension_numbers = #tpu.dot_dimension_numbers<[1], [0], [0], [1], [0, 0, 1, 1], [], []>} : vector<32x8xf32>, vector<8x512xf32>, vector<32x512xf32> -> vector<32x512xf32>
    %c0_9 = arith.constant 0 : index
    %c0_10 = arith.constant 0 : index
    %7 = vector.load %arg6[%c0_9, %c0_10] : memref<8x512xf32, #tpu.memory_space<vmem>>, vector<8x512xf32>
    %cst_11 = arith.constant dense<0.000000e+00> : vector<32x512xf32>
    %8 = tpu.matmul %0, %7, %cst_11 {dimension_numbers = #tpu.dot_dimension_numbers<[1], [0], [0], [1], [0, 0, 1, 1], [], []>} : vector<32x8xf32>, vector<8x512xf32>, vector<32x512xf32> -> vector<32x512xf32>
    %9 = arith.mulf %2, %6 : vector<32x512xf32>
    %10 = arith.mulf %4, %8 : vector<32x512xf32>
    %11 = arith.subf %9, %10 : vector<32x512xf32>
    %12 = arith.mulf %2, %8 : vector<32x512xf32>
    %13 = arith.mulf %4, %6 : vector<32x512xf32>
    %14 = arith.addf %12, %13 : vector<32x512xf32>
    %c0_12 = arith.constant 0 : index
    %c0_13 = arith.constant 0 : index
    %15 = vector.load %arg2[%c0_12, %c0_13] : memref<2x32xf32, #tpu.memory_space<vmem>>, vector<2x32xf32>
    %cst_14 = arith.constant dense<0.000000e+00> : vector<2x512xf32>
    %16 = tpu.matmul %15, %11, %cst_14 {dimension_numbers = #tpu.dot_dimension_numbers<[1], [0], [0], [1], [0, 0, 1, 1], [], []>} : vector<2x32xf32>, vector<32x512xf32>, vector<2x512xf32> -> vector<2x512xf32>
    %c0_15 = arith.constant 0 : index
    %c0_16 = arith.constant 0 : index
    %17 = vector.load %arg7[%c0_15, %c0_16] : memref<2x512xf32, #tpu.memory_space<vmem>>, vector<2x512xf32>
    tpu.vector_store %arg7[%c0_15, %c0_16], %16 {strides = array<i32>} : memref<2x512xf32, #tpu.memory_space<vmem>>, vector<2x512xf32>,
    %cst_17 = arith.constant dense<0.000000e+00> : vector<2x512xf32>
    %18 = tpu.matmul %15, %14, %cst_17 {dimension_numbers = #tpu.dot_dimension_numbers<[1], [0], [0], [1], [0, 0, 1, 1], [], []>} : vector<2x32xf32>, vector<32x512xf32>, vector<2x512xf32> -> vector<2x512xf32>
    %c0_18 = arith.constant 0 : index
    %c0_19 = arith.constant 0 : index
    %19 = vector.load %arg8[%c0_18, %c0_19] : memref<2x512xf32, #tpu.memory_space<vmem>>, vector<2x512xf32>
    tpu.vector_store %arg8[%c0_18, %c0_19], %18 {strides = array<i32>} : memref<2x512xf32, #tpu.memory_space<vmem>>, vector<2x512xf32>,
    return
  }
  func.func @transform_0(%arg0: i32) -> (i32, i32) {
    %c0_i32 = arith.constant 0 : i32
    %c0_i32_0 = arith.constant 0 : i32
    %c0_i32_1 = arith.constant 0 : i32
    return %c0_i32, %c0_i32_0 : i32, i32
  }
  func.func @transform_1(%arg0: i32) -> (i32, i32) {
    %c0_i32 = arith.constant 0 : i32
    %c0_i32_0 = arith.constant 0 : i32
    %c0_i32_1 = arith.constant 0 : i32
    return %c0_i32, %c0_i32_0 : i32, i32
  }
  func.func @transform_2(%arg0: i32) -> (i32, i32) {
    %c0_i32 = arith.constant 0 : i32
    %c0_i32_0 = arith.constant 0 : i32
    return %c0_i32, %arg0 : i32, i32
  }
  func.func @transform_3(%arg0: i32) -> (i32, i32) {
    %c0_i32 = arith.constant 0 : i32
    %c0_i32_0 = arith.constant 0 : i32
    return %c0_i32, %arg0 : i32, i32
  }
  func.func @transform_4(%arg0: i32) -> (i32, i32) {
    %c0_i32 = arith.constant 0 : i32
    %c0_i32_0 = arith.constant 0 : i32
    return %c0_i32, %arg0 : i32, i32
  }
  func.func @transform_5(%arg0: i32) -> (i32, i32) {
    %c0_i32 = arith.constant 0 : i32
    %c0_i32_0 = arith.constant 0 : i32
    return %c0_i32, %arg0 : i32, i32
  }
  func.func @transform_6(%arg0: i32) -> (i32, i32) {
    %c0_i32 = arith.constant 0 : i32
    %c0_i32_0 = arith.constant 0 : i32
    return %c0_i32, %arg0 : i32, i32
  }
  func.func @transform_7(%arg0: i32) -> (i32, i32) {
    %c0_i32 = arith.constant 0 : i32
    %c0_i32_0 = arith.constant 0 : i32
    return %c0_i32, %arg0 : i32, i32
  }
}

module attributes {stable_mosaic.version = 11 : i64} {
  func.func @_ifft_sqrt_l2_kernel(%arg0: i32, %arg1: memref<128x256xf32, #tpu.memory_space<vmem>>, %arg2: memref<128x256xf32, #tpu.memory_space<vmem>>, %arg3: memref<128x128xf32, #tpu.memory_space<vmem>>, %arg4: memref<128x128xf32, #tpu.memory_space<vmem>>, %arg5: memref<128x256xf32, #tpu.memory_space<vmem>>, %arg6: memref<128x256xf32, #tpu.memory_space<vmem>>, %arg7: memref<2x128x128xf32, #tpu.memory_space<vmem>>) attributes {dimension_semantics = [#tpu.dimension_semantics<parallel>], iteration_bounds = array<i64: 1>, scalar_prefetch = 0 : i64, scratch_operands = 0 : i64, tpu.core_type = #tpu.core_type<tc>, window_params = [{transform_indices = @transform_0, window_bounds = array<i64: 128, 256>}, {transform_indices = @transform_1, window_bounds = array<i64: 128, 256>}, {pipeline_mode = #tpu.pipeline_mode<synchronous>, transform_indices = @transform_2, window_bounds = array<i64: 128, 128>}, {pipeline_mode = #tpu.pipeline_mode<synchronous>, transform_indices = @transform_3, window_bounds = array<i64: 128, 128>}, {pipeline_mode = #tpu.pipeline_mode<synchronous>, transform_indices = @transform_4, window_bounds = array<i64: 128, 256>}, {pipeline_mode = #tpu.pipeline_mode<synchronous>, transform_indices = @transform_5, window_bounds = array<i64: 128, 256>}, {transform_indices = @transform_6, window_bounds = array<i64: 2, 128, 128>}]} {
    %c0 = arith.constant 0 : index
    %c0_0 = arith.constant 0 : index
    %0 = vector.load %arg1[%c0, %c0_0] : memref<128x256xf32, #tpu.memory_space<vmem>>, vector<128x256xf32>
    %c0_1 = arith.constant 0 : index
    %c0_2 = arith.constant 0 : index
    %1 = vector.load %arg2[%c0_1, %c0_2] : memref<128x256xf32, #tpu.memory_space<vmem>>, vector<128x256xf32>
    %c0_3 = arith.constant 0 : index
    %c0_4 = arith.constant 0 : index
    %2 = vector.load %arg3[%c0_3, %c0_4] : memref<128x128xf32, #tpu.memory_space<vmem>>, vector<128x128xf32>
    %c0_5 = arith.constant 0 : index
    %c0_6 = arith.constant 0 : index
    %3 = vector.load %arg4[%c0_5, %c0_6] : memref<128x128xf32, #tpu.memory_space<vmem>>, vector<128x128xf32>
    %c0_7 = arith.constant 0 : index
    %c0_8 = arith.constant 0 : index
    %4 = vector.load %arg5[%c0_7, %c0_8] : memref<128x256xf32, #tpu.memory_space<vmem>>, vector<128x256xf32>
    %c0_9 = arith.constant 0 : index
    %c0_10 = arith.constant 0 : index
    %5 = vector.load %arg6[%c0_9, %c0_10] : memref<128x256xf32, #tpu.memory_space<vmem>>, vector<128x256xf32>
    %cst = arith.constant dense<0.000000e+00> : vector<128x256xf32>
    %6 = tpu.matmul %2, %0, %cst {dimension_numbers = #tpu.dot_dimension_numbers<[1], [0], [0], [1], [0, 0, 1, 1], [], []>} : vector<128x128xf32>, vector<128x256xf32>, vector<128x256xf32> -> vector<128x256xf32>
    %cst_11 = arith.constant dense<0.000000e+00> : vector<128x256xf32>
    %7 = tpu.matmul %3, %1, %cst_11 {dimension_numbers = #tpu.dot_dimension_numbers<[1], [0], [0], [1], [0, 0, 1, 1], [], []>} : vector<128x128xf32>, vector<128x256xf32>, vector<128x256xf32> -> vector<128x256xf32>
    %8 = arith.subf %6, %7 : vector<128x256xf32>
    %cst_12 = arith.constant dense<0.000000e+00> : vector<128x256xf32>
    %9 = tpu.matmul %2, %1, %cst_12 {dimension_numbers = #tpu.dot_dimension_numbers<[1], [0], [0], [1], [0, 0, 1, 1], [], []>} : vector<128x128xf32>, vector<128x256xf32>, vector<128x256xf32> -> vector<128x256xf32>
    %cst_13 = arith.constant dense<0.000000e+00> : vector<128x256xf32>
    %10 = tpu.matmul %3, %0, %cst_13 {dimension_numbers = #tpu.dot_dimension_numbers<[1], [0], [0], [1], [0, 0, 1, 1], [], []>} : vector<128x128xf32>, vector<128x256xf32>, vector<128x256xf32> -> vector<128x256xf32>
    %11 = arith.addf %9, %10 : vector<128x256xf32>
    %12 = arith.mulf %8, %4 : vector<128x256xf32>
    %13 = arith.mulf %11, %5 : vector<128x256xf32>
    %14 = arith.subf %12, %13 : vector<128x256xf32>
    %15 = arith.mulf %8, %5 : vector<128x256xf32>
    %16 = arith.mulf %11, %4 : vector<128x256xf32>
    %17 = arith.addf %15, %16 : vector<128x256xf32>
    %18 = vector.extract_strided_slice %14 {offsets = [0, 0], sizes = [128, 128], strides = [1, 1]} : vector<128x256xf32> to vector<128x128xf32>
    %19 = vector.extract_strided_slice %17 {offsets = [0, 0], sizes = [128, 128], strides = [1, 1]} : vector<128x256xf32> to vector<128x128xf32>
    %cst_14 = arith.constant dense<0.000000e+00> : vector<128x128xf32>
    %20 = tpu.matmul %18, %2, %cst_14 {dimension_numbers = #tpu.dot_dimension_numbers<[1], [0], [0], [1], [0, 0, 1, 1], [], []>} : vector<128x128xf32>, vector<128x128xf32>, vector<128x128xf32> -> vector<128x128xf32>
    %cst_15 = arith.constant dense<0.000000e+00> : vector<128x128xf32>
    %21 = tpu.matmul %19, %3, %cst_15 {dimension_numbers = #tpu.dot_dimension_numbers<[1], [0], [0], [1], [0, 0, 1, 1], [], []>} : vector<128x128xf32>, vector<128x128xf32>, vector<128x128xf32> -> vector<128x128xf32>
    %22 = arith.subf %20, %21 : vector<128x128xf32>
    %23 = tpu.transpose %22, [1, 0] : vector<128x128xf32> -> vector<128x128xf32>
    %cst_16 = arith.constant 6.10351563E-5 : f32
    %24 = vector.broadcast %cst_16 : f32 to vector<128x128xf32>
    %25 = arith.mulf %23, %24 : vector<128x128xf32>
    %cst_17 = arith.constant 0.000000e+00 : f32
    %26 = vector.broadcast %cst_17 : f32 to vector<128x128xf32>
    %27 = arith.cmpf ogt, %25, %26 : vector<128x128xf32>
    %cst_18 = arith.constant 0.000000e+00 : f32
    %28 = vector.broadcast %cst_18 : f32 to vector<128x128xf32>
    %29 = arith.cmpf olt, %25, %28 : vector<128x128xf32>
    %cst_19 = arith.constant -1.000000e+00 : f32
    %cst_20 = arith.constant 0.000000e+00 : f32
    %30 = vector.broadcast %cst_19 : f32 to vector<128x128xf32>
    %31 = vector.broadcast %cst_20 : f32 to vector<128x128xf32>
    %32 = arith.select %29, %30, %31 : vector<128x128xi1>, vector<128x128xf32>
    %cst_21 = arith.constant 1.000000e+00 : f32
    %33 = vector.broadcast %cst_21 : f32 to vector<128x128xf32>
    %34 = arith.select %27, %33, %32 : vector<128x128xi1>, vector<128x128xf32>
    %35 = math.absf %25 : vector<128x128xf32>
    %cst_22 = arith.constant 9.99999993E-9 : f32
    %36 = vector.broadcast %cst_22 : f32 to vector<128x128xf32>
    %37 = arith.addf %35, %36 : vector<128x128xf32>
    %38 = math.sqrt %37 : vector<128x128xf32>
    %39 = arith.mulf %34, %38 : vector<128x128xf32>
    %40 = arith.mulf %39, %39 : vector<128x128xf32>
    %41 = vector.shape_cast %40 : vector<128x128xf32> to vector<1x128x128xf32>
    %cst_23 = arith.constant dense<0.000000e+00> : vector<1xf32>
    %42 = vector.multi_reduction <add>, %41, %cst_23 [1, 2] : vector<1x128x128xf32> to vector<1xf32>
    %43 = vector.shape_cast %42 : vector<1xf32> to vector<1x1x1xf32>
    %44 = vector.extract %43[0, 0, 0] : f32 from vector<1x1x1xf32>
    %45 = math.sqrt %44 : f32
    %cst_24 = arith.constant 9.99999996E-13 : f32
    %46 = arith.maximumf %45, %cst_24 : f32
    %47 = vector.broadcast %46 : f32 to vector<128x128xf32>
    %48 = arith.divf %39, %47 : vector<128x128xf32>
    %c0_25 = arith.constant 0 : index
    %c0_26 = arith.constant 0 : index
    %c0_27 = arith.constant 0 : index
    %49 = vector.load %arg7[%c0_25, %c0_26, %c0_27] : memref<2x128x128xf32, #tpu.memory_space<vmem>>, vector<1x128x128xf32>
    %50 = vector.shape_cast %49 : vector<1x128x128xf32> to vector<128x128xf32>
    %51 = vector.shape_cast %48 : vector<128x128xf32> to vector<1x128x128xf32>
    tpu.vector_store %arg7[%c0_25, %c0_26, %c0_27], %51 {strides = array<i32>} : memref<2x128x128xf32, #tpu.memory_space<vmem>>, vector<1x128x128xf32>,
    %52 = vector.extract_strided_slice %14 {offsets = [0, 128], sizes = [128, 128], strides = [1, 1]} : vector<128x256xf32> to vector<128x128xf32>
    %53 = vector.extract_strided_slice %17 {offsets = [0, 128], sizes = [128, 128], strides = [1, 1]} : vector<128x256xf32> to vector<128x128xf32>
    %cst_28 = arith.constant dense<0.000000e+00> : vector<128x128xf32>
    %54 = tpu.matmul %52, %2, %cst_28 {dimension_numbers = #tpu.dot_dimension_numbers<[1], [0], [0], [1], [0, 0, 1, 1], [], []>} : vector<128x128xf32>, vector<128x128xf32>, vector<128x128xf32> -> vector<128x128xf32>
    %cst_29 = arith.constant dense<0.000000e+00> : vector<128x128xf32>
    %55 = tpu.matmul %53, %3, %cst_29 {dimension_numbers = #tpu.dot_dimension_numbers<[1], [0], [0], [1], [0, 0, 1, 1], [], []>} : vector<128x128xf32>, vector<128x128xf32>, vector<128x128xf32> -> vector<128x128xf32>
    %56 = arith.subf %54, %55 : vector<128x128xf32>
    %57 = tpu.transpose %56, [1, 0] : vector<128x128xf32> -> vector<128x128xf32>
    %cst_30 = arith.constant 6.10351563E-5 : f32
    %58 = vector.broadcast %cst_30 : f32 to vector<128x128xf32>
    %59 = arith.mulf %57, %58 : vector<128x128xf32>
    %cst_31 = arith.constant 0.000000e+00 : f32
    %60 = vector.broadcast %cst_31 : f32 to vector<128x128xf32>
    %61 = arith.cmpf ogt, %59, %60 : vector<128x128xf32>
    %cst_32 = arith.constant 0.000000e+00 : f32
    %62 = vector.broadcast %cst_32 : f32 to vector<128x128xf32>
    %63 = arith.cmpf olt, %59, %62 : vector<128x128xf32>
    %cst_33 = arith.constant -1.000000e+00 : f32
    %cst_34 = arith.constant 0.000000e+00 : f32
    %64 = vector.broadcast %cst_33 : f32 to vector<128x128xf32>
    %65 = vector.broadcast %cst_34 : f32 to vector<128x128xf32>
    %66 = arith.select %63, %64, %65 : vector<128x128xi1>, vector<128x128xf32>
    %cst_35 = arith.constant 1.000000e+00 : f32
    %67 = vector.broadcast %cst_35 : f32 to vector<128x128xf32>
    %68 = arith.select %61, %67, %66 : vector<128x128xi1>, vector<128x128xf32>
    %69 = math.absf %59 : vector<128x128xf32>
    %cst_36 = arith.constant 9.99999993E-9 : f32
    %70 = vector.broadcast %cst_36 : f32 to vector<128x128xf32>
    %71 = arith.addf %69, %70 : vector<128x128xf32>
    %72 = math.sqrt %71 : vector<128x128xf32>
    %73 = arith.mulf %68, %72 : vector<128x128xf32>
    %74 = arith.mulf %73, %73 : vector<128x128xf32>
    %75 = vector.shape_cast %74 : vector<128x128xf32> to vector<1x128x128xf32>
    %cst_37 = arith.constant dense<0.000000e+00> : vector<1xf32>
    %76 = vector.multi_reduction <add>, %75, %cst_37 [1, 2] : vector<1x128x128xf32> to vector<1xf32>
    %77 = vector.shape_cast %76 : vector<1xf32> to vector<1x1x1xf32>
    %78 = vector.extract %77[0, 0, 0] : f32 from vector<1x1x1xf32>
    %79 = math.sqrt %78 : f32
    %cst_38 = arith.constant 9.99999996E-13 : f32
    %80 = arith.maximumf %79, %cst_38 : f32
    %81 = vector.broadcast %80 : f32 to vector<128x128xf32>
    %82 = arith.divf %73, %81 : vector<128x128xf32>
    %c1 = arith.constant 1 : index
    %c0_39 = arith.constant 0 : index
    %c0_40 = arith.constant 0 : index
    %83 = vector.load %arg7[%c1, %c0_39, %c0_40] : memref<2x128x128xf32, #tpu.memory_space<vmem>>, vector<1x128x128xf32>
    %84 = vector.shape_cast %83 : vector<1x128x128xf32> to vector<128x128xf32>
    %85 = vector.shape_cast %82 : vector<128x128xf32> to vector<1x128x128xf32>
    tpu.vector_store %arg7[%c1, %c0_39, %c0_40], %85 {strides = array<i32>} : memref<2x128x128xf32, #tpu.memory_space<vmem>>, vector<1x128x128xf32>,
    return
  }
  func.func @transform_0(%arg0: i32) -> (i32, i32) {
    %c0_i32 = arith.constant 0 : i32
    %c0_i32_0 = arith.constant 0 : i32
    return %c0_i32, %arg0 : i32, i32
  }
  func.func @transform_1(%arg0: i32) -> (i32, i32) {
    %c0_i32 = arith.constant 0 : i32
    %c0_i32_0 = arith.constant 0 : i32
    return %c0_i32, %arg0 : i32, i32
  }
  func.func @transform_2(%arg0: i32) -> (i32, i32) {
    %c0_i32 = arith.constant 0 : i32
    %c0_i32_0 = arith.constant 0 : i32
    %c0_i32_1 = arith.constant 0 : i32
    return %c0_i32, %c0_i32_0 : i32, i32
  }
  func.func @transform_3(%arg0: i32) -> (i32, i32) {
    %c0_i32 = arith.constant 0 : i32
    %c0_i32_0 = arith.constant 0 : i32
    %c0_i32_1 = arith.constant 0 : i32
    return %c0_i32, %c0_i32_0 : i32, i32
  }
  func.func @transform_4(%arg0: i32) -> (i32, i32) {
    %c0_i32 = arith.constant 0 : i32
    %c0_i32_0 = arith.constant 0 : i32
    %c0_i32_1 = arith.constant 0 : i32
    return %c0_i32, %c0_i32_0 : i32, i32
  }
  func.func @transform_5(%arg0: i32) -> (i32, i32) {
    %c0_i32 = arith.constant 0 : i32
    %c0_i32_0 = arith.constant 0 : i32
    %c0_i32_1 = arith.constant 0 : i32
    return %c0_i32, %c0_i32_0 : i32, i32
  }
  func.func @transform_6(%arg0: i32) -> (i32, i32, i32) {
    %c0_i32 = arith.constant 0 : i32
    %c0_i32_0 = arith.constant 0 : i32
    %c0_i32_1 = arith.constant 0 : i32
    return %arg0, %c0_i32, %c0_i32_0 : i32, i32, i32
  }
}

</mosaic_0001>

<llo_original>
// kernel: pooling_cbp_forward.2
$region0: #{pooling_cbp_forward.2}
  #allocation0 [shape = 'u32[]', space=smem, size = 0x4, offset = 0x4, fixed_abs, tag = 'smem constant byte address 0x4 - core index']
  #allocation1 [shape = 'u32[144,128]{1,0:T(1,128)}', space=vmem, size = 0x12000, scoped, tag = 'internal scratch']
  %s0 = inlined_call_operand.vmem [shape: f32[32,8], index: 0, kind: input, shape index: {}]
  %s1 = inlined_call_operand.vmem [shape: f32[2,32], index: 1, kind: input, shape index: {}]
  %s2 = inlined_call_operand.vmem [shape: f32[8,16384], index: 2, kind: input, shape index: {}]
  %s3 = inlined_call_operand.hbm [shape: f32[8,16384], index: 3, kind: input, shape index: {}]
  %s4 = inlined_call_operand.hbm [shape: f32[8,16384], index: 4, kind: input, shape index: {}]
  %s5 = inlined_call_operand.hbm [shape: f32[8,16384], index: 5, kind: input, shape index: {}]
  %s6 = inlined_call_operand.vmem [shape: f32[2,16384], index: 6, kind: output, shape index: {0}]
  %s7 = inlined_call_operand.vmem [shape: f32[2,16384], index: 7, kind: output, shape index: {1}]
  %8 = xla_tuple %s6, %s7
  %s9 = sld [smem:[#allocation0]]
  $region77: #{pooling_cbp_forward.2} parent=0
    _
  %s11 = ssub.s32 1, %s9
  %s12 = scalar_select 0, %s11, %s9
  $region1: #{pooling_cbp_forward.2} parent=0
    #allocation2 [shape = 'u8[32768]{0}', space=vmem, size = 0x8000, scoped, tag = 'input window, operand 3']
    #allocation3 [shape = 's32[2]{0}', space=sflag, size = 0x8, scoped, tag = 'scoped memory for pooling_cbp_forward.2']
    #allocation4 [shape = 'u8[32768]{0}', space=vmem, size = 0x8000, scoped, tag = 'input window, operand 4']
    #allocation5 [shape = 's32[2]{0}', space=sflag, size = 0x8, scoped, tag = 'scoped memory for pooling_cbp_forward.2']
    #allocation6 [shape = 'u8[32768]{0}', space=vmem, size = 0x8000, scoped, tag = 'input window, operand 5']
    %13 = vsyncpa [#allocation3], 0
    %s14 = scalar_lea.sflag [#allocation3], 1
    %15 = vsyncpa %s14, 0
    %16 = vsyncpa [#allocation5], 0
    %s17 = scalar_lea.sflag [#allocation5], 1
    %18 = vsyncpa %s17, 0
    loop: start=0, step=1, limit=34
    $region2: #{pooling_cbp_forward.2} parent=1 // loop_pre_header
      _
    $region3: #{pooling_cbp_forward.2} parent=1 // loop_header
      %s20 = sphi 0, %s24
      %p21 = scmp.ge.s32.totalorder %s20, 34
      %s28 = sphi 0, %s28
      %s30 = sphi 0, %s28
      %s31 = sphi 0, %s30
      %s45 = sphi 0, %s31
      %s49 = sphi 0, %s49
      %s51 = sphi 0, %s49
      %s52 = sphi 0, %s51
      %s66 = sphi 0, %s52
      %s72 = sphi 0, %s74
      %s75 = sphi 0, %s72
      %s76 = sphi 0, %s75
      %s92 = sphi 0, %s76
      %s98 = sphi 0, %s100
      %s101 = sphi 0, %s98
      %s102 = sphi 0, %s101
      %s118 = sphi 0, %s102
      %s124 = sphi 0, %s126
      %s127 = sphi 0, %s124
      %s128 = sphi 0, %s127
      %s144 = sphi 0, %s128
      %s150 = sphi 0, %s152
      %s153 = sphi 0, %s150
      %s154 = sphi 0, %s153
      %s170 = sphi 0, %s154
      %s176 = sphi 0, %s178
      %s179 = sphi 0, %s176
      %s180 = sphi 0, %s179
      %s196 = sphi 0, %s180
      %s202 = sphi 0, %s204
      %s205 = sphi 0, %s202
      %s206 = sphi 0, %s205
      %s222 = sphi 0, %s206
    $region4: #{pooling_cbp_forward.2} parent=1 // loop_header_branch
      %23 = sbr.rel (%p21) target = $region8
    $region5: #{pooling_cbp_forward.2} parent=1 // loop_body
      %s25 = ssub.s32 %s20, 1
      %s26 = ssub.s32 %s20, 2
      %s27 = sadd.s32 %s20, 1
      %s29 = sadd.s32 %s28, 1
      %p32 = scmp.eq.s32.totalorder %s20, 31
      %p33 = scmp.ne.s32.totalorder %s28, %s30
      %p34 = scmp.eq.s32.totalorder %s20, 0
      %p35 = por %p33, %p34
      %p36 = scmp.ne.s32.totalorder %s28, %s30
      %p37 = scmp.eq.s32.totalorder %s25, 31
      %p38 = por %p36, %p37
      %p39 = scmp.ne.s32.totalorder %s30, %s31
      %p40 = scmp.eq.s32.totalorder %s25, 0
      %p41 = por %p39, %p40
      %p42 = scmp.ne.s32.totalorder %s30, %s31
      %p43 = scmp.eq.s32.totalorder %s26, 31
      %p44 = por %p42, %p43
      %p46 = scmp.ne.s32.totalorder %s31, %s45
      %p47 = scmp.eq.s32.totalorder %s26, 0
      %p48 = por %p46, %p47
      %s50 = sadd.s32 %s49, 1
      %p53 = scmp.eq.s32.totalorder %s20, 31
      %p54 = scmp.ne.s32.totalorder %s49, %s51
      %p55 = scmp.eq.s32.totalorder %s20, 0
      %p56 = por %p54, %p55
      %p57 = scmp.ne.s32.totalorder %s49, %s51
      %p58 = scmp.eq.s32.totalorder %s25, 31
      %p59 = por %p57, %p58
      %p60 = scmp.ne.s32.totalorder %s51, %s52
      %p61 = scmp.eq.s32.totalorder %s25, 0
      %p62 = por %p60, %p61
      %p63 = scmp.ne.s32.totalorder %s51, %s52
      %p64 = scmp.eq.s32.totalorder %s26, 31
      %p65 = por %p63, %p64
      %p67 = scmp.ne.s32.totalorder %s52, %s66
      %p68 = scmp.eq.s32.totalorder %s26, 0
      %p69 = por %p67, %p68
      %s70 = ssub.s32 %s20, %s27
      %p71 = scmp.eq.s32.totalorder %s70, 0
      %s73 = sadd.s32 %s72, 1
      %s74 = scalar_select %p71, %s72, %s73
      %p77 = pneg %p71
      %p78 = scmp.eq.s32.totalorder %s20, 31
      %p79 = por %p77, %p78
      %p80 = scmp.ne.s32.totalorder %s72, %s75
      %p81 = scmp.eq.s32.totalorder %s20, 0
      %p82 = por %p80, %p81
      %p83 = scmp.ne.s32.totalorder %s72, %s75
      %p84 = scmp.eq.s32.totalorder %s25, 31
      %p85 = por %p83, %p84
      %p86 = scmp.ne.s32.totalorder %s75, %s76
      %p87 = scmp.eq.s32.totalorder %s25, 0
      %p88 = por %p86, %p87
      %p89 = scmp.ne.s32.totalorder %s75, %s76
      %p90 = scmp.eq.s32.totalorder %s26, 31
      %p91 = por %p89, %p90
      %p93 = scmp.ne.s32.totalorder %s76, %s92
      %p94 = scmp.eq.s32.totalorder %s26, 0
      %p95 = por %p93, %p94
      %s96 = ssub.s32 %s20, %s27
      %p97 = scmp.eq.s32.totalorder %s96, 0
      %s99 = sadd.s32 %s98, 1
      %s100 = scalar_select %p97, %s98, %s99
      %p103 = pneg %p97
      %p104 = scmp.eq.s32.totalorder %s20, 31
      %p105 = por %p103, %p104
      %p106 = scmp.ne.s32.totalorder %s98, %s101
      %p107 = scmp.eq.s32.totalorder %s20, 0
      %p108 = por %p106, %p107
      %p109 = scmp.ne.s32.totalorder %s98, %s101
      %p110 = scmp.eq.s32.totalorder %s25, 31
      %p111 = por %p109, %p110
      %p112 = scmp.ne.s32.totalorder %s101, %s102
      %p113 = scmp.eq.s32.totalorder %s25, 0
      %p114 = por %p112, %p113
      %p115 = scmp.ne.s32.totalorder %s101, %s102
      %p116 = scmp.eq.s32.totalorder %s26, 31
      %p117 = por %p115, %p116
      %p119 = scmp.ne.s32.totalorder %s102, %s118
      %p120 = scmp.eq.s32.totalorder %s26, 0
      %p121 = por %p119, %p120
      %s122 = ssub.s32 %s20, %s27
      %p123 = scmp.eq.s32.totalorder %s122, 0
      %s125 = sadd.s32 %s124, 1
      %s126 = scalar_select %p123, %s124, %s125
      %p129 = pneg %p123
      %p130 = scmp.eq.s32.totalorder %s20, 31
      %p131 = por %p129, %p130
      %p132 = scmp.ne.s32.totalorder %s124, %s127
      %p133 = scmp.eq.s32.totalorder %s20, 0
      %p134 = por %p132, %p133
      %p135 = scmp.ne.s32.totalorder %s124, %s127
      %p136 = scmp.eq.s32.totalorder %s25, 31
      %p137 = por %p135, %p136
      %p138 = scmp.ne.s32.totalorder %s127, %s128
      %p139 = scmp.eq.s32.totalorder %s25, 0
      %p140 = por %p138, %p139
      %p141 = scmp.ne.s32.totalorder %s127, %s128
      %p142 = scmp.eq.s32.totalorder %s26, 31
      %p143 = por %p141, %p142
      %p145 = scmp.ne.s32.totalorder %s128, %s144
      %p146 = scmp.eq.s32.totalorder %s26, 0
      %p147 = por %p145, %p146
      %s148 = ssub.s32 %s20, %s27
      %p149 = scmp.eq.s32.totalorder %s148, 0
      %s151 = sadd.s32 %s150, 1
      %s152 = scalar_select %p149, %s150, %s151
      %p155 = pneg %p149
      %p156 = scmp.eq.s32.totalorder %s20, 31
      %p157 = por %p155, %p156
      %p158 = scmp.ne.s32.totalorder %s150, %s153
      %p159 = scmp.eq.s32.totalorder %s20, 0
      %p160 = por %p158, %p159
      %p161 = scmp.ne.s32.totalorder %s150, %s153
      %p162 = scmp.eq.s32.totalorder %s25, 31
      %p163 = por %p161, %p162
      %p164 = scmp.ne.s32.totalorder %s153, %s154
      %p165 = scmp.eq.s32.totalorder %s25, 0
      %p166 = por %p164, %p165
      %p167 = scmp.ne.s32.totalorder %s153, %s154
      %p168 = scmp.eq.s32.totalorder %s26, 31
      %p169 = por %p167, %p168
      %p171 = scmp.ne.s32.totalorder %s154, %s170
      %p172 = scmp.eq.s32.totalorder %s26, 0
      %p173 = por %p171, %p172
      %s174 = ssub.s32 %s20, %s27
      %p175 = scmp.eq.s32.totalorder %s174, 0
      %s177 = sadd.s32 %s176, 1
      %s178 = scalar_select %p175, %s176, %s177
      %p181 = pneg %p175
      %p182 = scmp.eq.s32.totalorder %s20, 31
      %p183 = por %p181, %p182
      %p184 = scmp.ne.s32.totalorder %s176, %s179
      %p185 = scmp.eq.s32.totalorder %s20, 0
      %p186 = por %p184, %p185
      %p187 = scmp.ne.s32.totalorder %s176, %s179
      %p188 = scmp.eq.s32.totalorder %s25, 31
      %p189 = por %p187, %p188
      %p190 = scmp.ne.s32.totalorder %s179, %s180
      %p191 = scmp.eq.s32.totalorder %s25, 0
      %p192 = por %p190, %p191
      %p193 = scmp.ne.s32.totalorder %s179, %s180
      %p194 = scmp.eq.s32.totalorder %s26, 31
      %p195 = por %p193, %p194
      %p197 = scmp.ne.s32.totalorder %s180, %s196
      %p198 = scmp.eq.s32.totalorder %s26, 0
      %p199 = por %p197, %p198
      %s200 = ssub.s32 %s20, %s27
      %p201 = scmp.eq.s32.totalorder %s200, 0
      %s203 = sadd.s32 %s202, 1
      %s204 = scalar_select %p201, %s202, %s203
      %p207 = pneg %p201
      %p208 = scmp.eq.s32.totalorder %s20, 31
      %p209 = por %p207, %p208
      %p210 = scmp.ne.s32.totalorder %s202, %s205
      %p211 = scmp.eq.s32.totalorder %s20, 0
      %p212 = por %p210, %p211
      %p213 = scmp.ne.s32.totalorder %s202, %s205
      %p214 = scmp.eq.s32.totalorder %s25, 31
      %p215 = por %p213, %p214
      %p216 = scmp.ne.s32.totalorder %s205, %s206
      %p217 = scmp.eq.s32.totalorder %s25, 0
      %p218 = por %p216, %p217
      %p219 = scmp.ne.s32.totalorder %s205, %s206
      %p220 = scmp.eq.s32.totalorder %s26, 31
      %p221 = por %p219, %p220
      %p223 = scmp.ne.s32.totalorder %s206, %s222
      %p224 = scmp.eq.s32.totalorder %s26, 0
      %p225 = por %p223, %p224
      %p226 = scmp.le.s32.totalorder 1, %s20
      %p227 = scmp.lt.s32.totalorder %s20, 33
      %p228 = pnand %p226, %p227
      %p229 = pneg %p228
      // Predicated region
      $region9: #{pooling_cbp_forward.2} parent=5 // pred_check
        _
      $region10: #{pooling_cbp_forward.2} parent=5 // pred_check_branch
        %231 = sbr.rel (%p228) target = $region12
      $region11: #{pooling_cbp_forward.2} parent=5 // pred_region
        %s232 = ssub.s32 %s20, 1
        // Predicated region
        $region13: #{pooling_cbp_forward.2} parent=11 // pred_check
          %p233 = pneg %p41
        $region14: #{pooling_cbp_forward.2} parent=11 // pred_check_branch
          %235 = sbr.rel (%p233) target = $region16
        $region15: #{pooling_cbp_forward.2} parent=11 // pred_region
          _
        $region16: #{pooling_cbp_forward.2} parent=11 // pred_fallthru
          _
        // Predicated region
        $region17: #{pooling_cbp_forward.2} parent=11 // pred_check
          %p236 = pneg %p62
        $region18: #{pooling_cbp_forward.2} parent=11 // pred_check_branch
          %238 = sbr.rel (%p236) target = $region20
        $region19: #{pooling_cbp_forward.2} parent=11 // pred_region
          _
        $region20: #{pooling_cbp_forward.2} parent=11 // pred_fallthru
          _
      $region12: #{pooling_cbp_forward.2} parent=5 // pred_fallthru
        _
      %p239 = scmp.lt.s32.totalorder %s20, 32
      // Predicated region
      $region21: #{pooling_cbp_forward.2} parent=5 // pred_check
        %p240 = pneg %p239
      $region22: #{pooling_cbp_forward.2} parent=5 // pred_check_branch
        %242 = sbr.rel (%p240) target = $region24
      $region23: #{pooling_cbp_forward.2} parent=5 // pred_region
        // Predicated region
        $region25: #{pooling_cbp_forward.2} parent=23 // pred_check
          %p243 = pneg %p82
        $region26: #{pooling_cbp_forward.2} parent=23 // pred_check_branch
          %245 = sbr.rel (%p243) target = $region28
        $region27: #{pooling_cbp_forward.2} parent=23 // pred_region
          %s246 = smul.u32 4, %s20
          %p247 = scmp.lt.s32.totalorder %s246, 127
          %s248 = scalar_select %p247, %s246, 127
          %s249 = smul.addr %s248, 8
          %s250 = scalar_lea.vmem %s2, %s249
          %s251 = smul.u32 4, %s20
        $region28: #{pooling_cbp_forward.2} parent=23 // pred_fallthru
          _
        // Predicated region
        $region29: #{pooling_cbp_forward.2} parent=23 // pred_check
          %p252 = pneg %p108
        $region30: #{pooling_cbp_forward.2} parent=23 // pred_check_branch
          %254 = sbr.rel (%p252) target = $region32
        $region31: #{pooling_cbp_forward.2} parent=23 // pred_region
          %s255 = sand.u32 %s98, 1
          %s256 = scalar_lea.sflag [#allocation3], %s255
          %s257 = sand.u32 %s98, 1
          %s258 = smul.addr %s257, 32
          %s259 = scalar_lea.vmem [#allocation2], %s258
          %s260 = smul.u32 4, %s20
          %s262 = ssub.s32 512, 512
          %263 = vsyncadd %s256, %s262
          %s264 = smul.addr %s260, 128
          %s265 = scalar_lea.hbm %s3, %s264
          %s267 = sshll.u32 %s259, 4
          %s268 = int_to_ptr.vmem [resolvable:$true] %s267
          %270 = dma.hbm_to_vmem [thread:$0]  %s265, 512, %s268, %s256
        $region32: #{pooling_cbp_forward.2} parent=23 // pred_fallthru
          _
        // Predicated region
        $region33: #{pooling_cbp_forward.2} parent=23 // pred_check
          %p271 = pneg %p134
        $region34: #{pooling_cbp_forward.2} parent=23 // pred_check_branch
          %273 = sbr.rel (%p271) target = $region36
        $region35: #{pooling_cbp_forward.2} parent=23 // pred_region
          %s274 = sand.u32 %s20, 1
          %s275 = scalar_lea.sflag [#allocation5], %s274
          %s276 = sand.u32 %s124, 1
          %s277 = smul.addr %s276, 32
          %s278 = scalar_lea.vmem [#allocation4], %s277
          %s279 = smul.u32 4, %s20
          %s281 = ssub.s32 512, 512
          %282 = vsyncadd %s275, %s281
          %s283 = smul.addr %s279, 128
          %s284 = scalar_lea.hbm %s4, %s283
          %s286 = sshll.u32 %s278, 4
          %s287 = int_to_ptr.vmem [resolvable:$true] %s286
          %289 = dma.hbm_to_vmem [thread:$0]  %s284, 512, %s287, %s275
        $region36: #{pooling_cbp_forward.2} parent=23 // pred_fallthru
          _
        // Predicated region
        $region37: #{pooling_cbp_forward.2} parent=23 // pred_check
          %p290 = pneg %p160
        $region38: #{pooling_cbp_forward.2} parent=23 // pred_check_branch
          %292 = sbr.rel (%p290) target = $region40
        $region39: #{pooling_cbp_forward.2} parent=23 // pred_region
          %s293 = sand.u32 %s20, 1
          %s294 = scalar_lea.sflag [#allocation5], %s293
          %s295 = sand.u32 %s150, 1
          %s296 = smul.addr %s295, 32
          %s297 = scalar_lea.vmem [#allocation6], %s296
          %s298 = smul.u32 4, %s20
          %s300 = ssub.s32 512, 512
          %301 = vsyncadd %s294, %s300
          %s302 = smul.addr %s298, 128
          %s303 = scalar_lea.hbm %s5, %s302
          %s305 = sshll.u32 %s297, 4
          %s306 = int_to_ptr.vmem [resolvable:$true] %s305
          %308 = dma.hbm_to_vmem [thread:$0]  %s303, 512, %s306, %s294
        $region40: #{pooling_cbp_forward.2} parent=23 // pred_fallthru
          _
      $region24: #{pooling_cbp_forward.2} parent=5 // pred_fallthru
        _
      %p309 = scmp.le.s32.totalorder 1, %s20
      %p310 = scmp.lt.s32.totalorder %s20, 33
      %p311 = pnand %p309, %p310
      %p312 = pneg %p311
      // Predicated region
      $region41: #{pooling_cbp_forward.2} parent=5 // pred_check
        _
      $region42: #{pooling_cbp_forward.2} parent=5 // pred_check_branch
        %314 = sbr.rel (%p311) target = $region44
      $region43: #{pooling_cbp_forward.2} parent=5 // pred_region
        %s315 = ssub.s32 %s20, 1
        %s316 = sand.u32 %s101, 1
        %s317 = scalar_lea.sflag [#allocation3], %s316
        %s318 = sand.u32 %s101, 1
        %s319 = smul.addr %s318, 32
        %s320 = scalar_lea.vmem [#allocation2], %s319
        // Predicated region
        $region45: #{pooling_cbp_forward.2} parent=43 // pred_check
          %p321 = pneg %p114
        $region46: #{pooling_cbp_forward.2} parent=43 // pred_check_branch
          %323 = sbr.rel (%p321) target = $region48
        $region47: #{pooling_cbp_forward.2} parent=43 // pred_region
          %324 = dma.done %s317, 512
        $region48: #{pooling_cbp_forward.2} parent=43 // pred_fallthru
          _
        %s325 = sand.u32 %s25, 1
        %s326 = scalar_lea.sflag [#allocation5], %s325
        %s327 = sand.u32 %s127, 1
        %s328 = smul.addr %s327, 32
        %s329 = scalar_lea.vmem [#allocation4], %s328
        // Predicated region
        $region49: #{pooling_cbp_forward.2} parent=43 // pred_check
          %p330 = pneg %p140
        $region50: #{pooling_cbp_forward.2} parent=43 // pred_check_branch
          %332 = sbr.rel (%p330) target = $region52
        $region51: #{pooling_cbp_forward.2} parent=43 // pred_region
          %333 = dma.done %s326, 512
        $region52: #{pooling_cbp_forward.2} parent=43 // pred_fallthru
          _
        %s334 = sand.u32 %s25, 1
        %s335 = scalar_lea.sflag [#allocation5], %s334
        %s336 = sand.u32 %s153, 1
        %s337 = smul.addr %s336, 32
        %s338 = scalar_lea.vmem [#allocation6], %s337
        // Predicated region
        $region53: #{pooling_cbp_forward.2} parent=43 // pred_check
          %p339 = pneg %p166
        $region54: #{pooling_cbp_forward.2} parent=43 // pred_check_branch
          %341 = sbr.rel (%p339) target = $region56
        $region55: #{pooling_cbp_forward.2} parent=43 // pred_region
          %342 = dma.done %s335, 512
        $region56: #{pooling_cbp_forward.2} parent=43 // pred_fallthru
          _
        %p343 = pneg %p41
        %p344 = pneg %p38
        %p345 = pneg %p62
        %p346 = pneg %p59
        %s347 = smul.u32 4, %s25
        %p348 = scmp.lt.s32.totalorder %s347, 127
        %s349 = scalar_select %p348, %s347, 127
        %s350 = smul.addr %s349, 8
        %s351 = scalar_lea.vmem %s2, %s350
        %p352 = pneg %p88
        %p353 = pneg %p85
        %s354 = sand.u32 %s101, 1
        %s355 = scalar_lea.sflag [#allocation3], %s354
        %s356 = sand.u32 %s101, 1
        %s357 = smul.addr %s356, 32
        %s358 = scalar_lea.vmem [#allocation2], %s357
        %p359 = pneg %p114
        %p360 = pneg %p111
        %s361 = sand.u32 %s25, 1
        %s362 = scalar_lea.sflag [#allocation5], %s361
        %s363 = sand.u32 %s127, 1
        %s364 = smul.addr %s363, 32
        %s365 = scalar_lea.vmem [#allocation4], %s364
        %p366 = pneg %p140
        %p367 = pneg %p137
        %s368 = sand.u32 %s25, 1
        %s369 = scalar_lea.sflag [#allocation5], %s368
        %s370 = sand.u32 %s153, 1
        %s371 = smul.addr %s370, 32
        %s372 = scalar_lea.vmem [#allocation6], %s371
        %p373 = pneg %p166
        %p374 = pneg %p163
        %p375 = pneg %p192
        %p376 = pneg %p189
        %s377 = smul.u32 4, %s25
        %p378 = scmp.lt.s32.totalorder %s377, 127
        %s379 = scalar_select %p378, %s377, 127
        %s380 = smul.addr %s379, 2
        %s381 = scalar_lea.vmem %s6, %s380
        %p382 = pneg %p218
        %p383 = pneg %p215
        %s384 = smul.u32 4, %s25
        %p385 = scmp.lt.s32.totalorder %s384, 127
        %s386 = scalar_select %p385, %s384, 127
        %s387 = smul.addr %s386, 2
        %s388 = scalar_lea.vmem %s7, %s387
        %s389 = smul.u32 4, %s25
        %p390 = scmp.lt.s32.totalorder %s389, 127
        %s391 = scalar_select %p390, %s389, 127
        %s392 = smul.addr %s391, 8
        %s393 = scalar_lea.vmem %s2, %s392
        %s394 = smul.u32 4, %s25
        %s395 = smul.u32 4, %s25
        %s396 = smul.u32 4, %s25
        %s397 = smul.u32 4, %s25
        %s398 = smul.u32 4, %s25
        %p399 = scmp.lt.s32.totalorder %s398, 127
        %s400 = scalar_select %p399, %s398, 127
        %s401 = smul.addr %s400, 2
        %s402 = scalar_lea.vmem %s6, %s401
        %s403 = smul.u32 4, %s25
        %s404 = smul.u32 4, %s25
        %p405 = scmp.lt.s32.totalorder %s404, 127
        %s406 = scalar_select %p405, %s404, 127
        %s407 = smul.addr %s406, 2
        %s408 = scalar_lea.vmem %s7, %s407
        %s409 = smul.u32 4, %s25
        %v410 = vld [vmem:[%s0] sm:$0xff]
        %v411 = vld [vmem:[%s0 + $0x8] sm:$0xff]
        %v412 = vld [vmem:[%s0 + $0x10] sm:$0xff]
        %v413 = vld [vmem:[%s0 + $0x18] sm:$0xff]
        %v414 = vld [vmem:[%s393] sm:$0xff]
        %v415 = vld [vmem:[%s393 + $0x8] sm:$0xff]
        %v416 = vld [vmem:[%s393 + $0x10] sm:$0xff]
        %v417 = vld [vmem:[%s393 + $0x18] sm:$0xff]
        %vm418 = vcmask 64512
        %v420 = vsel %vm418, %v410, 0
        %v423 = vsel %vm418, %v411, 0
        %v426 = vsel %vm418, %v412, 0
        %v429 = vsel %vm418, %v413, 0
        %431 = vmatprep.subr.mxu0 0.0
        %432 = vmatpush1.msra.mxu0 0.0
        %433 = vmatprep.subr.mxu0 0.0
        %434 = vmatpush1.msra.mxu0 0.0
        %435 = vmatprep.subr.mxu0 0.0
        %436 = vmatpush1.msra.mxu0 0.0
        %437 = vmatprep.subr.mxu0 0.0
        %438 = vmatpush1.msra.mxu0 0.0
        %439 = vmatprep.subr.mxu0 0.0
        %440 = vmatpush1.msra.mxu0 0.0
        %441 = vmatprep.subr.mxu0 0.0
        %442 = vmatpush1.msra.mxu0 0.0
        %443 = vmatprep.subr.mxu0 0.0
        %444 = vmatpush1.msra.mxu0 0.0
        %445 = vmatprep.subr.mxu0 0.0
        %446 = vmatpush1.msra.mxu0 0.0
        %447 = vmatprep.subr.mxu0 0.0
        %448 = vmatpush1.msra.mxu0 0.0
        %449 = vmatprep.subr.mxu0 0.0
        %450 = vmatpush1.msra.mxu0 0.0
        %451 = vmatprep.subr.mxu0 0.0
        %452 = vmatpush1.msra.mxu0 0.0
        %453 = vmatprep.subr.mxu0 0.0
        %454 = vmatpush1.msra.mxu0 0.0
        %455 = vmatprep.subr.mxu0 0.0
        %456 = vmatpush1.msra.mxu0 0.0
        %457 = vmatprep.subr.mxu0 0.0
        %458 = vmatpush1.msra.mxu0 0.0
        %459 = vmatprep.subr.mxu0 0.0
        %460 = vmatpush1.msra.mxu0 0.0
        %461 = vmatprep.subr.mxu0 %v415
        %462 = vmatpush1.msra.mxu0 %v414
        %463 = vmatprep.subr.mxu0 0.0
        %464 = vmatpush2.msra.mxu0 0.0
        %465 = vmatprep.subr.mxu0 0.0
        %466 = vmatpush2.msra.mxu0 0.0
        %467 = vmatprep.subr.mxu0 0.0
        %468 = vmatpush2.msra.mxu0 0.0
        %469 = vmatprep.subr.mxu0 0.0
        %470 = vmatpush2.msra.mxu0 0.0
        %471 = vmatprep.subr.mxu0 0.0
        %472 = vmatpush2.msra.mxu0 0.0
        %473 = vmatprep.subr.mxu0 0.0
        %474 = vmatpush2.msra.mxu0 0.0
        %475 = vmatprep.subr.mxu0 0.0
        %476 = vmatpush2.msra.mxu0 0.0
        %477 = vmatprep.subr.mxu0 0.0
        %478 = vmatpush2.msra.mxu0 0.0
        %479 = vmatprep.subr.mxu0 0.0
        %480 = vmatpush2.msra.mxu0 0.0
        %481 = vmatprep.subr.mxu0 0.0
        %482 = vmatpush2.msra.mxu0 0.0
        %483 = vmatprep.subr.mxu0 0.0
        %484 = vmatpush2.msra.mxu0 0.0
        %485 = vmatprep.subr.mxu0 0.0
        %486 = vmatpush2.msra.mxu0 0.0
        %487 = vmatprep.subr.mxu0 0.0
        %488 = vmatpush2.msra.mxu0 0.0
        %489 = vmatprep.subr.mxu0 0.0
        %490 = vmatpush2.msra.mxu0 0.0
        %491 = vmatprep.subr.mxu0 0.0
        %492 = vmatpush2.msra.mxu0 0.0
        %493 = vmatprep.subr.mxu0 0.0
        %494 = vmatpush2.msra.mxu0 0.0
        %495 = vmatprep.mubr.f32.mxu0 0.0
        %496 = vmatmul.mubr.f32.gmra.mxu0 %v420
        %v497 = vpop.f32.mrf.mxu0
        %v498 = vadd.f32 0.0, %v497
        %v499 = vpop.f32.mrf.mxu0
        %v500 = vadd.f32 0.0, %v499
        %501 = vmatprep.mubr.f32.mxu0 0.0
        %502 = vmatmul.mubr.f32.gmra.mxu0 %v423
        %v503 = vpop.f32.mrf.mxu0
        %v504 = vadd.f32 0.0, %v503
        %v505 = vpop.f32.mrf.mxu0
        %v506 = vadd.f32 0.0, %v505
        %507 = vmatprep.mubr.f32.mxu0 0.0
        %508 = vmatmul.mubr.f32.gmra.mxu0 %v426
        %v509 = vpop.f32.mrf.mxu0
        %v510 = vadd.f32 0.0, %v509
        %v511 = vpop.f32.mrf.mxu0
        %v512 = vadd.f32 0.0, %v511
        %513 = vmatprep.mubr.f32.mxu0 0.0
        %514 = vmatmul.mubr.f32.gmra.mxu0 %v429
        %v515 = vpop.f32.mrf.mxu0
        %v516 = vadd.f32 0.0, %v515
        %v517 = vpop.f32.mrf.mxu0
        %v518 = vadd.f32 0.0, %v517
        %519 = vdwg.mxu0
        %520 = vmatprep.subr.mxu0 0.0
        %521 = vmatpush1.msra.mxu0 0.0
        %522 = vmatprep.subr.mxu0 0.0
        %523 = vmatpush1.msra.mxu0 0.0
        %524 = vmatprep.subr.mxu0 0.0
        %525 = vmatpush1.msra.mxu0 0.0
        %526 = vmatprep.subr.mxu0 0.0
        %527 = vmatpush1.msra.mxu0 0.0
        %528 = vmatprep.subr.mxu0 0.0
        %529 = vmatpush1.msra.mxu0 0.0
        %530 = vmatprep.subr.mxu0 0.0
        %531 = vmatpush1.msra.mxu0 0.0
        %532 = vmatprep.subr.mxu0 0.0
        %533 = vmatpush1.msra.mxu0 0.0
        %534 = vmatprep.subr.mxu0 0.0
        %535 = vmatpush1.msra.mxu0 0.0
        %536 = vmatprep.subr.mxu0 0.0
        %537 = vmatpush1.msra.mxu0 0.0
        %538 = vmatprep.subr.mxu0 0.0
        %539 = vmatpush1.msra.mxu0 0.0
        %540 = vmatprep.subr.mxu0 0.0
        %541 = vmatpush1.msra.mxu0 0.0
        %542 = vmatprep.subr.mxu0 0.0
        %543 = vmatpush1.msra.mxu0 0.0
        %544 = vmatprep.subr.mxu0 0.0
        %545 = vmatpush1.msra.mxu0 0.0
        %546 = vmatprep.subr.mxu0 0.0
        %547 = vmatpush1.msra.mxu0 0.0
        %548 = vmatprep.subr.mxu0 0.0
        %549 = vmatpush1.msra.mxu0 0.0
        %550 = vmatprep.subr.mxu0 %v417
        %551 = vmatpush1.msra.mxu0 %v416
        %552 = vmatprep.subr.mxu0 0.0
        %553 = vmatpush2.msra.mxu0 0.0
        %554 = vmatprep.subr.mxu0 0.0
        %555 = vmatpush2.msra.mxu0 0.0
        %556 = vmatprep.subr.mxu0 0.0
        %557 = vmatpush2.msra.mxu0 0.0
        %558 = vmatprep.subr.mxu0 0.0
        %559 = vmatpush2.msra.mxu0 0.0
        %560 = vmatprep.subr.mxu0 0.0
        %561 = vmatpush2.msra.mxu0 0.0
        %562 = vmatprep.subr.mxu0 0.0
        %563 = vmatpush2.msra.mxu0 0.0
        %564 = vmatprep.subr.mxu0 0.0
        %565 = vmatpush2.msra.mxu0 0.0
        %566 = vmatprep.subr.mxu0 0.0
        %567 = vmatpush2.msra.mxu0 0.0
        %568 = vmatprep.subr.mxu0 0.0
        %569 = vmatpush2.msra.mxu0 0.0
        %570 = vmatprep.subr.mxu0 0.0
        %571 = vmatpush2.msra.mxu0 0.0
        %572 = vmatprep.subr.mxu0 0.0
        %573 = vmatpush2.msra.mxu0 0.0
        %574 = vmatprep.subr.mxu0 0.0
        %575 = vmatpush2.msra.mxu0 0.0
        %576 = vmatprep.subr.mxu0 0.0
        %577 = vmatpush2.msra.mxu0 0.0
        %578 = vmatprep.subr.mxu0 0.0
        %579 = vmatpush2.msra.mxu0 0.0
        %580 = vmatprep.subr.mxu0 0.0
        %581 = vmatpush2.msra.mxu0 0.0
        %582 = vmatprep.subr.mxu0 0.0
        %583 = vmatpush2.msra.mxu0 0.0
        %584 = vmatprep.mubr.f32.mxu0 0.0
        %585 = vmatmul.mubr.f32.gmra.mxu0 %v420
        %v586 = vpop.f32.mrf.mxu0
        %v587 = vadd.f32 0.0, %v586
        %v588 = vpop.f32.mrf.mxu0
        %v589 = vadd.f32 0.0, %v588
        %590 = vmatprep.mubr.f32.mxu0 0.0
        %591 = vmatmul.mubr.f32.gmra.mxu0 %v423
        %v592 = vpop.f32.mrf.mxu0
        %v593 = vadd.f32 0.0, %v592
        %v594 = vpop.f32.mrf.mxu0
        %v595 = vadd.f32 0.0, %v594
        %596 = vmatprep.mubr.f32.mxu0 0.0
        %597 = vmatmul.mubr.f32.gmra.mxu0 %v426
        %v598 = vpop.f32.mrf.mxu0
        %v599 = vadd.f32 0.0, %v598
        %v600 = vpop.f32.mrf.mxu0
        %v601 = vadd.f32 0.0, %v600
        %602 = vmatprep.mubr.f32.mxu0 0.0
        %603 = vmatmul.mubr.f32.gmra.mxu0 %v429
        %v604 = vpop.f32.mrf.mxu0
        %v605 = vadd.f32 0.0, %v604
        %v606 = vpop.f32.mrf.mxu0
        %v607 = vadd.f32 0.0, %v606
        %608 = vdwg.mxu0
        %v609 = vld [vmem:[%s320] sm:$0xff]
        %v610 = vld [vmem:[%s320 + $0x8] sm:$0xff]
        %v611 = vld [vmem:[%s320 + $0x10] sm:$0xff]
        %v612 = vld [vmem:[%s320 + $0x18] sm:$0xff]
        %613 = vmatprep.subr.mxu0 0.0
        %614 = vmatpush1.msra.mxu0 0.0
        %615 = vmatprep.subr.mxu0 0.0
        %616 = vmatpush1.msra.mxu0 0.0
        %617 = vmatprep.subr.mxu0 0.0
        %618 = vmatpush1.msra.mxu0 0.0
        %619 = vmatprep.subr.mxu0 0.0
        %620 = vmatpush1.msra.mxu0 0.0
        %621 = vmatprep.subr.mxu0 0.0
        %622 = vmatpush1.msra.mxu0 0.0
        %623 = vmatprep.subr.mxu0 0.0
        %624 = vmatpush1.msra.mxu0 0.0
        %625 = vmatprep.subr.mxu0 0.0
        %626 = vmatpush1.msra.mxu0 0.0
        %627 = vmatprep.subr.mxu0 0.0
        %628 = vmatpush1.msra.mxu0 0.0
        %629 = vmatprep.subr.mxu0 0.0
        %630 = vmatpush1.msra.mxu0 0.0
        %631 = vmatprep.subr.mxu0 0.0
        %632 = vmatpush1.msra.mxu0 0.0
        %633 = vmatprep.subr.mxu0 0.0
        %634 = vmatpush1.msra.mxu0 0.0
        %635 = vmatprep.subr.mxu0 0.0
        %636 = vmatpush1.msra.mxu0 0.0
        %637 = vmatprep.subr.mxu0 0.0
        %638 = vmatpush1.msra.mxu0 0.0
        %639 = vmatprep.subr.mxu0 0.0
        %640 = vmatpush1.msra.mxu0 0.0
        %641 = vmatprep.subr.mxu0 0.0
        %642 = vmatpush1.msra.mxu0 0.0
        %643 = vmatprep.subr.mxu0 %v610
        %644 = vmatpush1.msra.mxu0 %v609
        %645 = vmatprep.subr.mxu0 0.0
        %646 = vmatpush2.msra.mxu0 0.0
        %647 = vmatprep.subr.mxu0 0.0
        %648 = vmatpush2.msra.mxu0 0.0
        %649 = vmatprep.subr.mxu0 0.0
        %650 = vmatpush2.msra.mxu0 0.0
        %651 = vmatprep.subr.mxu0 0.0
        %652 = vmatpush2.msra.mxu0 0.0
        %653 = vmatprep.subr.mxu0 0.0
        %654 = vmatpush2.msra.mxu0 0.0
        %655 = vmatprep.subr.mxu0 0.0
        %656 = vmatpush2.msra.mxu0 0.0
        %657 = vmatprep.subr.mxu0 0.0
        %658 = vmatpush2.msra.mxu0 0.0
        %659 = vmatprep.subr.mxu0 0.0
        %660 = vmatpush2.msra.mxu0 0.0
        %661 = vmatprep.subr.mxu0 0.0
        %662 = vmatpush2.msra.mxu0 0.0
        %663 = vmatprep.subr.mxu0 0.0
        %664 = vmatpush2.msra.mxu0 0.0
        %665 = vmatprep.subr.mxu0 0.0
        %666 = vmatpush2.msra.mxu0 0.0
        %667 = vmatprep.subr.mxu0 0.0
        %668 = vmatpush2.msra.mxu0 0.0
        %669 = vmatprep.subr.mxu0 0.0
        %670 = vmatpush2.msra.mxu0 0.0
        %671 = vmatprep.subr.mxu0 0.0
        %672 = vmatpush2.msra.mxu0 0.0
        %673 = vmatprep.subr.mxu0 0.0
        %674 = vmatpush2.msra.mxu0 0.0
        %675 = vmatprep.subr.mxu0 0.0
        %676 = vmatpush2.msra.mxu0 0.0
        %677 = vmatprep.mubr.f32.mxu0 0.0
        %678 = vmatmul.mubr.f32.gmra.mxu0 %v420
        %v679 = vpop.f32.mrf.mxu0
        %v680 = vadd.f32 0.0, %v679
        %v681 = vpop.f32.mrf.mxu0
        %v682 = vadd.f32 0.0, %v681
        %683 = vmatprep.mubr.f32.mxu0 0.0
        %684 = vmatmul.mubr.f32.gmra.mxu0 %v423
        %v685 = vpop.f32.mrf.mxu0
        %v686 = vadd.f32 0.0, %v685
        %v687 = vpop.f32.mrf.mxu0
        %v688 = vadd.f32 0.0, %v687
        %689 = vmatprep.mubr.f32.mxu0 0.0
        %690 = vmatmul.mubr.f32.gmra.mxu0 %v426
        %v691 = vpop.f32.mrf.mxu0
        %v692 = vadd.f32 0.0, %v691
        %v693 = vpop.f32.mrf.mxu0
        %v694 = vadd.f32 0.0, %v693
        %695 = vmatprep.mubr.f32.mxu0 0.0
        %696 = vmatmul.mubr.f32.gmra.mxu0 %v429
        %v697 = vpop.f32.mrf.mxu0
        %v698 = vadd.f32 0.0, %v697
        %v699 = vpop.f32.mrf.mxu0
        %v700 = vadd.f32 0.0, %v699
        %701 = vdwg.mxu0
        %702 = vmatprep.subr.mxu0 0.0
        %703 = vmatpush1.msra.mxu0 0.0
        %704 = vmatprep.subr.mxu0 0.0
        %705 = vmatpush1.msra.mxu0 0.0
        %706 = vmatprep.subr.mxu0 0.0
        %707 = vmatpush1.msra.mxu0 0.0
        %708 = vmatprep.subr.mxu0 0.0
        %709 = vmatpush1.msra.mxu0 0.0
        %710 = vmatprep.subr.mxu0 0.0
        %711 = vmatpush1.msra.mxu0 0.0
        %712 = vmatprep.subr.mxu0 0.0
        %713 = vmatpush1.msra.mxu0 0.0
        %714 = vmatprep.subr.mxu0 0.0
        %715 = vmatpush1.msra.mxu0 0.0
        %716 = vmatprep.subr.mxu0 0.0
        %717 = vmatpush1.msra.mxu0 0.0
        %718 = vmatprep.subr.mxu0 0.0
        %719 = vmatpush1.msra.mxu0 0.0
        %720 = vmatprep.subr.mxu0 0.0
        %721 = vmatpush1.msra.mxu0 0.0
        %722 = vmatprep.subr.mxu0 0.0
        %723 = vmatpush1.msra.mxu0 0.0
        %724 = vmatprep.subr.mxu0 0.0
        %725 = vmatpush1.msra.mxu0 0.0
        %726 = vmatprep.subr.mxu0 0.0
        %727 = vmatpush1.msra.mxu0 0.0
        %728 = vmatprep.subr.mxu0 0.0
        %729 = vmatpush1.msra.mxu0 0.0
        %730 = vmatprep.subr.mxu0 0.0
        %731 = vmatpush1.msra.mxu0 0.0
        %732 = vmatprep.subr.mxu0 %v612
        %733 = vmatpush1.msra.mxu0 %v611
        %734 = vmatprep.subr.mxu0 0.0
        %735 = vmatpush2.msra.mxu0 0.0
        %736 = vmatprep.subr.mxu0 0.0
        %737 = vmatpush2.msra.mxu0 0.0
        %738 = vmatprep.subr.mxu0 0.0
        %739 = vmatpush2.msra.mxu0 0.0
        %740 = vmatprep.subr.mxu0 0.0
        %741 = vmatpush2.msra.mxu0 0.0
        %742 = vmatprep.subr.mxu0 0.0
        %743 = vmatpush2.msra.mxu0 0.0
        %744 = vmatprep.subr.mxu0 0.0
        %745 = vmatpush2.msra.mxu0 0.0
        %746 = vmatprep.subr.mxu0 0.0
        %747 = vmatpush2.msra.mxu0 0.0
        %748 = vmatprep.subr.mxu0 0.0
        %749 = vmatpush2.msra.mxu0 0.0
        %750 = vmatprep.subr.mxu0 0.0
        %751 = vmatpush2.msra.mxu0 0.0
        %752 = vmatprep.subr.mxu0 0.0
        %753 = vmatpush2.msra.mxu0 0.0
        %754 = vmatprep.subr.mxu0 0.0
        %755 = vmatpush2.msra.mxu0 0.0
        %756 = vmatprep.subr.mxu0 0.0
        %757 = vmatpush2.msra.mxu0 0.0
        %758 = vmatprep.subr.mxu0 0.0
        %759 = vmatpush2.msra.mxu0 0.0
        %760 = vmatprep.subr.mxu0 0.0
        %761 = vmatpush2.msra.mxu0 0.0
        %762 = vmatprep.subr.mxu0 0.0
        %763 = vmatpush2.msra.mxu0 0.0
        %764 = vmatprep.subr.mxu0 0.0
        %765 = vmatpush2.msra.mxu0 0.0
        %766 = vmatprep.mubr.f32.mxu0 0.0
        %767 = vmatmul.mubr.f32.gmra.mxu0 %v420
        %v768 = vpop.f32.mrf.mxu0
        %v769 = vadd.f32 0.0, %v768
        %v770 = vpop.f32.mrf.mxu0
        %v771 = vadd.f32 0.0, %v770
        %772 = vmatprep.mubr.f32.mxu0 0.0
        %773 = vmatmul.mubr.f32.gmra.mxu0 %v423
        %v774 = vpop.f32.mrf.mxu0
        %v775 = vadd.f32 0.0, %v774
        %v776 = vpop.f32.mrf.mxu0
        %v777 = vadd.f32 0.0, %v776
        %778 = vmatprep.mubr.f32.mxu0 0.0
        %779 = vmatmul.mubr.f32.gmra.mxu0 %v426
        %v780 = vpop.f32.mrf.mxu0
        %v781 = vadd.f32 0.0, %v780
        %v782 = vpop.f32.mrf.mxu0
        %v783 = vadd.f32 0.0, %v782
        %784 = vmatprep.mubr.f32.mxu0 0.0
        %785 = vmatmul.mubr.f32.gmra.mxu0 %v429
        %v786 = vpop.f32.mrf.mxu0
        %v787 = vadd.f32 0.0, %v786
        %v788 = vpop.f32.mrf.mxu0
        %v789 = vadd.f32 0.0, %v788
        %790 = vdwg.mxu0
        %v791 = vld [vmem:[%s329] sm:$0xff]
        %v792 = vld [vmem:[%s329 + $0x8] sm:$0xff]
        %v793 = vld [vmem:[%s329 + $0x10] sm:$0xff]
        %v794 = vld [vmem:[%s329 + $0x18] sm:$0xff]
        %795 = vmatprep.subr.mxu0 0.0
        %796 = vmatpush1.msra.mxu0 0.0
        %797 = vmatprep.subr.mxu0 0.0
        %798 = vmatpush1.msra.mxu0 0.0
        %799 = vmatprep.subr.mxu0 0.0
        %800 = vmatpush1.msra.mxu0 0.0
        %801 = vmatprep.subr.mxu0 0.0
        %802 = vmatpush1.msra.mxu0 0.0
        %803 = vmatprep.subr.mxu0 0.0
        %804 = vmatpush1.msra.mxu0 0.0
        %805 = vmatprep.subr.mxu0 0.0
        %806 = vmatpush1.msra.mxu0 0.0
        %807 = vmatprep.subr.mxu0 0.0
        %808 = vmatpush1.msra.mxu0 0.0
        %809 = vmatprep.subr.mxu0 0.0
        %810 = vmatpush1.msra.mxu0 0.0
        %811 = vmatprep.subr.mxu0 0.0
        %812 = vmatpush1.msra.mxu0 0.0
        %813 = vmatprep.subr.mxu0 0.0
        %814 = vmatpush1.msra.mxu0 0.0
        %815 = vmatprep.subr.mxu0 0.0
        %816 = vmatpush1.msra.mxu0 0.0
        %817 = vmatprep.subr.mxu0 0.0
        %818 = vmatpush1.msra.mxu0 0.0
        %819 = vmatprep.subr.mxu0 0.0
        %820 = vmatpush1.msra.mxu0 0.0
        %821 = vmatprep.subr.mxu0 0.0
        %822 = vmatpush1.msra.mxu0 0.0
        %823 = vmatprep.subr.mxu0 0.0
        %824 = vmatpush1.msra.mxu0 0.0
        %825 = vmatprep.subr.mxu0 %v792
        %826 = vmatpush1.msra.mxu0 %v791
        %827 = vmatprep.subr.mxu0 0.0
        %828 = vmatpush2.msra.mxu0 0.0
        %829 = vmatprep.subr.mxu0 0.0
        %830 = vmatpush2.msra.mxu0 0.0
        %831 = vmatprep.subr.mxu0 0.0
        %832 = vmatpush2.msra.mxu0 0.0
        %833 = vmatprep.subr.mxu0 0.0
        %834 = vmatpush2.msra.mxu0 0.0
        %835 = vmatprep.subr.mxu0 0.0
        %836 = vmatpush2.msra.mxu0 0.0
        %837 = vmatprep.subr.mxu0 0.0
        %838 = vmatpush2.msra.mxu0 0.0
        %839 = vmatprep.subr.mxu0 0.0
        %840 = vmatpush2.msra.mxu0 0.0
        %841 = vmatprep.subr.mxu0 0.0
        %842 = vmatpush2.msra.mxu0 0.0
        %843 = vmatprep.subr.mxu0 0.0
        %844 = vmatpush2.msra.mxu0 0.0
        %845 = vmatprep.subr.mxu0 0.0
        %846 = vmatpush2.msra.mxu0 0.0
        %847 = vmatprep.subr.mxu0 0.0
        %848 = vmatpush2.msra.mxu0 0.0
        %849 = vmatprep.subr.mxu0 0.0
        %850 = vmatpush2.msra.mxu0 0.0
        %851 = vmatprep.subr.mxu0 0.0
        %852 = vmatpush2.msra.mxu0 0.0
        %853 = vmatprep.subr.mxu0 0.0
        %854 = vmatpush2.msra.mxu0 0.0
        %855 = vmatprep.subr.mxu0 0.0
        %856 = vmatpush2.msra.mxu0 0.0
        %857 = vmatprep.subr.mxu0 0.0
        %858 = vmatpush2.msra.mxu0 0.0
        %859 = vmatprep.mubr.f32.mxu0 0.0
        %860 = vmatmul.mubr.f32.gmra.mxu0 %v420
        %v861 = vpop.f32.mrf.mxu0
        %v862 = vadd.f32 0.0, %v861
        %v863 = vpop.f32.mrf.mxu0
        %v864 = vadd.f32 0.0, %v863
        %865 = vmatprep.mubr.f32.mxu0 0.0
        %866 = vmatmul.mubr.f32.gmra.mxu0 %v423
        %v867 = vpop.f32.mrf.mxu0
        %v868 = vadd.f32 0.0, %v867
        %v869 = vpop.f32.mrf.mxu0
        %v870 = vadd.f32 0.0, %v869
        %871 = vmatprep.mubr.f32.mxu0 0.0
        %872 = vmatmul.mubr.f32.gmra.mxu0 %v426
        %v873 = vpop.f32.mrf.mxu0
        %v874 = vadd.f32 0.0, %v873
        %v875 = vpop.f32.mrf.mxu0
        %v876 = vadd.f32 0.0, %v875
        %877 = vmatprep.mubr.f32.mxu0 0.0
        %878 = vmatmul.mubr.f32.gmra.mxu0 %v429
        %v879 = vpop.f32.mrf.mxu0
        %v880 = vadd.f32 0.0, %v879
        %v881 = vpop.f32.mrf.mxu0
        %v882 = vadd.f32 0.0, %v881
        %883 = vdwg.mxu0
        %884 = vmatprep.subr.mxu0 0.0
        %885 = vmatpush1.msra.mxu0 0.0
        %886 = vmatprep.subr.mxu0 0.0
        %887 = vmatpush1.msra.mxu0 0.0
        %888 = vmatprep.subr.mxu0 0.0
        %889 = vmatpush1.msra.mxu0 0.0
        %890 = vmatprep.subr.mxu0 0.0
        %891 = vmatpush1.msra.mxu0 0.0
        %892 = vmatprep.subr.mxu0 0.0
        %893 = vmatpush1.msra.mxu0 0.0
        %894 = vmatprep.subr.mxu0 0.0
        %895 = vmatpush1.msra.mxu0 0.0
        %896 = vmatprep.subr.mxu0 0.0
        %897 = vmatpush1.msra.mxu0 0.0
        %898 = vmatprep.subr.mxu0 0.0
        %899 = vmatpush1.msra.mxu0 0.0
        %900 = vmatprep.subr.mxu0 0.0
        %901 = vmatpush1.msra.mxu0 0.0
        %902 = vmatprep.subr.mxu0 0.0
        %903 = vmatpush1.msra.mxu0 0.0
        %904 = vmatprep.subr.mxu0 0.0
        %905 = vmatpush1.msra.mxu0 0.0
        %906 = vmatprep.subr.mxu0 0.0
        %907 = vmatpush1.msra.mxu0 0.0
        %908 = vmatprep.subr.mxu0 0.0
        %909 = vmatpush1.msra.mxu0 0.0
        %910 = vmatprep.subr.mxu0 0.0
        %911 = vmatpush1.msra.mxu0 0.0
        %912 = vmatprep.subr.mxu0 0.0
        %913 = vmatpush1.msra.mxu0 0.0
        %914 = vmatprep.subr.mxu0 %v794
        %915 = vmatpush1.msra.mxu0 %v793
        %916 = vmatprep.subr.mxu0 0.0
        %917 = vmatpush2.msra.mxu0 0.0
        %918 = vmatprep.subr.mxu0 0.0
        %919 = vmatpush2.msra.mxu0 0.0
        %920 = vmatprep.subr.mxu0 0.0
        %921 = vmatpush2.msra.mxu0 0.0
        %922 = vmatprep.subr.mxu0 0.0
        %923 = vmatpush2.msra.mxu0 0.0
        %924 = vmatprep.subr.mxu0 0.0
        %925 = vmatpush2.msra.mxu0 0.0
        %926 = vmatprep.subr.mxu0 0.0
        %927 = vmatpush2.msra.mxu0 0.0
        %928 = vmatprep.subr.mxu0 0.0
        %929 = vmatpush2.msra.mxu0 0.0
        %930 = vmatprep.subr.mxu0 0.0
        %931 = vmatpush2.msra.mxu0 0.0
        %932 = vmatprep.subr.mxu0 0.0
        %933 = vmatpush2.msra.mxu0 0.0
        %934 = vmatprep.subr.mxu0 0.0
        %935 = vmatpush2.msra.mxu0 0.0
        %936 = vmatprep.subr.mxu0 0.0
        %937 = vmatpush2.msra.mxu0 0.0
        %938 = vmatprep.subr.mxu0 0.0
        %939 = vmatpush2.msra.mxu0 0.0
        %940 = vmatprep.subr.mxu0 0.0
        %941 = vmatpush2.msra.mxu0 0.0
        %942 = vmatprep.subr.mxu0 0.0
        %943 = vmatpush2.msra.mxu0 0.0
        %944 = vmatprep.subr.mxu0 0.0
        %945 = vmatpush2.msra.mxu0 0.0
        %946 = vmatprep.subr.mxu0 0.0
        %947 = vmatpush2.msra.mxu0 0.0
        %948 = vmatprep.mubr.f32.mxu0 0.0
        %949 = vmatmul.mubr.f32.gmra.mxu0 %v420
        %v950 = vpop.f32.mrf.mxu0
        %v951 = vadd.f32 0.0, %v950
        %v952 = vpop.f32.mrf.mxu0
        %v953 = vadd.f32 0.0, %v952
        %954 = vmatprep.mubr.f32.mxu0 0.0
        %955 = vmatmul.mubr.f32.gmra.mxu0 %v423
        %v956 = vpop.f32.mrf.mxu0
        %v957 = vadd.f32 0.0, %v956
        %v958 = vpop.f32.mrf.mxu0
        %v959 = vadd.f32 0.0, %v958
        %960 = vmatprep.mubr.f32.mxu0 0.0
        %961 = vmatmul.mubr.f32.gmra.mxu0 %v426
        %v962 = vpop.f32.mrf.mxu0
        %v963 = vadd.f32 0.0, %v962
        %v964 = vpop.f32.mrf.mxu0
        %v965 = vadd.f32 0.0, %v964
        %966 = vmatprep.mubr.f32.mxu0 0.0
        %967 = vmatmul.mubr.f32.gmra.mxu0 %v429
        %v968 = vpop.f32.mrf.mxu0
        %v969 = vadd.f32 0.0, %v968
        %v970 = vpop.f32.mrf.mxu0
        %v971 = vadd.f32 0.0, %v970
        %972 = vdwg.mxu0
        %v973 = vld [vmem:[%s338] sm:$0xff]
        %v974 = vld [vmem:[%s338 + $0x8] sm:$0xff]
        %v975 = vld [vmem:[%s338 + $0x10] sm:$0xff]
        %v976 = vld [vmem:[%s338 + $0x18] sm:$0xff]
        %977 = vmatprep.subr.mxu0 0.0
        %978 = vmatpush1.msra.mxu0 0.0
        %979 = vmatprep.subr.mxu0 0.0
        %980 = vmatpush1.msra.mxu0 0.0
        %981 = vmatprep.subr.mxu0 0.0
        %982 = vmatpush1.msra.mxu0 0.0
        %983 = vmatprep.subr.mxu0 0.0
        %984 = vmatpush1.msra.mxu0 0.0
        %985 = vmatprep.subr.mxu0 0.0
        %986 = vmatpush1.msra.mxu0 0.0
        %987 = vmatprep.subr.mxu0 0.0
        %988 = vmatpush1.msra.mxu0 0.0
        %989 = vmatprep.subr.mxu0 0.0
        %990 = vmatpush1.msra.mxu0 0.0
        %991 = vmatprep.subr.mxu0 0.0
        %992 = vmatpush1.msra.mxu0 0.0
        %993 = vmatprep.subr.mxu0 0.0
        %994 = vmatpush1.msra.mxu0 0.0
        %995 = vmatprep.subr.mxu0 0.0
        %996 = vmatpush1.msra.mxu0 0.0
        %997 = vmatprep.subr.mxu0 0.0
        %998 = vmatpush1.msra.mxu0 0.0
        %999 = vmatprep.subr.mxu0 0.0
        %1000 = vmatpush1.msra.mxu0 0.0
        %1001 = vmatprep.subr.mxu0 0.0
        %1002 = vmatpush1.msra.mxu0 0.0
        %1003 = vmatprep.subr.mxu0 0.0
        %1004 = vmatpush1.msra.mxu0 0.0
        %1005 = vmatprep.subr.mxu0 0.0
        %1006 = vmatpush1.msra.mxu0 0.0
        %1007 = vmatprep.subr.mxu0 %v974
        %1008 = vmatpush1.msra.mxu0 %v973
        %1009 = vmatprep.subr.mxu0 0.0
        %1010 = vmatpush2.msra.mxu0 0.0
        %1011 = vmatprep.subr.mxu0 0.0
        %1012 = vmatpush2.msra.mxu0 0.0
        %1013 = vmatprep.subr.mxu0 0.0
        %1014 = vmatpush2.msra.mxu0 0.0
        %1015 = vmatprep.subr.mxu0 0.0
        %1016 = vmatpush2.msra.mxu0 0.0
        %1017 = vmatprep.subr.mxu0 0.0
        %1018 = vmatpush2.msra.mxu0 0.0
        %1019 = vmatprep.subr.mxu0 0.0
        %1020 = vmatpush2.msra.mxu0 0.0
        %1021 = vmatprep.subr.mxu0 0.0
        %1022 = vmatpush2.msra.mxu0 0.0
        %1023 = vmatprep.subr.mxu0 0.0
        %1024 = vmatpush2.msra.mxu0 0.0
        %1025 = vmatprep.subr.mxu0 0.0
        %1026 = vmatpush2.msra.mxu0 0.0
        %1027 = vmatprep.subr.mxu0 0.0
        %1028 = vmatpush2.msra.mxu0 0.0
        %1029 = vmatprep.subr.mxu0 0.0
        %1030 = vmatpush2.msra.mxu0 0.0
        %1031 = vmatprep.subr.mxu0 0.0
        %1032 = vmatpush2.msra.mxu0 0.0
        %1033 = vmatprep.subr.mxu0 0.0
        %1034 = vmatpush2.msra.mxu0 0.0
        %1035 = vmatprep.subr.mxu0 0.0
        %1036 = vmatpush2.msra.mxu0 0.0
        %1037 = vmatprep.subr.mxu0 0.0
        %1038 = vmatpush2.msra.mxu0 0.0
        %1039 = vmatprep.subr.mxu0 0.0
        %1040 = vmatpush2.msra.mxu0 0.0
        %1041 = vmatprep.mubr.f32.mxu0 0.0
        %1042 = vmatmul.mubr.f32.gmra.mxu0 %v420
        %v1043 = vpop.f32.mrf.mxu0
        %v1044 = vadd.f32 0.0, %v1043
        %v1045 = vpop.f32.mrf.mxu0
        %v1046 = vadd.f32 0.0, %v1045
        %1047 = vmatprep.mubr.f32.mxu0 0.0
        %1048 = vmatmul.mubr.f32.gmra.mxu0 %v423
        %v1049 = vpop.f32.mrf.mxu0
        %v1050 = vadd.f32 0.0, %v1049
        %v1051 = vpop.f32.mrf.mxu0
        %v1052 = vadd.f32 0.0, %v1051
        %1053 = vmatprep.mubr.f32.mxu0 0.0
        %1054 = vmatmul.mubr.f32.gmra.mxu0 %v426
        %v1055 = vpop.f32.mrf.mxu0
        %v1056 = vadd.f32 0.0, %v1055
        %v1057 = vpop.f32.mrf.mxu0
        %v1058 = vadd.f32 0.0, %v1057
        %1059 = vmatprep.mubr.f32.mxu0 0.0
        %1060 = vmatmul.mubr.f32.gmra.mxu0 %v429
        %v1061 = vpop.f32.mrf.mxu0
        %v1062 = vadd.f32 0.0, %v1061
        %v1063 = vpop.f32.mrf.mxu0
        %v1064 = vadd.f32 0.0, %v1063
        %1065 = vdwg.mxu0
        %1066 = vmatprep.subr.mxu0 0.0
        %1067 = vmatpush1.msra.mxu0 0.0
        %1068 = vmatprep.subr.mxu0 0.0
        %1069 = vmatpush1.msra.mxu0 0.0
        %1070 = vmatprep.subr.mxu0 0.0
        %1071 = vmatpush1.msra.mxu0 0.0
        %1072 = vmatprep.subr.mxu0 0.0
        %1073 = vmatpush1.msra.mxu0 0.0
        %1074 = vmatprep.subr.mxu0 0.0
        %1075 = vmatpush1.msra.mxu0 0.0
        %1076 = vmatprep.subr.mxu0 0.0
        %1077 = vmatpush1.msra.mxu0 0.0
        %1078 = vmatprep.subr.mxu0 0.0
        %1079 = vmatpush1.msra.mxu0 0.0
        %1080 = vmatprep.subr.mxu0 0.0
        %1081 = vmatpush1.msra.mxu0 0.0
        %1082 = vmatprep.subr.mxu0 0.0
        %1083 = vmatpush1.msra.mxu0 0.0
        %1084 = vmatprep.subr.mxu0 0.0
        %1085 = vmatpush1.msra.mxu0 0.0
        %1086 = vmatprep.subr.mxu0 0.0
        %1087 = vmatpush1.msra.mxu0 0.0
        %1088 = vmatprep.subr.mxu0 0.0
        %1089 = vmatpush1.msra.mxu0 0.0
        %1090 = vmatprep.subr.mxu0 0.0
        %1091 = vmatpush1.msra.mxu0 0.0
        %1092 = vmatprep.subr.mxu0 0.0
        %1093 = vmatpush1.msra.mxu0 0.0
        %1094 = vmatprep.subr.mxu0 0.0
        %1095 = vmatpush1.msra.mxu0 0.0
        %1096 = vmatprep.subr.mxu0 %v976
        %1097 = vmatpush1.msra.mxu0 %v975
        %1098 = vmatprep.subr.mxu0 0.0
        %1099 = vmatpush2.msra.mxu0 0.0
        %1100 = vmatprep.subr.mxu0 0.0
        %1101 = vmatpush2.msra.mxu0 0.0
        %1102 = vmatprep.subr.mxu0 0.0
        %1103 = vmatpush2.msra.mxu0 0.0
        %1104 = vmatprep.subr.mxu0 0.0
        %1105 = vmatpush2.msra.mxu0 0.0
        %1106 = vmatprep.subr.mxu0 0.0
        %1107 = vmatpush2.msra.mxu0 0.0
        %1108 = vmatprep.subr.mxu0 0.0
        %1109 = vmatpush2.msra.mxu0 0.0
        %1110 = vmatprep.subr.mxu0 0.0
        %1111 = vmatpush2.msra.mxu0 0.0
        %1112 = vmatprep.subr.mxu0 0.0
        %1113 = vmatpush2.msra.mxu0 0.0
        %1114 = vmatprep.subr.mxu0 0.0
        %1115 = vmatpush2.msra.mxu0 0.0
        %1116 = vmatprep.subr.mxu0 0.0
        %1117 = vmatpush2.msra.mxu0 0.0
        %1118 = vmatprep.subr.mxu0 0.0
        %1119 = vmatpush2.msra.mxu0 0.0
        %1120 = vmatprep.subr.mxu0 0.0
        %1121 = vmatpush2.msra.mxu0 0.0
        %1122 = vmatprep.subr.mxu0 0.0
        %1123 = vmatpush2.msra.mxu0 0.0
        %1124 = vmatprep.subr.mxu0 0.0
        %1125 = vmatpush2.msra.mxu0 0.0
        %1126 = vmatprep.subr.mxu0 0.0
        %1127 = vmatpush2.msra.mxu0 0.0
        %1128 = vmatprep.subr.mxu0 0.0
        %1129 = vmatpush2.msra.mxu0 0.0
        %1130 = vmatprep.mubr.f32.mxu0 0.0
        %1131 = vmatmul.mubr.f32.gmra.mxu0 %v420
        %v1132 = vpop.f32.mrf.mxu0
        %v1133 = vadd.f32 0.0, %v1132
        %v1134 = vpop.f32.mrf.mxu0
        %v1135 = vadd.f32 0.0, %v1134
        %1136 = vmatprep.mubr.f32.mxu0 0.0
        %1137 = vmatmul.mubr.f32.gmra.mxu0 %v423
        %v1138 = vpop.f32.mrf.mxu0
        %v1139 = vadd.f32 0.0, %v1138
        %v1140 = vpop.f32.mrf.mxu0
        %v1141 = vadd.f32 0.0, %v1140
        %1142 = vmatprep.mubr.f32.mxu0 0.0
        %1143 = vmatmul.mubr.f32.gmra.mxu0 %v426
        %v1144 = vpop.f32.mrf.mxu0
        %v1145 = vadd.f32 0.0, %v1144
        %v1146 = vpop.f32.mrf.mxu0
        %v1147 = vadd.f32 0.0, %v1146
        %1148 = vmatprep.mubr.f32.mxu0 0.0
        %1149 = vmatmul.mubr.f32.gmra.mxu0 %v429
        %v1150 = vpop.f32.mrf.mxu0
        %v1151 = vadd.f32 0.0, %v1150
        %v1152 = vpop.f32.mrf.mxu0
        %v1153 = vadd.f32 0.0, %v1152
        %1154 = vdwg.mxu0
        %v1155 = vmul.f32 %v498, %v862
        %v1156 = vmul.f32 %v500, %v864
        %v1157 = vmul.f32 %v587, %v951
        %v1158 = vmul.f32 %v589, %v953
        %v1159 = vmul.f32 %v504, %v868
        %v1160 = vmul.f32 %v506, %v870
        %v1161 = vmul.f32 %v593, %v957
        %v1162 = vmul.f32 %v595, %v959
        %v1163 = vmul.f32 %v510, %v874
        %v1164 = vmul.f32 %v512, %v876
        %v1165 = vmul.f32 %v599, %v963
        %v1166 = vmul.f32 %v601, %v965
        %v1167 = vmul.f32 %v516, %v880
        %v1168 = vmul.f32 %v518, %v882
        %v1169 = vmul.f32 %v605, %v969
        %v1170 = vmul.f32 %v607, %v971
        %v1171 = vmul.f32 %v680, %v1044
        %v1172 = vmul.f32 %v682, %v1046
        %v1173 = vmul.f32 %v769, %v1133
        %v1174 = vmul.f32 %v771, %v1135
        %v1175 = vmul.f32 %v686, %v1050
        %v1176 = vmul.f32 %v688, %v1052
        %v1177 = vmul.f32 %v775, %v1139
        %v1178 = vmul.f32 %v777, %v1141
        %v1179 = vmul.f32 %v692, %v1056
        %v1180 = vmul.f32 %v694, %v1058
        %v1181 = vmul.f32 %v781, %v1145
        %v1182 = vmul.f32 %v783, %v1147
        %v1183 = vmul.f32 %v698, %v1062
        %v1184 = vmul.f32 %v700, %v1064
        %v1185 = vmul.f32 %v787, %v1151
        %v1186 = vmul.f32 %v789, %v1153
        %v1187 = vsub.f32 %v1155, %v1171
        %v1188 = vsub.f32 %v1156, %v1172
        %v1189 = vsub.f32 %v1157, %v1173
        %v1190 = vsub.f32 %v1158, %v1174
        %v1191 = vsub.f32 %v1159, %v1175
        %v1192 = vsub.f32 %v1160, %v1176
        %v1193 = vsub.f32 %v1161, %v1177
        %v1194 = vsub.f32 %v1162, %v1178
        %v1195 = vsub.f32 %v1163, %v1179
        %v1196 = vsub.f32 %v1164, %v1180
        %v1197 = vsub.f32 %v1165, %v1181
        %v1198 = vsub.f32 %v1166, %v1182
        %v1199 = vsub.f32 %v1167, %v1183
        %v1200 = vsub.f32 %v1168, %v1184
        %v1201 = vsub.f32 %v1169, %v1185
        %v1202 = vsub.f32 %v1170, %v1186
        %v1203 = vmul.f32 %v498, %v1044
        %v1204 = vmul.f32 %v500, %v1046
        %v1205 = vmul.f32 %v587, %v1133
        %v1206 = vmul.f32 %v589, %v1135
        %v1207 = vmul.f32 %v504, %v1050
        %v1208 = vmul.f32 %v506, %v1052
        %v1209 = vmul.f32 %v593, %v1139
        %v1210 = vmul.f32 %v595, %v1141
        %v1211 = vmul.f32 %v510, %v1056
        %v1212 = vmul.f32 %v512, %v1058
        %v1213 = vmul.f32 %v599, %v1145
        %v1214 = vmul.f32 %v601, %v1147
        %v1215 = vmul.f32 %v516, %v1062
        %v1216 = vmul.f32 %v518, %v1064
        %v1217 = vmul.f32 %v605, %v1151
        %v1218 = vmul.f32 %v607, %v1153
        %v1219 = vmul.f32 %v680, %v862
        %v1220 = vmul.f32 %v682, %v864
        %v1221 = vmul.f32 %v769, %v951
        %v1222 = vmul.f32 %v771, %v953
        %v1223 = vmul.f32 %v686, %v868
        %v1224 = vmul.f32 %v688, %v870
        %v1225 = vmul.f32 %v775, %v957
        %v1226 = vmul.f32 %v777, %v959
        %v1227 = vmul.f32 %v692, %v874
        %v1228 = vmul.f32 %v694, %v876
        %v1229 = vmul.f32 %v781, %v963
        %v1230 = vmul.f32 %v783, %v965
        %v1231 = vmul.f32 %v698, %v880
        %v1232 = vmul.f32 %v700, %v882
        %v1233 = vmul.f32 %v787, %v969
        %v1234 = vmul.f32 %v789, %v971
        %v1235 = vadd.f32 %v1203, %v1219
        %v1236 = vadd.f32 %v1204, %v1220
        %v1237 = vadd.f32 %v1205, %v1221
        %v1238 = vadd.f32 %v1206, %v1222
        %v1239 = vadd.f32 %v1207, %v1223
        %v1240 = vadd.f32 %v1208, %v1224
        %v1241 = vadd.f32 %v1209, %v1225
        %v1242 = vadd.f32 %v1210, %v1226
        %v1243 = vadd.f32 %v1211, %v1227
        %v1244 = vadd.f32 %v1212, %v1228
        %v1245 = vadd.f32 %v1213, %v1229
        %v1246 = vadd.f32 %v1214, %v1230
        %v1247 = vadd.f32 %v1215, %v1231
        %v1248 = vadd.f32 %v1216, %v1232
        %v1249 = vadd.f32 %v1217, %v1233
        %v1250 = vadd.f32 %v1218, %v1234
        %v1251 = vld [vmem:[%s1] sm:$0x3]
        %vm1252 = vcmask 261120
        %v1254 = vsel %vm1252, %v1251, 0
        %1256 = vmatprep.subr.mxu0 0.0
        %1257 = vmatpush1.msra.mxu0 0.0
        %1258 = vmatprep.subr.mxu0 0.0
        %1259 = vmatpush1.msra.mxu0 0.0
        %1260 = vmatprep.subr.mxu0 0.0
        %1261 = vmatpush1.msra.mxu0 0.0
        %1262 = vmatprep.subr.mxu0 0.0
        %1263 = vmatpush1.msra.mxu0 0.0
        %1264 = vmatprep.subr.mxu0 0.0
        %1265 = vmatpush1.msra.mxu0 0.0
        %1266 = vmatprep.subr.mxu0 0.0
        %1267 = vmatpush1.msra.mxu0 0.0
        %1268 = vmatprep.subr.mxu0 0.0
        %1269 = vmatpush1.msra.mxu0 0.0
        %1270 = vmatprep.subr.mxu0 0.0
        %1271 = vmatpush1.msra.mxu0 0.0
        %1272 = vmatprep.subr.mxu0 0.0
        %1273 = vmatpush1.msra.mxu0 0.0
        %1274 = vmatprep.subr.mxu0 0.0
        %1275 = vmatpush1.msra.mxu0 0.0
        %1276 = vmatprep.subr.mxu0 0.0
        %1277 = vmatpush1.msra.mxu0 0.0
        %1278 = vmatprep.subr.mxu0 0.0
        %1279 = vmatpush1.msra.mxu0 0.0
        %1280 = vmatprep.subr.mxu0 %v1200
        %1281 = vmatpush1.msra.mxu0 %v1199
        %1282 = vmatprep.subr.mxu0 %v1196
        %1283 = vmatpush1.msra.mxu0 %v1195
        %1284 = vmatprep.subr.mxu0 %v1192
        %1285 = vmatpush1.msra.mxu0 %v1191
        %1286 = vmatprep.subr.mxu0 %v1188
        %1287 = vmatpush1.msra.mxu0 %v1187
        %1288 = vmatprep.subr.mxu0 0.0
        %1289 = vmatpush2.msra.mxu0 0.0
        %1290 = vmatprep.subr.mxu0 0.0
        %1291 = vmatpush2.msra.mxu0 0.0
        %1292 = vmatprep.subr.mxu0 0.0
        %1293 = vmatpush2.msra.mxu0 0.0
        %1294 = vmatprep.subr.mxu0 0.0
        %1295 = vmatpush2.msra.mxu0 0.0
        %1296 = vmatprep.subr.mxu0 0.0
        %1297 = vmatpush2.msra.mxu0 0.0
        %1298 = vmatprep.subr.mxu0 0.0
        %1299 = vmatpush2.msra.mxu0 0.0
        %1300 = vmatprep.subr.mxu0 0.0
        %1301 = vmatpush2.msra.mxu0 0.0
        %1302 = vmatprep.subr.mxu0 0.0
        %1303 = vmatpush2.msra.mxu0 0.0
        %1304 = vmatprep.subr.mxu0 0.0
        %1305 = vmatpush2.msra.mxu0 0.0
        %1306 = vmatprep.subr.mxu0 0.0
        %1307 = vmatpush2.msra.mxu0 0.0
        %1308 = vmatprep.subr.mxu0 0.0
        %1309 = vmatpush2.msra.mxu0 0.0
        %1310 = vmatprep.subr.mxu0 0.0
        %1311 = vmatpush2.msra.mxu0 0.0
        %1312 = vmatprep.subr.mxu0 0.0
        %1313 = vmatpush2.msra.mxu0 0.0
        %1314 = vmatprep.subr.mxu0 0.0
        %1315 = vmatpush2.msra.mxu0 0.0
        %1316 = vmatprep.subr.mxu0 0.0
        %1317 = vmatpush2.msra.mxu0 0.0
        %1318 = vmatprep.subr.mxu0 0.0
        %1319 = vmatpush2.msra.mxu0 0.0
        %1320 = vmatprep.mubr.f32.mxu0 0.0
        %1321 = vmatmul.mubr.f32.gmra.mxu0 %v1254
        %v1322 = vpop.f32.mrf.mxu0
        %v1323 = vadd.f32 0.0, %v1322
        %v1324 = vpop.f32.mrf.mxu0
        %v1325 = vadd.f32 0.0, %v1324
        %1326 = vdwg.mxu0
        %1327 = vmatprep.subr.mxu0 0.0
        %1328 = vmatpush1.msra.mxu0 0.0
        %1329 = vmatprep.subr.mxu0 0.0
        %1330 = vmatpush1.msra.mxu0 0.0
        %1331 = vmatprep.subr.mxu0 0.0
        %1332 = vmatpush1.msra.mxu0 0.0
        %1333 = vmatprep.subr.mxu0 0.0
        %1334 = vmatpush1.msra.mxu0 0.0
        %1335 = vmatprep.subr.mxu0 0.0
        %1336 = vmatpush1.msra.mxu0 0.0
        %1337 = vmatprep.subr.mxu0 0.0
        %1338 = vmatpush1.msra.mxu0 0.0
        %1339 = vmatprep.subr.mxu0 0.0
        %1340 = vmatpush1.msra.mxu0 0.0
        %1341 = vmatprep.subr.mxu0 0.0
        %1342 = vmatpush1.msra.mxu0 0.0
        %1343 = vmatprep.subr.mxu0 0.0
        %1344 = vmatpush1.msra.mxu0 0.0
        %1345 = vmatprep.subr.mxu0 0.0
        %1346 = vmatpush1.msra.mxu0 0.0
        %1347 = vmatprep.subr.mxu0 0.0
        %1348 = vmatpush1.msra.mxu0 0.0
        %1349 = vmatprep.subr.mxu0 0.0
        %1350 = vmatpush1.msra.mxu0 0.0
        %1351 = vmatprep.subr.mxu0 %v1202
        %1352 = vmatpush1.msra.mxu0 %v1201
        %1353 = vmatprep.subr.mxu0 %v1198
        %1354 = vmatpush1.msra.mxu0 %v1197
        %1355 = vmatprep.subr.mxu0 %v1194
        %1356 = vmatpush1.msra.mxu0 %v1193
        %1357 = vmatprep.subr.mxu0 %v1190
        %1358 = vmatpush1.msra.mxu0 %v1189
        %1359 = vmatprep.subr.mxu0 0.0
        %1360 = vmatpush2.msra.mxu0 0.0
        %1361 = vmatprep.subr.mxu0 0.0
        %1362 = vmatpush2.msra.mxu0 0.0
        %1363 = vmatprep.subr.mxu0 0.0
        %1364 = vmatpush2.msra.mxu0 0.0
        %1365 = vmatprep.subr.mxu0 0.0
        %1366 = vmatpush2.msra.mxu0 0.0
        %1367 = vmatprep.subr.mxu0 0.0
        %1368 = vmatpush2.msra.mxu0 0.0
        %1369 = vmatprep.subr.mxu0 0.0
        %1370 = vmatpush2.msra.mxu0 0.0
        %1371 = vmatprep.subr.mxu0 0.0
        %1372 = vmatpush2.msra.mxu0 0.0
        %1373 = vmatprep.subr.mxu0 0.0
        %1374 = vmatpush2.msra.mxu0 0.0
        %1375 = vmatprep.subr.mxu0 0.0
        %1376 = vmatpush2.msra.mxu0 0.0
        %1377 = vmatprep.subr.mxu0 0.0
        %1378 = vmatpush2.msra.mxu0 0.0
        %1379 = vmatprep.subr.mxu0 0.0
        %1380 = vmatpush2.msra.mxu0 0.0
        %1381 = vmatprep.subr.mxu0 0.0
        %1382 = vmatpush2.msra.mxu0 0.0
        %1383 = vmatprep.subr.mxu0 0.0
        %1384 = vmatpush2.msra.mxu0 0.0
        %1385 = vmatprep.subr.mxu0 0.0
        %1386 = vmatpush2.msra.mxu0 0.0
        %1387 = vmatprep.subr.mxu0 0.0
        %1388 = vmatpush2.msra.mxu0 0.0
        %1389 = vmatprep.subr.mxu0 0.0
        %1390 = vmatpush2.msra.mxu0 0.0
        %1391 = vmatprep.mubr.f32.mxu0 0.0
        %1392 = vmatmul.mubr.f32.gmra.mxu0 %v1254
        %v1393 = vpop.f32.mrf.mxu0
        %v1394 = vadd.f32 0.0, %v1393
        %v1395 = vpop.f32.mrf.mxu0
        %v1396 = vadd.f32 0.0, %v1395
        %1397 = vdwg.mxu0
        %v1402 = vcombine.low %v1323, %v1325
        %v1403 = vcombine.low %v1394, %v1396
        %v1405 = vunpack.c.l.s4 1983009808
        %v1406 = vunpack.c.0.s8 %v1405
        %v1407 = vlaneseq
        %v1408 = vshrl.u32 %v1407, 7
        %v1409 = vsub.s32 %v1406, %v1408
        %v1410 = vrot.slane %v1402, %v1409
        %v1412 = vunpack.c.l.s4 1983009808
        %v1413 = vunpack.c.0.s8 %v1412
        %v1414 = vlaneseq
        %v1415 = vshrl.u32 %v1414, 7
        %v1416 = vsub.s32 %v1413, %v1415
        %v1417 = vrot.slane %v1403, %v1416
        %v1418 = vcombine.low %v1410, %v1417
        %1420 = vst [vmem:[%s402] sm:$0xff] %v1418
        %1421 = vmatprep.subr.mxu0 0.0
        %1422 = vmatpush1.msra.mxu0 0.0
        %1423 = vmatprep.subr.mxu0 0.0
        %1424 = vmatpush1.msra.mxu0 0.0
        %1425 = vmatprep.subr.mxu0 0.0
        %1426 = vmatpush1.msra.mxu0 0.0
        %1427 = vmatprep.subr.mxu0 0.0
        %1428 = vmatpush1.msra.mxu0 0.0
        %1429 = vmatprep.subr.mxu0 0.0
        %1430 = vmatpush1.msra.mxu0 0.0
        %1431 = vmatprep.subr.mxu0 0.0
        %1432 = vmatpush1.msra.mxu0 0.0
        %1433 = vmatprep.subr.mxu0 0.0
        %1434 = vmatpush1.msra.mxu0 0.0
        %1435 = vmatprep.subr.mxu0 0.0
        %1436 = vmatpush1.msra.mxu0 0.0
        %1437 = vmatprep.subr.mxu0 0.0
        %1438 = vmatpush1.msra.mxu0 0.0
        %1439 = vmatprep.subr.mxu0 0.0
        %1440 = vmatpush1.msra.mxu0 0.0
        %1441 = vmatprep.subr.mxu0 0.0
        %1442 = vmatpush1.msra.mxu0 0.0
        %1443 = vmatprep.subr.mxu0 0.0
        %1444 = vmatpush1.msra.mxu0 0.0
        %1445 = vmatprep.subr.mxu0 %v1248
        %1446 = vmatpush1.msra.mxu0 %v1247
        %1447 = vmatprep.subr.mxu0 %v1244
        %1448 = vmatpush1.msra.mxu0 %v1243
        %1449 = vmatprep.subr.mxu0 %v1240
        %1450 = vmatpush1.msra.mxu0 %v1239
        %1451 = vmatprep.subr.mxu0 %v1236
        %1452 = vmatpush1.msra.mxu0 %v1235
        %1453 = vmatprep.subr.mxu0 0.0
        %1454 = vmatpush2.msra.mxu0 0.0
        %1455 = vmatprep.subr.mxu0 0.0
        %1456 = vmatpush2.msra.mxu0 0.0
        %1457 = vmatprep.subr.mxu0 0.0
        %1458 = vmatpush2.msra.mxu0 0.0
        %1459 = vmatprep.subr.mxu0 0.0
        %1460 = vmatpush2.msra.mxu0 0.0
        %1461 = vmatprep.subr.mxu0 0.0
        %1462 = vmatpush2.msra.mxu0 0.0
        %1463 = vmatprep.subr.mxu0 0.0
        %1464 = vmatpush2.msra.mxu0 0.0
        %1465 = vmatprep.subr.mxu0 0.0
        %1466 = vmatpush2.msra.mxu0 0.0
        %1467 = vmatprep.subr.mxu0 0.0
        %1468 = vmatpush2.msra.mxu0 0.0
        %1469 = vmatprep.subr.mxu0 0.0
        %1470 = vmatpush2.msra.mxu0 0.0
        %1471 = vmatprep.subr.mxu0 0.0
        %1472 = vmatpush2.msra.mxu0 0.0
        %1473 = vmatprep.subr.mxu0 0.0
        %1474 = vmatpush2.msra.mxu0 0.0
        %1475 = vmatprep.subr.mxu0 0.0
        %1476 = vmatpush2.msra.mxu0 0.0
        %1477 = vmatprep.subr.mxu0 0.0
        %1478 = vmatpush2.msra.mxu0 0.0
        %1479 = vmatprep.subr.mxu0 0.0
        %1480 = vmatpush2.msra.mxu0 0.0
        %1481 = vmatprep.subr.mxu0 0.0
        %1482 = vmatpush2.msra.mxu0 0.0
        %1483 = vmatprep.subr.mxu0 0.0
        %1484 = vmatpush2.msra.mxu0 0.0
        %1485 = vmatprep.mubr.f32.mxu0 0.0
        %1486 = vmatmul.mubr.f32.gmra.mxu0 %v1254
        %v1487 = vpop.f32.mrf.mxu0
        %v1488 = vadd.f32 0.0, %v1487
        %v1489 = vpop.f32.mrf.mxu0
        %v1490 = vadd.f32 0.0, %v1489
        %1491 = vdwg.mxu0
        %1492 = vmatprep.subr.mxu0 0.0
        %1493 = vmatpush1.msra.mxu0 0.0
        %1494 = vmatprep.subr.mxu0 0.0
        %1495 = vmatpush1.msra.mxu0 0.0
        %1496 = vmatprep.subr.mxu0 0.0
        %1497 = vmatpush1.msra.mxu0 0.0
        %1498 = vmatprep.subr.mxu0 0.0
        %1499 = vmatpush1.msra.mxu0 0.0
        %1500 = vmatprep.subr.mxu0 0.0
        %1501 = vmatpush1.msra.mxu0 0.0
        %1502 = vmatprep.subr.mxu0 0.0
        %1503 = vmatpush1.msra.mxu0 0.0
        %1504 = vmatprep.subr.mxu0 0.0
        %1505 = vmatpush1.msra.mxu0 0.0
        %1506 = vmatprep.subr.mxu0 0.0
        %1507 = vmatpush1.msra.mxu0 0.0
        %1508 = vmatprep.subr.mxu0 0.0
        %1509 = vmatpush1.msra.mxu0 0.0
        %1510 = vmatprep.subr.mxu0 0.0
        %1511 = vmatpush1.msra.mxu0 0.0
        %1512 = vmatprep.subr.mxu0 0.0
        %1513 = vmatpush1.msra.mxu0 0.0
        %1514 = vmatprep.subr.mxu0 0.0
        %1515 = vmatpush1.msra.mxu0 0.0
        %1516 = vmatprep.subr.mxu0 %v1250
        %1517 = vmatpush1.msra.mxu0 %v1249
        %1518 = vmatprep.subr.mxu0 %v1246
        %1519 = vmatpush1.msra.mxu0 %v1245
        %1520 = vmatprep.subr.mxu0 %v1242
        %1521 = vmatpush1.msra.mxu0 %v1241
        %1522 = vmatprep.subr.mxu0 %v1238
        %1523 = vmatpush1.msra.mxu0 %v1237
        %1524 = vmatprep.subr.mxu0 0.0
        %1525 = vmatpush2.msra.mxu0 0.0
        %1526 = vmatprep.subr.mxu0 0.0
        %1527 = vmatpush2.msra.mxu0 0.0
        %1528 = vmatprep.subr.mxu0 0.0
        %1529 = vmatpush2.msra.mxu0 0.0
        %1530 = vmatprep.subr.mxu0 0.0
        %1531 = vmatpush2.msra.mxu0 0.0
        %1532 = vmatprep.subr.mxu0 0.0
        %1533 = vmatpush2.msra.mxu0 0.0
        %1534 = vmatprep.subr.mxu0 0.0
        %1535 = vmatpush2.msra.mxu0 0.0
        %1536 = vmatprep.subr.mxu0 0.0
        %1537 = vmatpush2.msra.mxu0 0.0
        %1538 = vmatprep.subr.mxu0 0.0
        %1539 = vmatpush2.msra.mxu0 0.0
        %1540 = vmatprep.subr.mxu0 0.0
        %1541 = vmatpush2.msra.mxu0 0.0
        %1542 = vmatprep.subr.mxu0 0.0
        %1543 = vmatpush2.msra.mxu0 0.0
        %1544 = vmatprep.subr.mxu0 0.0
        %1545 = vmatpush2.msra.mxu0 0.0
        %1546 = vmatprep.subr.mxu0 0.0
        %1547 = vmatpush2.msra.mxu0 0.0
        %1548 = vmatprep.subr.mxu0 0.0
        %1549 = vmatpush2.msra.mxu0 0.0
        %1550 = vmatprep.subr.mxu0 0.0
        %1551 = vmatpush2.msra.mxu0 0.0
        %1552 = vmatprep.subr.mxu0 0.0
        %1553 = vmatpush2.msra.mxu0 0.0
        %1554 = vmatprep.subr.mxu0 0.0
        %1555 = vmatpush2.msra.mxu0 0.0
        %1556 = vmatprep.mubr.f32.mxu0 0.0
        %1557 = vmatmul.mubr.f32.gmra.mxu0 %v1254
        %v1558 = vpop.f32.mrf.mxu0
        %v1559 = vadd.f32 0.0, %v1558
        %v1560 = vpop.f32.mrf.mxu0
        %v1561 = vadd.f32 0.0, %v1560
        %1562 = vdwg.mxu0
        %v1567 = vcombine.low %v1488, %v1490
        %v1568 = vcombine.low %v1559, %v1561
        %v1570 = vunpack.c.l.s4 1983009808
        %v1571 = vunpack.c.0.s8 %v1570
        %v1572 = vlaneseq
        %v1573 = vshrl.u32 %v1572, 7
        %v1574 = vsub.s32 %v1571, %v1573
        %v1575 = vrot.slane %v1567, %v1574
        %v1577 = vunpack.c.l.s4 1983009808
        %v1578 = vunpack.c.0.s8 %v1577
        %v1579 = vlaneseq
        %v1580 = vshrl.u32 %v1579, 7
        %v1581 = vsub.s32 %v1578, %v1580
        %v1582 = vrot.slane %v1568, %v1581
        %v1583 = vcombine.low %v1575, %v1582
        %1585 = vst [vmem:[%s408] sm:$0xff] %v1583
        %s1586 = smul.u32 4, %s25
        %p1587 = scmp.lt.s32.totalorder %s1586, 127
        %s1588 = scalar_select %p1587, %s1586, 127
        %s1589 = smul.addr %s1588, 2
        %s1590 = scalar_lea.vmem %s6, %s1589
        %s1591 = smul.u32 4, %s25
        %p1592 = scmp.lt.s32.totalorder %s1591, 127
        %s1593 = scalar_select %p1592, %s1591, 127
        %s1594 = smul.addr %s1593, 2
        %s1595 = scalar_lea.vmem %s7, %s1594
        // Predicated region
        $region57: #{pooling_cbp_forward.2} parent=43 // pred_check
          %p1596 = pneg %p189
        $region58: #{pooling_cbp_forward.2} parent=43 // pred_check_branch
          %1598 = sbr.rel (%p1596) target = $region60
        $region59: #{pooling_cbp_forward.2} parent=43 // pred_region
          %s1599 = smul.u32 4, %s25
        $region60: #{pooling_cbp_forward.2} parent=43 // pred_fallthru
          _
        // Predicated region
        $region61: #{pooling_cbp_forward.2} parent=43 // pred_check
          %p1600 = pneg %p215
        $region62: #{pooling_cbp_forward.2} parent=43 // pred_check_branch
          %1602 = sbr.rel (%p1600) target = $region64
        $region63: #{pooling_cbp_forward.2} parent=43 // pred_region
          %s1603 = smul.u32 4, %s25
        $region64: #{pooling_cbp_forward.2} parent=43 // pred_fallthru
          _
      $region44: #{pooling_cbp_forward.2} parent=5 // pred_fallthru
        _
      %p1604 = scmp.le.s32.totalorder 2, %s20
      // Predicated region
      $region65: #{pooling_cbp_forward.2} parent=5 // pred_check
        %p1605 = pneg %p1604
      $region66: #{pooling_cbp_forward.2} parent=5 // pred_check_branch
        %1607 = sbr.rel (%p1605) target = $region68
      $region67: #{pooling_cbp_forward.2} parent=5 // pred_region
        %s1608 = ssub.s32 %s20, 2
        // Predicated region
        $region69: #{pooling_cbp_forward.2} parent=67 // pred_check
          %p1609 = pneg %p195
        $region70: #{pooling_cbp_forward.2} parent=67 // pred_check_branch
          %1611 = sbr.rel (%p1609) target = $region72
        $region71: #{pooling_cbp_forward.2} parent=67 // pred_region
          %s1612 = smul.u32 4, %s26
          %p1613 = scmp.lt.s32.totalorder %s1612, 127
          %s1614 = scalar_select %p1613, %s1612, 127
          %s1615 = smul.addr %s1614, 2
          %s1616 = scalar_lea.vmem %s6, %s1615
        $region72: #{pooling_cbp_forward.2} parent=67 // pred_fallthru
          _
        // Predicated region
        $region73: #{pooling_cbp_forward.2} parent=67 // pred_check
          %p1617 = pneg %p221
        $region74: #{pooling_cbp_forward.2} parent=67 // pred_check_branch
          %1619 = sbr.rel (%p1617) target = $region76
        $region75: #{pooling_cbp_forward.2} parent=67 // pred_region
          %s1620 = smul.u32 4, %s26
          %p1621 = scmp.lt.s32.totalorder %s1620, 127
          %s1622 = scalar_select %p1621, %s1620, 127
          %s1623 = smul.addr %s1622, 2
          %s1624 = scalar_lea.vmem %s7, %s1623
        $region76: #{pooling_cbp_forward.2} parent=67 // pred_fallthru
          _
      $region68: #{pooling_cbp_forward.2} parent=5 // pred_fallthru
        _
    $region6: #{pooling_cbp_forward.2} parent=1 // loop_footer
      %s24 = sadd.s32 1, %s20
    $region7: #{pooling_cbp_forward.2} parent=1 // loop_footer_branch
      %19 = sbr.rel target = $region3
    $region8: #{pooling_cbp_forward.2} parent=1 // loop_exit
      _
    %1625 = vsyncpa [#allocation3], 1
    %s1626 = scalar_lea.sflag [#allocation3], 1
    %1627 = vsyncpa %s1626, 1
    %1628 = vsyncpa [#allocation5], 1
    %s1629 = scalar_lea.sflag [#allocation5], 1
    %1630 = vsyncpa %s1629, 1

// kernel: pooling_cbp_forward.3
$region0: #{pooling_cbp_forward.3}
  #allocation0 [shape = 'u32[]', space=smem, size = 0x4, offset = 0x4, fixed_abs, tag = 'smem constant byte address 0x4 - core index']
  #allocation1 [shape = 'u32[144,128]{1,0:T(1,128)}', space=vmem, size = 0x12000, scoped, tag = 'internal scratch']
  %s0 = inlined_call_operand.vmem [shape: f32[128,256], index: 0, kind: input, shape index: {}]
  %s1 = inlined_call_operand.vmem [shape: f32[128,256], index: 1, kind: input, shape index: {}]
  %s2 = inlined_call_operand.vmem [shape: f32[128,128], index: 2, kind: input, shape index: {}]
  %s3 = inlined_call_operand.vmem [shape: f32[128,128], index: 3, kind: input, shape index: {}]
  %s4 = inlined_call_operand.vmem [shape: f32[128,256], index: 4, kind: input, shape index: {}]
  %s5 = inlined_call_operand.vmem [shape: f32[128,256], index: 5, kind: input, shape index: {}]
  %s6 = inlined_call_operand.vmem [shape: f32[2,128,128], index: 6, kind: output, shape index: {}]
  %s7 = sld [smem:[#allocation0]]
  $region34: #{pooling_cbp_forward.3} parent=0
    _
  %s9 = ssub.s32 1, %s7
  %s10 = scalar_select 0, %s9, %s7
  // Predicated region
  $region2: #{pooling_cbp_forward.3} parent=0 // pred_check
    _
  $region3: #{pooling_cbp_forward.3} parent=0 // pred_check_branch
    %12 = sbr.rel (0) target = $region5
  $region4: #{pooling_cbp_forward.3} parent=0 // pred_region
    _
  $region5: #{pooling_cbp_forward.3} parent=0 // pred_fallthru
    _
  // Predicated region
  $region6: #{pooling_cbp_forward.3} parent=0 // pred_check
    _
  $region7: #{pooling_cbp_forward.3} parent=0 // pred_check_branch
    %14 = sbr.rel (0) target = $region9
  $region8: #{pooling_cbp_forward.3} parent=0 // pred_region
    _
  $region9: #{pooling_cbp_forward.3} parent=0 // pred_fallthru
    _
  // Predicated region
  $region10: #{pooling_cbp_forward.3} parent=0 // pred_check
    _
  $region11: #{pooling_cbp_forward.3} parent=0 // pred_check_branch
    %16 = sbr.rel (0) target = $region13
  $region12: #{pooling_cbp_forward.3} parent=0 // pred_region
    _
  $region13: #{pooling_cbp_forward.3} parent=0 // pred_fallthru
    _
  // Predicated region
  $region14: #{pooling_cbp_forward.3} parent=0 // pred_check
    _
  $region15: #{pooling_cbp_forward.3} parent=0 // pred_check_branch
    %18 = sbr.rel (0) target = $region17
  $region16: #{pooling_cbp_forward.3} parent=0 // pred_region
    _
  $region17: #{pooling_cbp_forward.3} parent=0 // pred_fallthru
    _
  // Predicated region
  $region18: #{pooling_cbp_forward.3} parent=0 // pred_check
    _
  $region19: #{pooling_cbp_forward.3} parent=0 // pred_check_branch
    %20 = sbr.rel (0) target = $region21
  $region20: #{pooling_cbp_forward.3} parent=0 // pred_region
    _
  $region21: #{pooling_cbp_forward.3} parent=0 // pred_fallthru
    _
  // Predicated region
  $region22: #{pooling_cbp_forward.3} parent=0 // pred_check
    _
  $region23: #{pooling_cbp_forward.3} parent=0 // pred_check_branch
    %22 = sbr.rel (0) target = $region25
  $region24: #{pooling_cbp_forward.3} parent=0 // pred_region
    _
  $region25: #{pooling_cbp_forward.3} parent=0 // pred_fallthru
    _
  %v23 = vld [vmem:[%s0] sm:$0xff]
  %v24 = vld [vmem:[%s0 + $0x8] sm:$0xff]
  %v25 = vld [vmem:[%s0 + $0x10] sm:$0xff]
  %v26 = vld [vmem:[%s0 + $0x18] sm:$0xff]
  %v27 = vld [vmem:[%s0 + $0x20] sm:$0xff]
  %v28 = vld [vmem:[%s0 + $0x28] sm:$0xff]
  %v29 = vld [vmem:[%s0 + $0x30] sm:$0xff]
  %v30 = vld [vmem:[%s0 + $0x38] sm:$0xff]
  %v31 = vld [vmem:[%s0 + $0x40] sm:$0xff]
  %v32 = vld [vmem:[%s0 + $0x48] sm:$0xff]
  %v33 = vld [vmem:[%s0 + $0x50] sm:$0xff]
  %v34 = vld [vmem:[%s0 + $0x58] sm:$0xff]
  %v35 = vld [vmem:[%s0 + $0x60] sm:$0xff]
  %v36 = vld [vmem:[%s0 + $0x68] sm:$0xff]
  %v37 = vld [vmem:[%s0 + $0x70] sm:$0xff]
  %v38 = vld [vmem:[%s0 + $0x78] sm:$0xff]
  %v39 = vld [vmem:[%s0 + $0x80] sm:$0xff]
  %v40 = vld [vmem:[%s0 + $0x88] sm:$0xff]
  %v41 = vld [vmem:[%s0 + $0x90] sm:$0xff]
  %v42 = vld [vmem:[%s0 + $0x98] sm:$0xff]
  %v43 = vld [vmem:[%s0 + $0xa0] sm:$0xff]
  %v44 = vld [vmem:[%s0 + $0xa8] sm:$0xff]
  %v45 = vld [vmem:[%s0 + $0xb0] sm:$0xff]
  %v46 = vld [vmem:[%s0 + $0xb8] sm:$0xff]
  %v47 = vld [vmem:[%s0 + $0xc0] sm:$0xff]
  %v48 = vld [vmem:[%s0 + $0xc8] sm:$0xff]
  %v49 = vld [vmem:[%s0 + $0xd0] sm:$0xff]
  %v50 = vld [vmem:[%s0 + $0xd8] sm:$0xff]
  %v51 = vld [vmem:[%s0 + $0xe0] sm:$0xff]
  %v52 = vld [vmem:[%s0 + $0xe8] sm:$0xff]
  %v53 = vld [vmem:[%s0 + $0xf0] sm:$0xff]
  %v54 = vld [vmem:[%s0 + $0xf8] sm:$0xff]
  %v55 = vld [vmem:[%s1] sm:$0xff]
  %v56 = vld [vmem:[%s1 + $0x8] sm:$0xff]
  %v57 = vld [vmem:[%s1 + $0x10] sm:$0xff]
  %v58 = vld [vmem:[%s1 + $0x18] sm:$0xff]
  %v59 = vld [vmem:[%s1 + $0x20] sm:$0xff]
  %v60 = vld [vmem:[%s1 + $0x28] sm:$0xff]
  %v61 = vld [vmem:[%s1 + $0x30] sm:$0xff]
  %v62 = vld [vmem:[%s1 + $0x38] sm:$0xff]
  %v63 = vld [vmem:[%s1 + $0x40] sm:$0xff]
  %v64 = vld [vmem:[%s1 + $0x48] sm:$0xff]
  %v65 = vld [vmem:[%s1 + $0x50] sm:$0xff]
  %v66 = vld [vmem:[%s1 + $0x58] sm:$0xff]
  %v67 = vld [vmem:[%s1 + $0x60] sm:$0xff]
  %v68 = vld [vmem:[%s1 + $0x68] sm:$0xff]
  %v69 = vld [vmem:[%s1 + $0x70] sm:$0xff]
  %v70 = vld [vmem:[%s1 + $0x78] sm:$0xff]
  %v71 = vld [vmem:[%s1 + $0x80] sm:$0xff]
  %v72 = vld [vmem:[%s1 + $0x88] sm:$0xff]
  %v73 = vld [vmem:[%s1 + $0x90] sm:$0xff]
  %v74 = vld [vmem:[%s1 + $0x98] sm:$0xff]
  %v75 = vld [vmem:[%s1 + $0xa0] sm:$0xff]
  %v76 = vld [vmem:[%s1 + $0xa8] sm:$0xff]
  %v77 = vld [vmem:[%s1 + $0xb0] sm:$0xff]
  %v78 = vld [vmem:[%s1 + $0xb8] sm:$0xff]
  %v79 = vld [vmem:[%s1 + $0xc0] sm:$0xff]
  %v80 = vld [vmem:[%s1 + $0xc8] sm:$0xff]
  %v81 = vld [vmem:[%s1 + $0xd0] sm:$0xff]
  %v82 = vld [vmem:[%s1 + $0xd8] sm:$0xff]
  %v83 = vld [vmem:[%s1 + $0xe0] sm:$0xff]
  %v84 = vld [vmem:[%s1 + $0xe8] sm:$0xff]
  %v85 = vld [vmem:[%s1 + $0xf0] sm:$0xff]
  %v86 = vld [vmem:[%s1 + $0xf8] sm:$0xff]
  %v87 = vld [vmem:[%s2] sm:$0xff]
  %v88 = vld [vmem:[%s2 + $0x8] sm:$0xff]
  %v89 = vld [vmem:[%s2 + $0x10] sm:$0xff]
  %v90 = vld [vmem:[%s2 + $0x18] sm:$0xff]
  %v91 = vld [vmem:[%s2 + $0x20] sm:$0xff]
  %v92 = vld [vmem:[%s2 + $0x28] sm:$0xff]
  %v93 = vld [vmem:[%s2 + $0x30] sm:$0xff]
  %v94 = vld [vmem:[%s2 + $0x38] sm:$0xff]
  %v95 = vld [vmem:[%s2 + $0x40] sm:$0xff]
  %v96 = vld [vmem:[%s2 + $0x48] sm:$0xff]
  %v97 = vld [vmem:[%s2 + $0x50] sm:$0xff]
  %v98 = vld [vmem:[%s2 + $0x58] sm:$0xff]
  %v99 = vld [vmem:[%s2 + $0x60] sm:$0xff]
  %v100 = vld [vmem:[%s2 + $0x68] sm:$0xff]
  %v101 = vld [vmem:[%s2 + $0x70] sm:$0xff]
  %v102 = vld [vmem:[%s2 + $0x78] sm:$0xff]
  %v103 = vld [vmem:[%s3] sm:$0xff]
  %v104 = vld [vmem:[%s3 + $0x8] sm:$0xff]
  %v105 = vld [vmem:[%s3 + $0x10] sm:$0xff]
  %v106 = vld [vmem:[%s3 + $0x18] sm:$0xff]
  %v107 = vld [vmem:[%s3 + $0x20] sm:$0xff]
  %v108 = vld [vmem:[%s3 + $0x28] sm:$0xff]
  %v109 = vld [vmem:[%s3 + $0x30] sm:$0xff]
  %v110 = vld [vmem:[%s3 + $0x38] sm:$0xff]
  %v111 = vld [vmem:[%s3 + $0x40] sm:$0xff]
  %v112 = vld [vmem:[%s3 + $0x48] sm:$0xff]
  %v113 = vld [vmem:[%s3 + $0x50] sm:$0xff]
  %v114 = vld [vmem:[%s3 + $0x58] sm:$0xff]
  %v115 = vld [vmem:[%s3 + $0x60] sm:$0xff]
  %v116 = vld [vmem:[%s3 + $0x68] sm:$0xff]
  %v117 = vld [vmem:[%s3 + $0x70] sm:$0xff]
  %v118 = vld [vmem:[%s3 + $0x78] sm:$0xff]
  %v119 = vld [vmem:[%s4] sm:$0xff]
  %v120 = vld [vmem:[%s4 + $0x8] sm:$0xff]
  %v121 = vld [vmem:[%s4 + $0x10] sm:$0xff]
  %v122 = vld [vmem:[%s4 + $0x18] sm:$0xff]
  %v123 = vld [vmem:[%s4 + $0x20] sm:$0xff]
  %v124 = vld [vmem:[%s4 + $0x28] sm:$0xff]
  %v125 = vld [vmem:[%s4 + $0x30] sm:$0xff]
  %v126 = vld [vmem:[%s4 + $0x38] sm:$0xff]
  %v127 = vld [vmem:[%s4 + $0x40] sm:$0xff]
  %v128 = vld [vmem:[%s4 + $0x48] sm:$0xff]
  %v129 = vld [vmem:[%s4 + $0x50] sm:$0xff]
  %v130 = vld [vmem:[%s4 + $0x58] sm:$0xff]
  %v131 = vld [vmem:[%s4 + $0x60] sm:$0xff]
  %v132 = vld [vmem:[%s4 + $0x68] sm:$0xff]
  %v133 = vld [vmem:[%s4 + $0x70] sm:$0xff]
  %v134 = vld [vmem:[%s4 + $0x78] sm:$0xff]
  %v135 = vld [vmem:[%s4 + $0x80] sm:$0xff]
  %v136 = vld [vmem:[%s4 + $0x88] sm:$0xff]
  %v137 = vld [vmem:[%s4 + $0x90] sm:$0xff]
  %v138 = vld [vmem:[%s4 + $0x98] sm:$0xff]
  %v139 = vld [vmem:[%s4 + $0xa0] sm:$0xff]
  %v140 = vld [vmem:[%s4 + $0xa8] sm:$0xff]
  %v141 = vld [vmem:[%s4 + $0xb0] sm:$0xff]
  %v142 = vld [vmem:[%s4 + $0xb8] sm:$0xff]
  %v143 = vld [vmem:[%s4 + $0xc0] sm:$0xff]
  %v144 = vld [vmem:[%s4 + $0xc8] sm:$0xff]
  %v145 = vld [vmem:[%s4 + $0xd0] sm:$0xff]
  %v146 = vld [vmem:[%s4 + $0xd8] sm:$0xff]
  %v147 = vld [vmem:[%s4 + $0xe0] sm:$0xff]
  %v148 = vld [vmem:[%s4 + $0xe8] sm:$0xff]
  %v149 = vld [vmem:[%s4 + $0xf0] sm:$0xff]
  %v150 = vld [vmem:[%s4 + $0xf8] sm:$0xff]
  %v151 = vld [vmem:[%s5] sm:$0xff]
  %v152 = vld [vmem:[%s5 + $0x8] sm:$0xff]
  %v153 = vld [vmem:[%s5 + $0x10] sm:$0xff]
  %v154 = vld [vmem:[%s5 + $0x18] sm:$0xff]
  %v155 = vld [vmem:[%s5 + $0x20] sm:$0xff]
  %v156 = vld [vmem:[%s5 + $0x28] sm:$0xff]
  %v157 = vld [vmem:[%s5 + $0x30] sm:$0xff]
  %v158 = vld [vmem:[%s5 + $0x38] sm:$0xff]
  %v159 = vld [vmem:[%s5 + $0x40] sm:$0xff]
  %v160 = vld [vmem:[%s5 + $0x48] sm:$0xff]
  %v161 = vld [vmem:[%s5 + $0x50] sm:$0xff]
  %v162 = vld [vmem:[%s5 + $0x58] sm:$0xff]
  %v163 = vld [vmem:[%s5 + $0x60] sm:$0xff]
  %v164 = vld [vmem:[%s5 + $0x68] sm:$0xff]
  %v165 = vld [vmem:[%s5 + $0x70] sm:$0xff]
  %v166 = vld [vmem:[%s5 + $0x78] sm:$0xff]
  %v167 = vld [vmem:[%s5 + $0x80] sm:$0xff]
  %v168 = vld [vmem:[%s5 + $0x88] sm:$0xff]
  %v169 = vld [vmem:[%s5 + $0x90] sm:$0xff]
  %v170 = vld [vmem:[%s5 + $0x98] sm:$0xff]
  %v171 = vld [vmem:[%s5 + $0xa0] sm:$0xff]
  %v172 = vld [vmem:[%s5 + $0xa8] sm:$0xff]
  %v173 = vld [vmem:[%s5 + $0xb0] sm:$0xff]
  %v174 = vld [vmem:[%s5 + $0xb8] sm:$0xff]
  %v175 = vld [vmem:[%s5 + $0xc0] sm:$0xff]
  %v176 = vld [vmem:[%s5 + $0xc8] sm:$0xff]
  %v177 = vld [vmem:[%s5 + $0xd0] sm:$0xff]
  %v178 = vld [vmem:[%s5 + $0xd8] sm:$0xff]
  %v179 = vld [vmem:[%s5 + $0xe0] sm:$0xff]
  %v180 = vld [vmem:[%s5 + $0xe8] sm:$0xff]
  %v181 = vld [vmem:[%s5 + $0xf0] sm:$0xff]
  %v182 = vld [vmem:[%s5 + $0xf8] sm:$0xff]
  %183 = vmatprep.subr.mxu0 %v54
  %184 = vmatpush1.msra.mxu0 %v53
  %185 = vmatprep.subr.mxu0 %v52
  %186 = vmatpush1.msra.mxu0 %v51
  %187 = vmatprep.subr.mxu0 %v50
  %188 = vmatpush1.msra.mxu0 %v49
  %189 = vmatprep.subr.mxu0 %v48
  %190 = vmatpush1.msra.mxu0 %v47
  %191 = vmatprep.subr.mxu0 %v46
  %192 = vmatpush1.msra.mxu0 %v45
  %193 = vmatprep.subr.mxu0 %v44
  %194 = vmatpush1.msra.mxu0 %v43
  %195 = vmatprep.subr.mxu0 %v42
  %196 = vmatpush1.msra.mxu0 %v41
  %197 = vmatprep.subr.mxu0 %v40
  %198 = vmatpush1.msra.mxu0 %v39
  %199 = vmatprep.subr.mxu0 %v38
  %200 = vmatpush1.msra.mxu0 %v37
  %201 = vmatprep.subr.mxu0 %v36
  %202 = vmatpush1.msra.mxu0 %v35
  %203 = vmatprep.subr.mxu0 %v34
  %204 = vmatpush1.msra.mxu0 %v33
  %205 = vmatprep.subr.mxu0 %v32
  %206 = vmatpush1.msra.mxu0 %v31
  %207 = vmatprep.subr.mxu0 %v30
  %208 = vmatpush1.msra.mxu0 %v29
  %209 = vmatprep.subr.mxu0 %v28
  %210 = vmatpush1.msra.mxu0 %v27
  %211 = vmatprep.subr.mxu0 %v26
  %212 = vmatpush1.msra.mxu0 %v25
  %213 = vmatprep.subr.mxu0 %v24
  %214 = vmatpush1.msra.mxu0 %v23
  %215 = vmatprep.subr.mxu0 0.0
  %216 = vmatpush2.msra.mxu0 0.0
  %217 = vmatprep.subr.mxu0 0.0
  %218 = vmatpush2.msra.mxu0 0.0
  %219 = vmatprep.subr.mxu0 0.0
  %220 = vmatpush2.msra.mxu0 0.0
  %221 = vmatprep.subr.mxu0 0.0
  %222 = vmatpush2.msra.mxu0 0.0
  %223 = vmatprep.subr.mxu0 0.0
  %224 = vmatpush2.msra.mxu0 0.0
  %225 = vmatprep.subr.mxu0 0.0
  %226 = vmatpush2.msra.mxu0 0.0
  %227 = vmatprep.subr.mxu0 0.0
  %228 = vmatpush2.msra.mxu0 0.0
  %229 = vmatprep.subr.mxu0 0.0
  %230 = vmatpush2.msra.mxu0 0.0
  %231 = vmatprep.subr.mxu0 0.0
  %232 = vmatpush2.msra.mxu0 0.0
  %233 = vmatprep.subr.mxu0 0.0
  %234 = vmatpush2.msra.mxu0 0.0
  %235 = vmatprep.subr.mxu0 0.0
  %236 = vmatpush2.msra.mxu0 0.0
  %237 = vmatprep.subr.mxu0 0.0
  %238 = vmatpush2.msra.mxu0 0.0
  %239 = vmatprep.subr.mxu0 0.0
  %240 = vmatpush2.msra.mxu0 0.0
  %241 = vmatprep.subr.mxu0 0.0
  %242 = vmatpush2.msra.mxu0 0.0
  %243 = vmatprep.subr.mxu0 0.0
  %244 = vmatpush2.msra.mxu0 0.0
  %245 = vmatprep.subr.mxu0 0.0
  %246 = vmatpush2.msra.mxu0 0.0
  %247 = vmatprep.mubr.f32.mxu0 0.0
  %248 = vmatmul.mubr.f32.gmra.mxu0 %v87
  %v249 = vpop.f32.mrf.mxu0
  %v250 = vadd.f32 0.0, %v249
  %v251 = vpop.f32.mrf.mxu0
  %v252 = vadd.f32 0.0, %v251
  %253 = vmatprep.mubr.f32.mxu0 0.0
  %254 = vmatmul.mubr.f32.gmra.mxu0 %v88
  %v255 = vpop.f32.mrf.mxu0
  %v256 = vadd.f32 0.0, %v255
  %v257 = vpop.f32.mrf.mxu0
  %v258 = vadd.f32 0.0, %v257
  %259 = vmatprep.mubr.f32.mxu0 0.0
  %260 = vmatmul.mubr.f32.gmra.mxu0 %v89
  %v261 = vpop.f32.mrf.mxu0
  %v262 = vadd.f32 0.0, %v261
  %v263 = vpop.f32.mrf.mxu0
  %v264 = vadd.f32 0.0, %v263
  %265 = vmatprep.mubr.f32.mxu0 0.0
  %266 = vmatmul.mubr.f32.gmra.mxu0 %v90
  %v267 = vpop.f32.mrf.mxu0
  %v268 = vadd.f32 0.0, %v267
  %v269 = vpop.f32.mrf.mxu0
  %v270 = vadd.f32 0.0, %v269
  %271 = vmatprep.mubr.f32.mxu0 0.0
  %272 = vmatmul.mubr.f32.gmra.mxu0 %v91
  %v273 = vpop.f32.mrf.mxu0
  %v274 = vadd.f32 0.0, %v273
  %v275 = vpop.f32.mrf.mxu0
  %v276 = vadd.f32 0.0, %v275
  %277 = vmatprep.mubr.f32.mxu0 0.0
  %278 = vmatmul.mubr.f32.gmra.mxu0 %v92
  %v279 = vpop.f32.mrf.mxu0
  %v280 = vadd.f32 0.0, %v279
  %v281 = vpop.f32.mrf.mxu0
  %v282 = vadd.f32 0.0, %v281
  %283 = vmatprep.mubr.f32.mxu0 0.0
  %284 = vmatmul.mubr.f32.gmra.mxu0 %v93
  %v285 = vpop.f32.mrf.mxu0
  %v286 = vadd.f32 0.0, %v285
  %v287 = vpop.f32.mrf.mxu0
  %v288 = vadd.f32 0.0, %v287
  %289 = vmatprep.mubr.f32.mxu0 0.0
  %290 = vmatmul.mubr.f32.gmra.mxu0 %v94
  %v291 = vpop.f32.mrf.mxu0
  %v292 = vadd.f32 0.0, %v291
  %v293 = vpop.f32.mrf.mxu0
  %v294 = vadd.f32 0.0, %v293
  %295 = vmatprep.mubr.f32.mxu0 0.0
  %296 = vmatmul.mubr.f32.gmra.mxu0 %v95
  %v297 = vpop.f32.mrf.mxu0
  %v298 = vadd.f32 0.0, %v297
  %v299 = vpop.f32.mrf.mxu0
  %v300 = vadd.f32 0.0, %v299
  %301 = vmatprep.mubr.f32.mxu0 0.0
  %302 = vmatmul.mubr.f32.gmra.mxu0 %v96
  %v303 = vpop.f32.mrf.mxu0
  %v304 = vadd.f32 0.0, %v303
  %v305 = vpop.f32.mrf.mxu0
  %v306 = vadd.f32 0.0, %v305
  %307 = vmatprep.mubr.f32.mxu0 0.0
  %308 = vmatmul.mubr.f32.gmra.mxu0 %v97
  %v309 = vpop.f32.mrf.mxu0
  %v310 = vadd.f32 0.0, %v309
  %v311 = vpop.f32.mrf.mxu0
  %v312 = vadd.f32 0.0, %v311
  %313 = vmatprep.mubr.f32.mxu0 0.0
  %314 = vmatmul.mubr.f32.gmra.mxu0 %v98
  %v315 = vpop.f32.mrf.mxu0
  %v316 = vadd.f32 0.0, %v315
  %v317 = vpop.f32.mrf.mxu0
  %v318 = vadd.f32 0.0, %v317
  %319 = vmatprep.mubr.f32.mxu0 0.0
  %320 = vmatmul.mubr.f32.gmra.mxu0 %v99
  %v321 = vpop.f32.mrf.mxu0
  %v322 = vadd.f32 0.0, %v321
  %v323 = vpop.f32.mrf.mxu0
  %v324 = vadd.f32 0.0, %v323
  %325 = vmatprep.mubr.f32.mxu0 0.0
  %326 = vmatmul.mubr.f32.gmra.mxu0 %v100
  %v327 = vpop.f32.mrf.mxu0
  %v328 = vadd.f32 0.0, %v327
  %v329 = vpop.f32.mrf.mxu0
  %v330 = vadd.f32 0.0, %v329
  %331 = vmatprep.mubr.f32.mxu0 0.0
  %332 = vmatmul.mubr.f32.gmra.mxu0 %v101
  %v333 = vpop.f32.mrf.mxu0
  %v334 = vadd.f32 0.0, %v333
  %v335 = vpop.f32.mrf.mxu0
  %v336 = vadd.f32 0.0, %v335
  %337 = vmatprep.mubr.f32.mxu0 0.0
  %338 = vmatmul.mubr.f32.gmra.mxu0 %v102
  %v339 = vpop.f32.mrf.mxu0
  %v340 = vadd.f32 0.0, %v339
  %v341 = vpop.f32.mrf.mxu0
  %v342 = vadd.f32 0.0, %v341
  %343 = vdwg.mxu0
  %344 = vmatprep.subr.mxu0 %v86
  %345 = vmatpush1.msra.mxu0 %v85
  %346 = vmatprep.subr.mxu0 %v84
  %347 = vmatpush1.msra.mxu0 %v83
  %348 = vmatprep.subr.mxu0 %v82
  %349 = vmatpush1.msra.mxu0 %v81
  %350 = vmatprep.subr.mxu0 %v80
  %351 = vmatpush1.msra.mxu0 %v79
  %352 = vmatprep.subr.mxu0 %v78
  %353 = vmatpush1.msra.mxu0 %v77
  %354 = vmatprep.subr.mxu0 %v76
  %355 = vmatpush1.msra.mxu0 %v75
  %356 = vmatprep.subr.mxu0 %v74
  %357 = vmatpush1.msra.mxu0 %v73
  %358 = vmatprep.subr.mxu0 %v72
  %359 = vmatpush1.msra.mxu0 %v71
  %360 = vmatprep.subr.mxu0 %v70
  %361 = vmatpush1.msra.mxu0 %v69
  %362 = vmatprep.subr.mxu0 %v68
  %363 = vmatpush1.msra.mxu0 %v67
  %364 = vmatprep.subr.mxu0 %v66
  %365 = vmatpush1.msra.mxu0 %v65
  %366 = vmatprep.subr.mxu0 %v64
  %367 = vmatpush1.msra.mxu0 %v63
  %368 = vmatprep.subr.mxu0 %v62
  %369 = vmatpush1.msra.mxu0 %v61
  %370 = vmatprep.subr.mxu0 %v60
  %371 = vmatpush1.msra.mxu0 %v59
  %372 = vmatprep.subr.mxu0 %v58
  %373 = vmatpush1.msra.mxu0 %v57
  %374 = vmatprep.subr.mxu0 %v56
  %375 = vmatpush1.msra.mxu0 %v55
  %376 = vmatprep.subr.mxu0 0.0
  %377 = vmatpush2.msra.mxu0 0.0
  %378 = vmatprep.subr.mxu0 0.0
  %379 = vmatpush2.msra.mxu0 0.0
  %380 = vmatprep.subr.mxu0 0.0
  %381 = vmatpush2.msra.mxu0 0.0
  %382 = vmatprep.subr.mxu0 0.0
  %383 = vmatpush2.msra.mxu0 0.0
  %384 = vmatprep.subr.mxu0 0.0
  %385 = vmatpush2.msra.mxu0 0.0
  %386 = vmatprep.subr.mxu0 0.0
  %387 = vmatpush2.msra.mxu0 0.0
  %388 = vmatprep.subr.mxu0 0.0
  %389 = vmatpush2.msra.mxu0 0.0
  %390 = vmatprep.subr.mxu0 0.0
  %391 = vmatpush2.msra.mxu0 0.0
  %392 = vmatprep.subr.mxu0 0.0
  %393 = vmatpush2.msra.mxu0 0.0
  %394 = vmatprep.subr.mxu0 0.0
  %395 = vmatpush2.msra.mxu0 0.0
  %396 = vmatprep.subr.mxu0 0.0
  %397 = vmatpush2.msra.mxu0 0.0
  %398 = vmatprep.subr.mxu0 0.0
  %399 = vmatpush2.msra.mxu0 0.0
  %400 = vmatprep.subr.mxu0 0.0
  %401 = vmatpush2.msra.mxu0 0.0
  %402 = vmatprep.subr.mxu0 0.0
  %403 = vmatpush2.msra.mxu0 0.0
  %404 = vmatprep.subr.mxu0 0.0
  %405 = vmatpush2.msra.mxu0 0.0
  %406 = vmatprep.subr.mxu0 0.0
  %407 = vmatpush2.msra.mxu0 0.0
  %408 = vmatprep.mubr.f32.mxu0 0.0
  %409 = vmatmul.mubr.f32.gmra.mxu0 %v103
  %v410 = vpop.f32.mrf.mxu0
  %v411 = vadd.f32 0.0, %v410
  %v412 = vpop.f32.mrf.mxu0
  %v413 = vadd.f32 0.0, %v412
  %414 = vmatprep.mubr.f32.mxu0 0.0
  %415 = vmatmul.mubr.f32.gmra.mxu0 %v104
  %v416 = vpop.f32.mrf.mxu0
  %v417 = vadd.f32 0.0, %v416
  %v418 = vpop.f32.mrf.mxu0
  %v419 = vadd.f32 0.0, %v418
  %420 = vmatprep.mubr.f32.mxu0 0.0
  %421 = vmatmul.mubr.f32.gmra.mxu0 %v105
  %v422 = vpop.f32.mrf.mxu0
  %v423 = vadd.f32 0.0, %v422
  %v424 = vpop.f32.mrf.mxu0
  %v425 = vadd.f32 0.0, %v424
  %426 = vmatprep.mubr.f32.mxu0 0.0
  %427 = vmatmul.mubr.f32.gmra.mxu0 %v106
  %v428 = vpop.f32.mrf.mxu0
  %v429 = vadd.f32 0.0, %v428
  %v430 = vpop.f32.mrf.mxu0
  %v431 = vadd.f32 0.0, %v430
  %432 = vmatprep.mubr.f32.mxu0 0.0
  %433 = vmatmul.mubr.f32.gmra.mxu0 %v107
  %v434 = vpop.f32.mrf.mxu0
  %v435 = vadd.f32 0.0, %v434
  %v436 = vpop.f32.mrf.mxu0
  %v437 = vadd.f32 0.0, %v436
  %438 = vmatprep.mubr.f32.mxu0 0.0
  %439 = vmatmul.mubr.f32.gmra.mxu0 %v108
  %v440 = vpop.f32.mrf.mxu0
  %v441 = vadd.f32 0.0, %v440
  %v442 = vpop.f32.mrf.mxu0
  %v443 = vadd.f32 0.0, %v442
  %444 = vmatprep.mubr.f32.mxu0 0.0
  %445 = vmatmul.mubr.f32.gmra.mxu0 %v109
  %v446 = vpop.f32.mrf.mxu0
  %v447 = vadd.f32 0.0, %v446
  %v448 = vpop.f32.mrf.mxu0
  %v449 = vadd.f32 0.0, %v448
  %450 = vmatprep.mubr.f32.mxu0 0.0
  %451 = vmatmul.mubr.f32.gmra.mxu0 %v110
  %v452 = vpop.f32.mrf.mxu0
  %v453 = vadd.f32 0.0, %v452
  %v454 = vpop.f32.mrf.mxu0
  %v455 = vadd.f32 0.0, %v454
  %456 = vmatprep.mubr.f32.mxu0 0.0
  %457 = vmatmul.mubr.f32.gmra.mxu0 %v111
  %v458 = vpop.f32.mrf.mxu0
  %v459 = vadd.f32 0.0, %v458
  %v460 = vpop.f32.mrf.mxu0
  %v461 = vadd.f32 0.0, %v460
  %462 = vmatprep.mubr.f32.mxu0 0.0
  %463 = vmatmul.mubr.f32.gmra.mxu0 %v112
  %v464 = vpop.f32.mrf.mxu0
  %v465 = vadd.f32 0.0, %v464
  %v466 = vpop.f32.mrf.mxu0
  %v467 = vadd.f32 0.0, %v466
  %468 = vmatprep.mubr.f32.mxu0 0.0
  %469 = vmatmul.mubr.f32.gmra.mxu0 %v113
  %v470 = vpop.f32.mrf.mxu0
  %v471 = vadd.f32 0.0, %v470
  %v472 = vpop.f32.mrf.mxu0
  %v473 = vadd.f32 0.0, %v472
  %474 = vmatprep.mubr.f32.mxu0 0.0
  %475 = vmatmul.mubr.f32.gmra.mxu0 %v114
  %v476 = vpop.f32.mrf.mxu0
  %v477 = vadd.f32 0.0, %v476
  %v478 = vpop.f32.mrf.mxu0
  %v479 = vadd.f32 0.0, %v478
  %480 = vmatprep.mubr.f32.mxu0 0.0
  %481 = vmatmul.mubr.f32.gmra.mxu0 %v115
  %v482 = vpop.f32.mrf.mxu0
  %v483 = vadd.f32 0.0, %v482
  %v484 = vpop.f32.mrf.mxu0
  %v485 = vadd.f32 0.0, %v484
  %486 = vmatprep.mubr.f32.mxu0 0.0
  %487 = vmatmul.mubr.f32.gmra.mxu0 %v116
  %v488 = vpop.f32.mrf.mxu0
  %v489 = vadd.f32 0.0, %v488
  %v490 = vpop.f32.mrf.mxu0
  %v491 = vadd.f32 0.0, %v490
  %492 = vmatprep.mubr.f32.mxu0 0.0
  %493 = vmatmul.mubr.f32.gmra.mxu0 %v117
  %v494 = vpop.f32.mrf.mxu0
  %v495 = vadd.f32 0.0, %v494
  %v496 = vpop.f32.mrf.mxu0
  %v497 = vadd.f32 0.0, %v496
  %498 = vmatprep.mubr.f32.mxu0 0.0
  %499 = vmatmul.mubr.f32.gmra.mxu0 %v118
  %v500 = vpop.f32.mrf.mxu0
  %v501 = vadd.f32 0.0, %v500
  %v502 = vpop.f32.mrf.mxu0
  %v503 = vadd.f32 0.0, %v502
  %504 = vdwg.mxu0
  %v505 = vsub.f32 %v250, %v411
  %v506 = vsub.f32 %v252, %v413
  %v507 = vsub.f32 %v256, %v417
  %v508 = vsub.f32 %v258, %v419
  %v509 = vsub.f32 %v262, %v423
  %v510 = vsub.f32 %v264, %v425
  %v511 = vsub.f32 %v268, %v429
  %v512 = vsub.f32 %v270, %v431
  %v513 = vsub.f32 %v274, %v435
  %v514 = vsub.f32 %v276, %v437
  %v515 = vsub.f32 %v280, %v441
  %v516 = vsub.f32 %v282, %v443
  %v517 = vsub.f32 %v286, %v447
  %v518 = vsub.f32 %v288, %v449
  %v519 = vsub.f32 %v292, %v453
  %v520 = vsub.f32 %v294, %v455
  %v521 = vsub.f32 %v298, %v459
  %v522 = vsub.f32 %v300, %v461
  %v523 = vsub.f32 %v304, %v465
  %v524 = vsub.f32 %v306, %v467
  %v525 = vsub.f32 %v310, %v471
  %v526 = vsub.f32 %v312, %v473
  %v527 = vsub.f32 %v316, %v477
  %v528 = vsub.f32 %v318, %v479
  %v529 = vsub.f32 %v322, %v483
  %v530 = vsub.f32 %v324, %v485
  %v531 = vsub.f32 %v328, %v489
  %v532 = vsub.f32 %v330, %v491
  %v533 = vsub.f32 %v334, %v495
  %v534 = vsub.f32 %v336, %v497
  %v535 = vsub.f32 %v340, %v501
  %v536 = vsub.f32 %v342, %v503
  %537 = vmatprep.subr.mxu0 %v54
  %538 = vmatpush1.msra.mxu0 %v53
  %539 = vmatprep.subr.mxu0 %v52
  %540 = vmatpush1.msra.mxu0 %v51
  %541 = vmatprep.subr.mxu0 %v50
  %542 = vmatpush1.msra.mxu0 %v49
  %543 = vmatprep.subr.mxu0 %v48
  %544 = vmatpush1.msra.mxu0 %v47
  %545 = vmatprep.subr.mxu0 %v46
  %546 = vmatpush1.msra.mxu0 %v45
  %547 = vmatprep.subr.mxu0 %v44
  %548 = vmatpush1.msra.mxu0 %v43
  %549 = vmatprep.subr.mxu0 %v42
  %550 = vmatpush1.msra.mxu0 %v41
  %551 = vmatprep.subr.mxu0 %v40
  %552 = vmatpush1.msra.mxu0 %v39
  %553 = vmatprep.subr.mxu0 %v38
  %554 = vmatpush1.msra.mxu0 %v37
  %555 = vmatprep.subr.mxu0 %v36
  %556 = vmatpush1.msra.mxu0 %v35
  %557 = vmatprep.subr.mxu0 %v34
  %558 = vmatpush1.msra.mxu0 %v33
  %559 = vmatprep.subr.mxu0 %v32
  %560 = vmatpush1.msra.mxu0 %v31
  %561 = vmatprep.subr.mxu0 %v30
  %562 = vmatpush1.msra.mxu0 %v29
  %563 = vmatprep.subr.mxu0 %v28
  %564 = vmatpush1.msra.mxu0 %v27
  %565 = vmatprep.subr.mxu0 %v26
  %566 = vmatpush1.msra.mxu0 %v25
  %567 = vmatprep.subr.mxu0 %v24
  %568 = vmatpush1.msra.mxu0 %v23
  %569 = vmatprep.subr.mxu0 0.0
  %570 = vmatpush2.msra.mxu0 0.0
  %571 = vmatprep.subr.mxu0 0.0
  %572 = vmatpush2.msra.mxu0 0.0
  %573 = vmatprep.subr.mxu0 0.0
  %574 = vmatpush2.msra.mxu0 0.0
  %575 = vmatprep.subr.mxu0 0.0
  %576 = vmatpush2.msra.mxu0 0.0
  %577 = vmatprep.subr.mxu0 0.0
  %578 = vmatpush2.msra.mxu0 0.0
  %579 = vmatprep.subr.mxu0 0.0
  %580 = vmatpush2.msra.mxu0 0.0
  %581 = vmatprep.subr.mxu0 0.0
  %582 = vmatpush2.msra.mxu0 0.0
  %583 = vmatprep.subr.mxu0 0.0
  %584 = vmatpush2.msra.mxu0 0.0
  %585 = vmatprep.subr.mxu0 0.0
  %586 = vmatpush2.msra.mxu0 0.0
  %587 = vmatprep.subr.mxu0 0.0
  %588 = vmatpush2.msra.mxu0 0.0
  %589 = vmatprep.subr.mxu0 0.0
  %590 = vmatpush2.msra.mxu0 0.0
  %591 = vmatprep.subr.mxu0 0.0
  %592 = vmatpush2.msra.mxu0 0.0
  %593 = vmatprep.subr.mxu0 0.0
  %594 = vmatpush2.msra.mxu0 0.0
  %595 = vmatprep.subr.mxu0 0.0
  %596 = vmatpush2.msra.mxu0 0.0
  %597 = vmatprep.subr.mxu0 0.0
  %598 = vmatpush2.msra.mxu0 0.0
  %599 = vmatprep.subr.mxu0 0.0
  %600 = vmatpush2.msra.mxu0 0.0
  %601 = vmatprep.mubr.f32.mxu0 0.0
  %602 = vmatmul.mubr.f32.gmra.mxu0 %v103
  %v603 = vpop.f32.mrf.mxu0
  %v604 = vadd.f32 0.0, %v603
  %v605 = vpop.f32.mrf.mxu0
  %v606 = vadd.f32 0.0, %v605
  %607 = vmatprep.mubr.f32.mxu0 0.0
  %608 = vmatmul.mubr.f32.gmra.mxu0 %v104
  %v609 = vpop.f32.mrf.mxu0
  %v610 = vadd.f32 0.0, %v609
  %v611 = vpop.f32.mrf.mxu0
  %v612 = vadd.f32 0.0, %v611
  %613 = vmatprep.mubr.f32.mxu0 0.0
  %614 = vmatmul.mubr.f32.gmra.mxu0 %v105
  %v615 = vpop.f32.mrf.mxu0
  %v616 = vadd.f32 0.0, %v615
  %v617 = vpop.f32.mrf.mxu0
  %v618 = vadd.f32 0.0, %v617
  %619 = vmatprep.mubr.f32.mxu0 0.0
  %620 = vmatmul.mubr.f32.gmra.mxu0 %v106
  %v621 = vpop.f32.mrf.mxu0
  %v622 = vadd.f32 0.0, %v621
  %v623 = vpop.f32.mrf.mxu0
  %v624 = vadd.f32 0.0, %v623
  %625 = vmatprep.mubr.f32.mxu0 0.0
  %626 = vmatmul.mubr.f32.gmra.mxu0 %v107
  %v627 = vpop.f32.mrf.mxu0
  %v628 = vadd.f32 0.0, %v627
  %v629 = vpop.f32.mrf.mxu0
  %v630 = vadd.f32 0.0, %v629
  %631 = vmatprep.mubr.f32.mxu0 0.0
  %632 = vmatmul.mubr.f32.gmra.mxu0 %v108
  %v633 = vpop.f32.mrf.mxu0
  %v634 = vadd.f32 0.0, %v633
  %v635 = vpop.f32.mrf.mxu0
  %v636 = vadd.f32 0.0, %v635
  %637 = vmatprep.mubr.f32.mxu0 0.0
  %638 = vmatmul.mubr.f32.gmra.mxu0 %v109
  %v639 = vpop.f32.mrf.mxu0
  %v640 = vadd.f32 0.0, %v639
  %v641 = vpop.f32.mrf.mxu0
  %v642 = vadd.f32 0.0, %v641
  %643 = vmatprep.mubr.f32.mxu0 0.0
  %644 = vmatmul.mubr.f32.gmra.mxu0 %v110
  %v645 = vpop.f32.mrf.mxu0
  %v646 = vadd.f32 0.0, %v645
  %v647 = vpop.f32.mrf.mxu0
  %v648 = vadd.f32 0.0, %v647
  %649 = vmatprep.mubr.f32.mxu0 0.0
  %650 = vmatmul.mubr.f32.gmra.mxu0 %v111
  %v651 = vpop.f32.mrf.mxu0
  %v652 = vadd.f32 0.0, %v651
  %v653 = vpop.f32.mrf.mxu0
  %v654 = vadd.f32 0.0, %v653
  %655 = vmatprep.mubr.f32.mxu0 0.0
  %656 = vmatmul.mubr.f32.gmra.mxu0 %v112
  %v657 = vpop.f32.mrf.mxu0
  %v658 = vadd.f32 0.0, %v657
  %v659 = vpop.f32.mrf.mxu0
  %v660 = vadd.f32 0.0, %v659
  %661 = vmatprep.mubr.f32.mxu0 0.0
  %662 = vmatmul.mubr.f32.gmra.mxu0 %v113
  %v663 = vpop.f32.mrf.mxu0
  %v664 = vadd.f32 0.0, %v663
  %v665 = vpop.f32.mrf.mxu0
  %v666 = vadd.f32 0.0, %v665
  %667 = vmatprep.mubr.f32.mxu0 0.0
  %668 = vmatmul.mubr.f32.gmra.mxu0 %v114
  %v669 = vpop.f32.mrf.mxu0
  %v670 = vadd.f32 0.0, %v669
  %v671 = vpop.f32.mrf.mxu0
  %v672 = vadd.f32 0.0, %v671
  %673 = vmatprep.mubr.f32.mxu0 0.0
  %674 = vmatmul.mubr.f32.gmra.mxu0 %v115
  %v675 = vpop.f32.mrf.mxu0
  %v676 = vadd.f32 0.0, %v675
  %v677 = vpop.f32.mrf.mxu0
  %v678 = vadd.f32 0.0, %v677
  %679 = vmatprep.mubr.f32.mxu0 0.0
  %680 = vmatmul.mubr.f32.gmra.mxu0 %v116
  %v681 = vpop.f32.mrf.mxu0
  %v682 = vadd.f32 0.0, %v681
  %v683 = vpop.f32.mrf.mxu0
  %v684 = vadd.f32 0.0, %v683
  %685 = vmatprep.mubr.f32.mxu0 0.0
  %686 = vmatmul.mubr.f32.gmra.mxu0 %v117
  %v687 = vpop.f32.mrf.mxu0
  %v688 = vadd.f32 0.0, %v687
  %v689 = vpop.f32.mrf.mxu0
  %v690 = vadd.f32 0.0, %v689
  %691 = vmatprep.mubr.f32.mxu0 0.0
  %692 = vmatmul.mubr.f32.gmra.mxu0 %v118
  %v693 = vpop.f32.mrf.mxu0
  %v694 = vadd.f32 0.0, %v693
  %v695 = vpop.f32.mrf.mxu0
  %v696 = vadd.f32 0.0, %v695
  %697 = vdwg.mxu0
  %698 = vmatprep.subr.mxu0 %v86
  %699 = vmatpush1.msra.mxu0 %v85
  %700 = vmatprep.subr.mxu0 %v84
  %701 = vmatpush1.msra.mxu0 %v83
  %702 = vmatprep.subr.mxu0 %v82
  %703 = vmatpush1.msra.mxu0 %v81
  %704 = vmatprep.subr.mxu0 %v80
  %705 = vmatpush1.msra.mxu0 %v79
  %706 = vmatprep.subr.mxu0 %v78
  %707 = vmatpush1.msra.mxu0 %v77
  %708 = vmatprep.subr.mxu0 %v76
  %709 = vmatpush1.msra.mxu0 %v75
  %710 = vmatprep.subr.mxu0 %v74
  %711 = vmatpush1.msra.mxu0 %v73
  %712 = vmatprep.subr.mxu0 %v72
  %713 = vmatpush1.msra.mxu0 %v71
  %714 = vmatprep.subr.mxu0 %v70
  %715 = vmatpush1.msra.mxu0 %v69
  %716 = vmatprep.subr.mxu0 %v68
  %717 = vmatpush1.msra.mxu0 %v67
  %718 = vmatprep.subr.mxu0 %v66
  %719 = vmatpush1.msra.mxu0 %v65
  %720 = vmatprep.subr.mxu0 %v64
  %721 = vmatpush1.msra.mxu0 %v63
  %722 = vmatprep.subr.mxu0 %v62
  %723 = vmatpush1.msra.mxu0 %v61
  %724 = vmatprep.subr.mxu0 %v60
  %725 = vmatpush1.msra.mxu0 %v59
  %726 = vmatprep.subr.mxu0 %v58
  %727 = vmatpush1.msra.mxu0 %v57
  %728 = vmatprep.subr.mxu0 %v56
  %729 = vmatpush1.msra.mxu0 %v55
  %730 = vmatprep.subr.mxu0 0.0
  %731 = vmatpush2.msra.mxu0 0.0
  %732 = vmatprep.subr.mxu0 0.0
  %733 = vmatpush2.msra.mxu0 0.0
  %734 = vmatprep.subr.mxu0 0.0
  %735 = vmatpush2.msra.mxu0 0.0
  %736 = vmatprep.subr.mxu0 0.0
  %737 = vmatpush2.msra.mxu0 0.0
  %738 = vmatprep.subr.mxu0 0.0
  %739 = vmatpush2.msra.mxu0 0.0
  %740 = vmatprep.subr.mxu0 0.0
  %741 = vmatpush2.msra.mxu0 0.0
  %742 = vmatprep.subr.mxu0 0.0
  %743 = vmatpush2.msra.mxu0 0.0
  %744 = vmatprep.subr.mxu0 0.0
  %745 = vmatpush2.msra.mxu0 0.0
  %746 = vmatprep.subr.mxu0 0.0
  %747 = vmatpush2.msra.mxu0 0.0
  %748 = vmatprep.subr.mxu0 0.0
  %749 = vmatpush2.msra.mxu0 0.0
  %750 = vmatprep.subr.mxu0 0.0
  %751 = vmatpush2.msra.mxu0 0.0
  %752 = vmatprep.subr.mxu0 0.0
  %753 = vmatpush2.msra.mxu0 0.0
  %754 = vmatprep.subr.mxu0 0.0
  %755 = vmatpush2.msra.mxu0 0.0
  %756 = vmatprep.subr.mxu0 0.0
  %757 = vmatpush2.msra.mxu0 0.0
  %758 = vmatprep.subr.mxu0 0.0
  %759 = vmatpush2.msra.mxu0 0.0
  %760 = vmatprep.subr.mxu0 0.0
  %761 = vmatpush2.msra.mxu0 0.0
  %762 = vmatprep.mubr.f32.mxu0 0.0
  %763 = vmatmul.mubr.f32.gmra.mxu0 %v87
  %v764 = vpop.f32.mrf.mxu0
  %v765 = vadd.f32 %v604, %v764
  %v766 = vpop.f32.mrf.mxu0
  %v767 = vadd.f32 %v606, %v766
  %768 = vmatprep.mubr.f32.mxu0 0.0
  %769 = vmatmul.mubr.f32.gmra.mxu0 %v88
  %v770 = vpop.f32.mrf.mxu0
  %v771 = vadd.f32 %v610, %v770
  %v772 = vpop.f32.mrf.mxu0
  %v773 = vadd.f32 %v612, %v772
  %774 = vmatprep.mubr.f32.mxu0 0.0
  %775 = vmatmul.mubr.f32.gmra.mxu0 %v89
  %v776 = vpop.f32.mrf.mxu0
  %v777 = vadd.f32 %v616, %v776
  %v778 = vpop.f32.mrf.mxu0
  %v779 = vadd.f32 %v618, %v778
  %780 = vmatprep.mubr.f32.mxu0 0.0
  %781 = vmatmul.mubr.f32.gmra.mxu0 %v90
  %v782 = vpop.f32.mrf.mxu0
  %v783 = vadd.f32 %v622, %v782
  %v784 = vpop.f32.mrf.mxu0
  %v785 = vadd.f32 %v624, %v784
  %786 = vmatprep.mubr.f32.mxu0 0.0
  %787 = vmatmul.mubr.f32.gmra.mxu0 %v91
  %v788 = vpop.f32.mrf.mxu0
  %v789 = vadd.f32 %v628, %v788
  %v790 = vpop.f32.mrf.mxu0
  %v791 = vadd.f32 %v630, %v790
  %792 = vmatprep.mubr.f32.mxu0 0.0
  %793 = vmatmul.mubr.f32.gmra.mxu0 %v92
  %v794 = vpop.f32.mrf.mxu0
  %v795 = vadd.f32 %v634, %v794
  %v796 = vpop.f32.mrf.mxu0
  %v797 = vadd.f32 %v636, %v796
  %798 = vmatprep.mubr.f32.mxu0 0.0
  %799 = vmatmul.mubr.f32.gmra.mxu0 %v93
  %v800 = vpop.f32.mrf.mxu0
  %v801 = vadd.f32 %v640, %v800
  %v802 = vpop.f32.mrf.mxu0
  %v803 = vadd.f32 %v642, %v802
  %804 = vmatprep.mubr.f32.mxu0 0.0
  %805 = vmatmul.mubr.f32.gmra.mxu0 %v94
  %v806 = vpop.f32.mrf.mxu0
  %v807 = vadd.f32 %v646, %v806
  %v808 = vpop.f32.mrf.mxu0
  %v809 = vadd.f32 %v648, %v808
  %810 = vmatprep.mubr.f32.mxu0 0.0
  %811 = vmatmul.mubr.f32.gmra.mxu0 %v95
  %v812 = vpop.f32.mrf.mxu0
  %v813 = vadd.f32 %v652, %v812
  %v814 = vpop.f32.mrf.mxu0
  %v815 = vadd.f32 %v654, %v814
  %816 = vmatprep.mubr.f32.mxu0 0.0
  %817 = vmatmul.mubr.f32.gmra.mxu0 %v96
  %v818 = vpop.f32.mrf.mxu0
  %v819 = vadd.f32 %v658, %v818
  %v820 = vpop.f32.mrf.mxu0
  %v821 = vadd.f32 %v660, %v820
  %822 = vmatprep.mubr.f32.mxu0 0.0
  %823 = vmatmul.mubr.f32.gmra.mxu0 %v97
  %v824 = vpop.f32.mrf.mxu0
  %v825 = vadd.f32 %v664, %v824
  %v826 = vpop.f32.mrf.mxu0
  %v827 = vadd.f32 %v666, %v826
  %828 = vmatprep.mubr.f32.mxu0 0.0
  %829 = vmatmul.mubr.f32.gmra.mxu0 %v98
  %v830 = vpop.f32.mrf.mxu0
  %v831 = vadd.f32 %v670, %v830
  %v832 = vpop.f32.mrf.mxu0
  %v833 = vadd.f32 %v672, %v832
  %834 = vmatprep.mubr.f32.mxu0 0.0
  %835 = vmatmul.mubr.f32.gmra.mxu0 %v99
  %v836 = vpop.f32.mrf.mxu0
  %v837 = vadd.f32 %v676, %v836
  %v838 = vpop.f32.mrf.mxu0
  %v839 = vadd.f32 %v678, %v838
  %840 = vmatprep.mubr.f32.mxu0 0.0
  %841 = vmatmul.mubr.f32.gmra.mxu0 %v100
  %v842 = vpop.f32.mrf.mxu0
  %v843 = vadd.f32 %v682, %v842
  %v844 = vpop.f32.mrf.mxu0
  %v845 = vadd.f32 %v684, %v844
  %846 = vmatprep.mubr.f32.mxu0 0.0
  %847 = vmatmul.mubr.f32.gmra.mxu0 %v101
  %v848 = vpop.f32.mrf.mxu0
  %v849 = vadd.f32 %v688, %v848
  %v850 = vpop.f32.mrf.mxu0
  %v851 = vadd.f32 %v690, %v850
  %852 = vmatprep.mubr.f32.mxu0 0.0
  %853 = vmatmul.mubr.f32.gmra.mxu0 %v102
  %v854 = vpop.f32.mrf.mxu0
  %v855 = vadd.f32 %v694, %v854
  %v856 = vpop.f32.mrf.mxu0
  %v857 = vadd.f32 %v696, %v856
  %858 = vdwg.mxu0
  %v859 = vmul.f32 %v505, %v119
  %v860 = vmul.f32 %v506, %v120
  %v861 = vmul.f32 %v507, %v121
  %v862 = vmul.f32 %v508, %v122
  %v863 = vmul.f32 %v509, %v123
  %v864 = vmul.f32 %v510, %v124
  %v865 = vmul.f32 %v511, %v125
  %v866 = vmul.f32 %v512, %v126
  %v867 = vmul.f32 %v513, %v127
  %v868 = vmul.f32 %v514, %v128
  %v869 = vmul.f32 %v515, %v129
  %v870 = vmul.f32 %v516, %v130
  %v871 = vmul.f32 %v517, %v131
  %v872 = vmul.f32 %v518, %v132
  %v873 = vmul.f32 %v519, %v133
  %v874 = vmul.f32 %v520, %v134
  %v875 = vmul.f32 %v521, %v135
  %v876 = vmul.f32 %v522, %v136
  %v877 = vmul.f32 %v523, %v137
  %v878 = vmul.f32 %v524, %v138
  %v879 = vmul.f32 %v525, %v139
  %v880 = vmul.f32 %v526, %v140
  %v881 = vmul.f32 %v527, %v141
  %v882 = vmul.f32 %v528, %v142
  %v883 = vmul.f32 %v529, %v143
  %v884 = vmul.f32 %v530, %v144
  %v885 = vmul.f32 %v531, %v145
  %v886 = vmul.f32 %v532, %v146
  %v887 = vmul.f32 %v533, %v147
  %v888 = vmul.f32 %v534, %v148
  %v889 = vmul.f32 %v535, %v149
  %v890 = vmul.f32 %v536, %v150
  %v891 = vmul.f32 %v765, %v151
  %v892 = vmul.f32 %v767, %v152
  %v893 = vmul.f32 %v771, %v153
  %v894 = vmul.f32 %v773, %v154
  %v895 = vmul.f32 %v777, %v155
  %v896 = vmul.f32 %v779, %v156
  %v897 = vmul.f32 %v783, %v157
  %v898 = vmul.f32 %v785, %v158
  %v899 = vmul.f32 %v789, %v159
  %v900 = vmul.f32 %v791, %v160
  %v901 = vmul.f32 %v795, %v161
  %v902 = vmul.f32 %v797, %v162
  %v903 = vmul.f32 %v801, %v163
  %v904 = vmul.f32 %v803, %v164
  %v905 = vmul.f32 %v807, %v165
  %v906 = vmul.f32 %v809, %v166
  %v907 = vmul.f32 %v813, %v167
  %v908 = vmul.f32 %v815, %v168
  %v909 = vmul.f32 %v819, %v169
  %v910 = vmul.f32 %v821, %v170
  %v911 = vmul.f32 %v825, %v171
  %v912 = vmul.f32 %v827, %v172
  %v913 = vmul.f32 %v831, %v173
  %v914 = vmul.f32 %v833, %v174
  %v915 = vmul.f32 %v837, %v175
  %v916 = vmul.f32 %v839, %v176
  %v917 = vmul.f32 %v843, %v177
  %v918 = vmul.f32 %v845, %v178
  %v919 = vmul.f32 %v849, %v179
  %v920 = vmul.f32 %v851, %v180
  %v921 = vmul.f32 %v855, %v181
  %v922 = vmul.f32 %v857, %v182
  %v923 = vsub.f32 %v859, %v891
  %v924 = vsub.f32 %v860, %v892
  %v925 = vsub.f32 %v861, %v893
  %v926 = vsub.f32 %v862, %v894
  %v927 = vsub.f32 %v863, %v895
  %v928 = vsub.f32 %v864, %v896
  %v929 = vsub.f32 %v865, %v897
  %v930 = vsub.f32 %v866, %v898
  %v931 = vsub.f32 %v867, %v899
  %v932 = vsub.f32 %v868, %v900
  %v933 = vsub.f32 %v869, %v901
  %v934 = vsub.f32 %v870, %v902
  %v935 = vsub.f32 %v871, %v903
  %v936 = vsub.f32 %v872, %v904
  %v937 = vsub.f32 %v873, %v905
  %v938 = vsub.f32 %v874, %v906
  %v939 = vsub.f32 %v875, %v907
  %v940 = vsub.f32 %v876, %v908
  %v941 = vsub.f32 %v877, %v909
  %v942 = vsub.f32 %v878, %v910
  %v943 = vsub.f32 %v879, %v911
  %v944 = vsub.f32 %v880, %v912
  %v945 = vsub.f32 %v881, %v913
  %v946 = vsub.f32 %v882, %v914
  %v947 = vsub.f32 %v883, %v915
  %v948 = vsub.f32 %v884, %v916
  %v949 = vsub.f32 %v885, %v917
  %v950 = vsub.f32 %v886, %v918
  %v951 = vsub.f32 %v887, %v919
  %v952 = vsub.f32 %v888, %v920
  %v953 = vsub.f32 %v889, %v921
  %v954 = vsub.f32 %v890, %v922
  %v955 = vmul.f32 %v505, %v151
  %v956 = vmul.f32 %v506, %v152
  %v957 = vmul.f32 %v507, %v153
  %v958 = vmul.f32 %v508, %v154
  %v959 = vmul.f32 %v509, %v155
  %v960 = vmul.f32 %v510, %v156
  %v961 = vmul.f32 %v511, %v157
  %v962 = vmul.f32 %v512, %v158
  %v963 = vmul.f32 %v513, %v159
  %v964 = vmul.f32 %v514, %v160
  %v965 = vmul.f32 %v515, %v161
  %v966 = vmul.f32 %v516, %v162
  %v967 = vmul.f32 %v517, %v163
  %v968 = vmul.f32 %v518, %v164
  %v969 = vmul.f32 %v519, %v165
  %v970 = vmul.f32 %v520, %v166
  %v971 = vmul.f32 %v521, %v167
  %v972 = vmul.f32 %v522, %v168
  %v973 = vmul.f32 %v523, %v169
  %v974 = vmul.f32 %v524, %v170
  %v975 = vmul.f32 %v525, %v171
  %v976 = vmul.f32 %v526, %v172
  %v977 = vmul.f32 %v527, %v173
  %v978 = vmul.f32 %v528, %v174
  %v979 = vmul.f32 %v529, %v175
  %v980 = vmul.f32 %v530, %v176
  %v981 = vmul.f32 %v531, %v177
  %v982 = vmul.f32 %v532, %v178
  %v983 = vmul.f32 %v533, %v179
  %v984 = vmul.f32 %v534, %v180
  %v985 = vmul.f32 %v535, %v181
  %v986 = vmul.f32 %v536, %v182
  %v987 = vmul.f32 %v765, %v119
  %v988 = vmul.f32 %v767, %v120
  %v989 = vmul.f32 %v771, %v121
  %v990 = vmul.f32 %v773, %v122
  %v991 = vmul.f32 %v777, %v123
  %v992 = vmul.f32 %v779, %v124
  %v993 = vmul.f32 %v783, %v125
  %v994 = vmul.f32 %v785, %v126
  %v995 = vmul.f32 %v789, %v127
  %v996 = vmul.f32 %v791, %v128
  %v997 = vmul.f32 %v795, %v129
  %v998 = vmul.f32 %v797, %v130
  %v999 = vmul.f32 %v801, %v131
  %v1000 = vmul.f32 %v803, %v132
  %v1001 = vmul.f32 %v807, %v133
  %v1002 = vmul.f32 %v809, %v134
  %v1003 = vmul.f32 %v813, %v135
  %v1004 = vmul.f32 %v815, %v136
  %v1005 = vmul.f32 %v819, %v137
  %v1006 = vmul.f32 %v821, %v138
  %v1007 = vmul.f32 %v825, %v139
  %v1008 = vmul.f32 %v827, %v140
  %v1009 = vmul.f32 %v831, %v141
  %v1010 = vmul.f32 %v833, %v142
  %v1011 = vmul.f32 %v837, %v143
  %v1012 = vmul.f32 %v839, %v144
  %v1013 = vmul.f32 %v843, %v145
  %v1014 = vmul.f32 %v845, %v146
  %v1015 = vmul.f32 %v849, %v147
  %v1016 = vmul.f32 %v851, %v148
  %v1017 = vmul.f32 %v855, %v149
  %v1018 = vmul.f32 %v857, %v150
  %v1019 = vadd.f32 %v955, %v987
  %v1020 = vadd.f32 %v956, %v988
  %v1021 = vadd.f32 %v957, %v989
  %v1022 = vadd.f32 %v958, %v990
  %v1023 = vadd.f32 %v959, %v991
  %v1024 = vadd.f32 %v960, %v992
  %v1025 = vadd.f32 %v961, %v993
  %v1026 = vadd.f32 %v962, %v994
  %v1027 = vadd.f32 %v963, %v995
  %v1028 = vadd.f32 %v964, %v996
  %v1029 = vadd.f32 %v965, %v997
  %v1030 = vadd.f32 %v966, %v998
  %v1031 = vadd.f32 %v967, %v999
  %v1032 = vadd.f32 %v968, %v1000
  %v1033 = vadd.f32 %v969, %v1001
  %v1034 = vadd.f32 %v970, %v1002
  %v1035 = vadd.f32 %v971, %v1003
  %v1036 = vadd.f32 %v972, %v1004
  %v1037 = vadd.f32 %v973, %v1005
  %v1038 = vadd.f32 %v974, %v1006
  %v1039 = vadd.f32 %v975, %v1007
  %v1040 = vadd.f32 %v976, %v1008
  %v1041 = vadd.f32 %v977, %v1009
  %v1042 = vadd.f32 %v978, %v1010
  %v1043 = vadd.f32 %v979, %v1011
  %v1044 = vadd.f32 %v980, %v1012
  %v1045 = vadd.f32 %v981, %v1013
  %v1046 = vadd.f32 %v982, %v1014
  %v1047 = vadd.f32 %v983, %v1015
  %v1048 = vadd.f32 %v984, %v1016
  %v1049 = vadd.f32 %v985, %v1017
  %v1050 = vadd.f32 %v986, %v1018
  %1051 = vmatprep.subr.mxu0 0.0
  %1052 = vmatpush1.msra.mxu0 %v102
  %1053 = vmatprep.subr.mxu0 0.0
  %1054 = vmatpush1.msra.mxu0 %v101
  %1055 = vmatprep.subr.mxu0 0.0
  %1056 = vmatpush1.msra.mxu0 %v100
  %1057 = vmatprep.subr.mxu0 0.0
  %1058 = vmatpush1.msra.mxu0 %v99
  %1059 = vmatprep.subr.mxu0 0.0
  %1060 = vmatpush1.msra.mxu0 %v98
  %1061 = vmatprep.subr.mxu0 0.0
  %1062 = vmatpush1.msra.mxu0 %v97
  %1063 = vmatprep.subr.mxu0 0.0
  %1064 = vmatpush1.msra.mxu0 %v96
  %1065 = vmatprep.subr.mxu0 0.0
  %1066 = vmatpush1.msra.mxu0 %v95
  %1067 = vmatprep.subr.mxu0 0.0
  %1068 = vmatpush1.msra.mxu0 %v94
  %1069 = vmatprep.subr.mxu0 0.0
  %1070 = vmatpush1.msra.mxu0 %v93
  %1071 = vmatprep.subr.mxu0 0.0
  %1072 = vmatpush1.msra.mxu0 %v92
  %1073 = vmatprep.subr.mxu0 0.0
  %1074 = vmatpush1.msra.mxu0 %v91
  %1075 = vmatprep.subr.mxu0 0.0
  %1076 = vmatpush1.msra.mxu0 %v90
  %1077 = vmatprep.subr.mxu0 0.0
  %1078 = vmatpush1.msra.mxu0 %v89
  %1079 = vmatprep.subr.mxu0 0.0
  %1080 = vmatpush1.msra.mxu0 %v88
  %1081 = vmatprep.subr.mxu0 0.0
  %1082 = vmatpush1.msra.mxu0 %v87
  %1083 = vmatprep.subr.mxu0 0.0
  %1084 = vmatpush2.msra.mxu0 0.0
  %1085 = vmatprep.subr.mxu0 0.0
  %1086 = vmatpush2.msra.mxu0 0.0
  %1087 = vmatprep.subr.mxu0 0.0
  %1088 = vmatpush2.msra.mxu0 0.0
  %1089 = vmatprep.subr.mxu0 0.0
  %1090 = vmatpush2.msra.mxu0 0.0
  %1091 = vmatprep.subr.mxu0 0.0
  %1092 = vmatpush2.msra.mxu0 0.0
  %1093 = vmatprep.subr.mxu0 0.0
  %1094 = vmatpush2.msra.mxu0 0.0
  %1095 = vmatprep.subr.mxu0 0.0
  %1096 = vmatpush2.msra.mxu0 0.0
  %1097 = vmatprep.subr.mxu0 0.0
  %1098 = vmatpush2.msra.mxu0 0.0
  %1099 = vmatprep.subr.mxu0 0.0
  %1100 = vmatpush2.msra.mxu0 0.0
  %1101 = vmatprep.subr.mxu0 0.0
  %1102 = vmatpush2.msra.mxu0 0.0
  %1103 = vmatprep.subr.mxu0 0.0
  %1104 = vmatpush2.msra.mxu0 0.0
  %1105 = vmatprep.subr.mxu0 0.0
  %1106 = vmatpush2.msra.mxu0 0.0
  %1107 = vmatprep.subr.mxu0 0.0
  %1108 = vmatpush2.msra.mxu0 0.0
  %1109 = vmatprep.subr.mxu0 0.0
  %1110 = vmatpush2.msra.mxu0 0.0
  %1111 = vmatprep.subr.mxu0 0.0
  %1112 = vmatpush2.msra.mxu0 0.0
  %1113 = vmatprep.subr.mxu0 0.0
  %1114 = vmatpush2.msra.mxu0 0.0
  %1115 = vmatprep.mubr.f32.mxu0 0.0
  %1116 = vmatmul.mubr.f32.gmra.mxu0 %v923
  %v1117 = vpop.f32.mrf.mxu0
  %v1118 = vadd.f32 0.0, %v1117
  %v1119 = vpop.f32.mrf.mxu0
  %1120 = vmatprep.mubr.f32.mxu0 0.0
  %1121 = vmatmul.mubr.f32.gmra.mxu0 %v925
  %v1122 = vpop.f32.mrf.mxu0
  %v1123 = vadd.f32 0.0, %v1122
  %v1124 = vpop.f32.mrf.mxu0
  %1125 = vmatprep.mubr.f32.mxu0 0.0
  %1126 = vmatmul.mubr.f32.gmra.mxu0 %v927
  %v1127 = vpop.f32.mrf.mxu0
  %v1128 = vadd.f32 0.0, %v1127
  %v1129 = vpop.f32.mrf.mxu0
  %1130 = vmatprep.mubr.f32.mxu0 0.0
  %1131 = vmatmul.mubr.f32.gmra.mxu0 %v929
  %v1132 = vpop.f32.mrf.mxu0
  %v1133 = vadd.f32 0.0, %v1132
  %v1134 = vpop.f32.mrf.mxu0
  %1135 = vmatprep.mubr.f32.mxu0 0.0
  %1136 = vmatmul.mubr.f32.gmra.mxu0 %v931
  %v1137 = vpop.f32.mrf.mxu0
  %v1138 = vadd.f32 0.0, %v1137
  %v1139 = vpop.f32.mrf.mxu0
  %1140 = vmatprep.mubr.f32.mxu0 0.0
  %1141 = vmatmul.mubr.f32.gmra.mxu0 %v933
  %v1142 = vpop.f32.mrf.mxu0
  %v1143 = vadd.f32 0.0, %v1142
  %v1144 = vpop.f32.mrf.mxu0
  %1145 = vmatprep.mubr.f32.mxu0 0.0
  %1146 = vmatmul.mubr.f32.gmra.mxu0 %v935
  %v1147 = vpop.f32.mrf.mxu0
  %v1148 = vadd.f32 0.0, %v1147
  %v1149 = vpop.f32.mrf.mxu0
  %1150 = vmatprep.mubr.f32.mxu0 0.0
  %1151 = vmatmul.mubr.f32.gmra.mxu0 %v937
  %v1152 = vpop.f32.mrf.mxu0
  %v1153 = vadd.f32 0.0, %v1152
  %v1154 = vpop.f32.mrf.mxu0
  %1155 = vmatprep.mubr.f32.mxu0 0.0
  %1156 = vmatmul.mubr.f32.gmra.mxu0 %v939
  %v1157 = vpop.f32.mrf.mxu0
  %v1158 = vadd.f32 0.0, %v1157
  %v1159 = vpop.f32.mrf.mxu0
  %1160 = vmatprep.mubr.f32.mxu0 0.0
  %1161 = vmatmul.mubr.f32.gmra.mxu0 %v941
  %v1162 = vpop.f32.mrf.mxu0
  %v1163 = vadd.f32 0.0, %v1162
  %v1164 = vpop.f32.mrf.mxu0
  %1165 = vmatprep.mubr.f32.mxu0 0.0
  %1166 = vmatmul.mubr.f32.gmra.mxu0 %v943
  %v1167 = vpop.f32.mrf.mxu0
  %v1168 = vadd.f32 0.0, %v1167
  %v1169 = vpop.f32.mrf.mxu0
  %1170 = vmatprep.mubr.f32.mxu0 0.0
  %1171 = vmatmul.mubr.f32.gmra.mxu0 %v945
  %v1172 = vpop.f32.mrf.mxu0
  %v1173 = vadd.f32 0.0, %v1172
  %v1174 = vpop.f32.mrf.mxu0
  %1175 = vmatprep.mubr.f32.mxu0 0.0
  %1176 = vmatmul.mubr.f32.gmra.mxu0 %v947
  %v1177 = vpop.f32.mrf.mxu0
  %v1178 = vadd.f32 0.0, %v1177
  %v1179 = vpop.f32.mrf.mxu0
  %1180 = vmatprep.mubr.f32.mxu0 0.0
  %1181 = vmatmul.mubr.f32.gmra.mxu0 %v949
  %v1182 = vpop.f32.mrf.mxu0
  %v1183 = vadd.f32 0.0, %v1182
  %v1184 = vpop.f32.mrf.mxu0
  %1185 = vmatprep.mubr.f32.mxu0 0.0
  %1186 = vmatmul.mubr.f32.gmra.mxu0 %v951
  %v1187 = vpop.f32.mrf.mxu0
  %v1188 = vadd.f32 0.0, %v1187
  %v1189 = vpop.f32.mrf.mxu0
  %1190 = vmatprep.mubr.f32.mxu0 0.0
  %1191 = vmatmul.mubr.f32.gmra.mxu0 %v953
  %v1192 = vpop.f32.mrf.mxu0
  %v1193 = vadd.f32 0.0, %v1192
  %v1194 = vpop.f32.mrf.mxu0
  %1195 = vdwg.mxu0
  %1196 = vmatprep.subr.mxu0 0.0
  %1197 = vmatpush1.msra.mxu0 %v118
  %1198 = vmatprep.subr.mxu0 0.0
  %1199 = vmatpush1.msra.mxu0 %v117
  %1200 = vmatprep.subr.mxu0 0.0
  %1201 = vmatpush1.msra.mxu0 %v116
  %1202 = vmatprep.subr.mxu0 0.0
  %1203 = vmatpush1.msra.mxu0 %v115
  %1204 = vmatprep.subr.mxu0 0.0
  %1205 = vmatpush1.msra.mxu0 %v114
  %1206 = vmatprep.subr.mxu0 0.0
  %1207 = vmatpush1.msra.mxu0 %v113
  %1208 = vmatprep.subr.mxu0 0.0
  %1209 = vmatpush1.msra.mxu0 %v112
  %1210 = vmatprep.subr.mxu0 0.0
  %1211 = vmatpush1.msra.mxu0 %v111
  %1212 = vmatprep.subr.mxu0 0.0
  %1213 = vmatpush1.msra.mxu0 %v110
  %1214 = vmatprep.subr.mxu0 0.0
  %1215 = vmatpush1.msra.mxu0 %v109
  %1216 = vmatprep.subr.mxu0 0.0
  %1217 = vmatpush1.msra.mxu0 %v108
  %1218 = vmatprep.subr.mxu0 0.0
  %1219 = vmatpush1.msra.mxu0 %v107
  %1220 = vmatprep.subr.mxu0 0.0
  %1221 = vmatpush1.msra.mxu0 %v106
  %1222 = vmatprep.subr.mxu0 0.0
  %1223 = vmatpush1.msra.mxu0 %v105
  %1224 = vmatprep.subr.mxu0 0.0
  %1225 = vmatpush1.msra.mxu0 %v104
  %1226 = vmatprep.subr.mxu0 0.0
  %1227 = vmatpush1.msra.mxu0 %v103
  %1228 = vmatprep.subr.mxu0 0.0
  %1229 = vmatpush2.msra.mxu0 0.0
  %1230 = vmatprep.subr.mxu0 0.0
  %1231 = vmatpush2.msra.mxu0 0.0
  %1232 = vmatprep.subr.mxu0 0.0
  %1233 = vmatpush2.msra.mxu0 0.0
  %1234 = vmatprep.subr.mxu0 0.0
  %1235 = vmatpush2.msra.mxu0 0.0
  %1236 = vmatprep.subr.mxu0 0.0
  %1237 = vmatpush2.msra.mxu0 0.0
  %1238 = vmatprep.subr.mxu0 0.0
  %1239 = vmatpush2.msra.mxu0 0.0
  %1240 = vmatprep.subr.mxu0 0.0
  %1241 = vmatpush2.msra.mxu0 0.0
  %1242 = vmatprep.subr.mxu0 0.0
  %1243 = vmatpush2.msra.mxu0 0.0
  %1244 = vmatprep.subr.mxu0 0.0
  %1245 = vmatpush2.msra.mxu0 0.0
  %1246 = vmatprep.subr.mxu0 0.0
  %1247 = vmatpush2.msra.mxu0 0.0
  %1248 = vmatprep.subr.mxu0 0.0
  %1249 = vmatpush2.msra.mxu0 0.0
  %1250 = vmatprep.subr.mxu0 0.0
  %1251 = vmatpush2.msra.mxu0 0.0
  %1252 = vmatprep.subr.mxu0 0.0
  %1253 = vmatpush2.msra.mxu0 0.0
  %1254 = vmatprep.subr.mxu0 0.0
  %1255 = vmatpush2.msra.mxu0 0.0
  %1256 = vmatprep.subr.mxu0 0.0
  %1257 = vmatpush2.msra.mxu0 0.0
  %1258 = vmatprep.subr.mxu0 0.0
  %1259 = vmatpush2.msra.mxu0 0.0
  %1260 = vmatprep.mubr.f32.mxu0 0.0
  %1261 = vmatmul.mubr.f32.gmra.mxu0 %v1019
  %v1262 = vpop.f32.mrf.mxu0
  %v1263 = vadd.f32 0.0, %v1262
  %v1264 = vpop.f32.mrf.mxu0
  %1265 = vmatprep.mubr.f32.mxu0 0.0
  %1266 = vmatmul.mubr.f32.gmra.mxu0 %v1021
  %v1267 = vpop.f32.mrf.mxu0
  %v1268 = vadd.f32 0.0, %v1267
  %v1269 = vpop.f32.mrf.mxu0
  %1270 = vmatprep.mubr.f32.mxu0 0.0
  %1271 = vmatmul.mubr.f32.gmra.mxu0 %v1023
  %v1272 = vpop.f32.mrf.mxu0
  %v1273 = vadd.f32 0.0, %v1272
  %v1274 = vpop.f32.mrf.mxu0
  %1275 = vmatprep.mubr.f32.mxu0 0.0
  %1276 = vmatmul.mubr.f32.gmra.mxu0 %v1025
  %v1277 = vpop.f32.mrf.mxu0
  %v1278 = vadd.f32 0.0, %v1277
  %v1279 = vpop.f32.mrf.mxu0
  %1280 = vmatprep.mubr.f32.mxu0 0.0
  %1281 = vmatmul.mubr.f32.gmra.mxu0 %v1027
  %v1282 = vpop.f32.mrf.mxu0
  %v1283 = vadd.f32 0.0, %v1282
  %v1284 = vpop.f32.mrf.mxu0
  %1285 = vmatprep.mubr.f32.mxu0 0.0
  %1286 = vmatmul.mubr.f32.gmra.mxu0 %v1029
  %v1287 = vpop.f32.mrf.mxu0
  %v1288 = vadd.f32 0.0, %v1287
  %v1289 = vpop.f32.mrf.mxu0
  %1290 = vmatprep.mubr.f32.mxu0 0.0
  %1291 = vmatmul.mubr.f32.gmra.mxu0 %v1031
  %v1292 = vpop.f32.mrf.mxu0
  %v1293 = vadd.f32 0.0, %v1292
  %v1294 = vpop.f32.mrf.mxu0
  %1295 = vmatprep.mubr.f32.mxu0 0.0
  %1296 = vmatmul.mubr.f32.gmra.mxu0 %v1033
  %v1297 = vpop.f32.mrf.mxu0
  %v1298 = vadd.f32 0.0, %v1297
  %v1299 = vpop.f32.mrf.mxu0
  %1300 = vmatprep.mubr.f32.mxu0 0.0
  %1301 = vmatmul.mubr.f32.gmra.mxu0 %v1035
  %v1302 = vpop.f32.mrf.mxu0
  %v1303 = vadd.f32 0.0, %v1302
  %v1304 = vpop.f32.mrf.mxu0
  %1305 = vmatprep.mubr.f32.mxu0 0.0
  %1306 = vmatmul.mubr.f32.gmra.mxu0 %v1037
  %v1307 = vpop.f32.mrf.mxu0
  %v1308 = vadd.f32 0.0, %v1307
  %v1309 = vpop.f32.mrf.mxu0
  %1310 = vmatprep.mubr.f32.mxu0 0.0
  %1311 = vmatmul.mubr.f32.gmra.mxu0 %v1039
  %v1312 = vpop.f32.mrf.mxu0
  %v1313 = vadd.f32 0.0, %v1312
  %v1314 = vpop.f32.mrf.mxu0
  %1315 = vmatprep.mubr.f32.mxu0 0.0
  %1316 = vmatmul.mubr.f32.gmra.mxu0 %v1041
  %v1317 = vpop.f32.mrf.mxu0
  %v1318 = vadd.f32 0.0, %v1317
  %v1319 = vpop.f32.mrf.mxu0
  %1320 = vmatprep.mubr.f32.mxu0 0.0
  %1321 = vmatmul.mubr.f32.gmra.mxu0 %v1043
  %v1322 = vpop.f32.mrf.mxu0
  %v1323 = vadd.f32 0.0, %v1322
  %v1324 = vpop.f32.mrf.mxu0
  %1325 = vmatprep.mubr.f32.mxu0 0.0
  %1326 = vmatmul.mubr.f32.gmra.mxu0 %v1045
  %v1327 = vpop.f32.mrf.mxu0
  %v1328 = vadd.f32 0.0, %v1327
  %v1329 = vpop.f32.mrf.mxu0
  %1330 = vmatprep.mubr.f32.mxu0 0.0
  %1331 = vmatmul.mubr.f32.gmra.mxu0 %v1047
  %v1332 = vpop.f32.mrf.mxu0
  %v1333 = vadd.f32 0.0, %v1332
  %v1334 = vpop.f32.mrf.mxu0
  %1335 = vmatprep.mubr.f32.mxu0 0.0
  %1336 = vmatmul.mubr.f32.gmra.mxu0 %v1049
  %v1337 = vpop.f32.mrf.mxu0
  %v1338 = vadd.f32 0.0, %v1337
  %v1339 = vpop.f32.mrf.mxu0
  %1340 = vdwg.mxu0
  %v1341 = vsub.f32 %v1118, %v1263
  %v1342 = vsub.f32 %v1123, %v1268
  %v1343 = vsub.f32 %v1128, %v1273
  %v1344 = vsub.f32 %v1133, %v1278
  %v1345 = vsub.f32 %v1138, %v1283
  %v1346 = vsub.f32 %v1143, %v1288
  %v1347 = vsub.f32 %v1148, %v1293
  %v1348 = vsub.f32 %v1153, %v1298
  %v1349 = vsub.f32 %v1158, %v1303
  %v1350 = vsub.f32 %v1163, %v1308
  %v1351 = vsub.f32 %v1168, %v1313
  %v1352 = vsub.f32 %v1173, %v1318
  %v1353 = vsub.f32 %v1178, %v1323
  %v1354 = vsub.f32 %v1183, %v1328
  %v1355 = vsub.f32 %v1188, %v1333
  %v1356 = vsub.f32 %v1193, %v1338
  %1357 = vxpose.xlu0.b32.start [1/16] %v1341, 128
  %1358 = vxpose.xlu0.b32.cont [2/16] %v1342, 128
  %1359 = vxpose.xlu0.b32.cont [3/16] %v1343, 128
  %1360 = vxpose.xlu0.b32.cont [4/16] %v1344, 128
  %1361 = vxpose.xlu0.b32.cont [5/16] %v1345, 128
  %1362 = vxpose.xlu0.b32.cont [6/16] %v1346, 128
  %1363 = vxpose.xlu0.b32.cont [7/16] %v1347, 128
  %1364 = vxpose.xlu0.b32.cont [8/16] %v1348, 128
  %1365 = vxpose.xlu0.b32.cont [9/16] %v1349, 128
  %1366 = vxpose.xlu0.b32.cont [10/16] %v1350, 128
  %1367 = vxpose.xlu0.b32.cont [11/16] %v1351, 128
  %1368 = vxpose.xlu0.b32.cont [12/16] %v1352, 128
  %1369 = vxpose.xlu0.b32.cont [13/16] %v1353, 128
  %1370 = vxpose.xlu0.b32.cont [14/16] %v1354, 128
  %1371 = vxpose.xlu0.b32.cont [15/16] %v1355, 128
  %1372 = vxpose.xlu0.b32.end [16/16] %v1356, 128
  %v1373 = vpop.trf.xlu0
  %v1374 = vpop.trf.xlu0
  %v1375 = vpop.trf.xlu0
  %v1376 = vpop.trf.xlu0
  %v1377 = vpop.trf.xlu0
  %v1378 = vpop.trf.xlu0
  %v1379 = vpop.trf.xlu0
  %v1380 = vpop.trf.xlu0
  %v1381 = vpop.trf.xlu0
  %v1382 = vpop.trf.xlu0
  %v1383 = vpop.trf.xlu0
  %v1384 = vpop.trf.xlu0
  %v1385 = vpop.trf.xlu0
  %v1386 = vpop.trf.xlu0
  %v1387 = vpop.trf.xlu0
  %v1388 = vpop.trf.xlu0
  %v1389 = vmul.f32 %v1373, 6.1035156e-05
  %v1390 = vmul.f32 %v1374, 6.1035156e-05
  %v1391 = vmul.f32 %v1375, 6.1035156e-05
  %v1392 = vmul.f32 %v1376, 6.1035156e-05
  %v1393 = vmul.f32 %v1377, 6.1035156e-05
  %v1394 = vmul.f32 %v1378, 6.1035156e-05
  %v1395 = vmul.f32 %v1379, 6.1035156e-05
  %v1396 = vmul.f32 %v1380, 6.1035156e-05
  %v1397 = vmul.f32 %v1381, 6.1035156e-05
  %v1398 = vmul.f32 %v1382, 6.1035156e-05
  %v1399 = vmul.f32 %v1383, 6.1035156e-05
  %v1400 = vmul.f32 %v1384, 6.1035156e-05
  %v1401 = vmul.f32 %v1385, 6.1035156e-05
  %v1402 = vmul.f32 %v1386, 6.1035156e-05
  %v1403 = vmul.f32 %v1387, 6.1035156e-05
  %v1404 = vmul.f32 %v1388, 6.1035156e-05
  %vm1405 = vcmp.gt.f32.partialorder %v1389, 0.0
  %vm1406 = vcmp.gt.f32.partialorder %v1390, 0.0
  %vm1407 = vcmp.gt.f32.partialorder %v1391, 0.0
  %vm1408 = vcmp.gt.f32.partialorder %v1392, 0.0
  %vm1409 = vcmp.gt.f32.partialorder %v1393, 0.0
  %vm1410 = vcmp.gt.f32.partialorder %v1394, 0.0
  %vm1411 = vcmp.gt.f32.partialorder %v1395, 0.0
  %vm1412 = vcmp.gt.f32.partialorder %v1396, 0.0
  %vm1413 = vcmp.gt.f32.partialorder %v1397, 0.0
  %vm1414 = vcmp.gt.f32.partialorder %v1398, 0.0
  %vm1415 = vcmp.gt.f32.partialorder %v1399, 0.0
  %vm1416 = vcmp.gt.f32.partialorder %v1400, 0.0
  %vm1417 = vcmp.gt.f32.partialorder %v1401, 0.0
  %vm1418 = vcmp.gt.f32.partialorder %v1402, 0.0
  %vm1419 = vcmp.gt.f32.partialorder %v1403, 0.0
  %vm1420 = vcmp.gt.f32.partialorder %v1404, 0.0
  %vm1421 = vcmp.lt.f32.partialorder %v1389, 0.0
  %vm1422 = vcmp.lt.f32.partialorder %v1390, 0.0
  %vm1423 = vcmp.lt.f32.partialorder %v1391, 0.0
  %vm1424 = vcmp.lt.f32.partialorder %v1392, 0.0
  %vm1425 = vcmp.lt.f32.partialorder %v1393, 0.0
  %vm1426 = vcmp.lt.f32.partialorder %v1394, 0.0
  %vm1427 = vcmp.lt.f32.partialorder %v1395, 0.0
  %vm1428 = vcmp.lt.f32.partialorder %v1396, 0.0
  %vm1429 = vcmp.lt.f32.partialorder %v1397, 0.0
  %vm1430 = vcmp.lt.f32.partialorder %v1398, 0.0
  %vm1431 = vcmp.lt.f32.partialorder %v1399, 0.0
  %vm1432 = vcmp.lt.f32.partialorder %v1400, 0.0
  %vm1433 = vcmp.lt.f32.partialorder %v1401, 0.0
  %vm1434 = vcmp.lt.f32.partialorder %v1402, 0.0
  %vm1435 = vcmp.lt.f32.partialorder %v1403, 0.0
  %vm1436 = vcmp.lt.f32.partialorder %v1404, 0.0
  %v1437 = vsel %vm1421, -1.0, 0.0
  %v1438 = vsel %vm1422, -1.0, 0.0
  %v1439 = vsel %vm1423, -1.0, 0.0
  %v1440 = vsel %vm1424, -1.0, 0.0
  %v1441 = vsel %vm1425, -1.0, 0.0
  %v1442 = vsel %vm1426, -1.0, 0.0
  %v1443 = vsel %vm1427, -1.0, 0.0
  %v1444 = vsel %vm1428, -1.0, 0.0
  %v1445 = vsel %vm1429, -1.0, 0.0
  %v1446 = vsel %vm1430, -1.0, 0.0
  %v1447 = vsel %vm1431, -1.0, 0.0
  %v1448 = vsel %vm1432, -1.0, 0.0
  %v1449 = vsel %vm1433, -1.0, 0.0
  %v1450 = vsel %vm1434, -1.0, 0.0
  %v1451 = vsel %vm1435, -1.0, 0.0
  %v1452 = vsel %vm1436, -1.0, 0.0
  %v1453 = vsel %vm1405, 1.0, %v1437
  %v1454 = vsel %vm1406, 1.0, %v1438
  %v1455 = vsel %vm1407, 1.0, %v1439
  %v1456 = vsel %vm1408, 1.0, %v1440
  %v1457 = vsel %vm1409, 1.0, %v1441
  %v1458 = vsel %vm1410, 1.0, %v1442
  %v1459 = vsel %vm1411, 1.0, %v1443
  %v1460 = vsel %vm1412, 1.0, %v1444
  %v1461 = vsel %vm1413, 1.0, %v1445
  %v1462 = vsel %vm1414, 1.0, %v1446
  %v1463 = vsel %vm1415, 1.0, %v1447
  %v1464 = vsel %vm1416, 1.0, %v1448
  %v1465 = vsel %vm1417, 1.0, %v1449
  %v1466 = vsel %vm1418, 1.0, %v1450
  %v1467 = vsel %vm1419, 1.0, %v1451
  %v1468 = vsel %vm1420, 1.0, %v1452
  %v1469 = vand.u32 2147483647, %v1389
  %v1470 = vand.u32 2147483647, %v1390
  %v1471 = vand.u32 2147483647, %v1391
  %v1472 = vand.u32 2147483647, %v1392
  %v1473 = vand.u32 2147483647, %v1393
  %v1474 = vand.u32 2147483647, %v1394
  %v1475 = vand.u32 2147483647, %v1395
  %v1476 = vand.u32 2147483647, %v1396
  %v1477 = vand.u32 2147483647, %v1397
  %v1478 = vand.u32 2147483647, %v1398
  %v1479 = vand.u32 2147483647, %v1399
  %v1480 = vand.u32 2147483647, %v1400
  %v1481 = vand.u32 2147483647, %v1401
  %v1482 = vand.u32 2147483647, %v1402
  %v1483 = vand.u32 2147483647, %v1403
  %v1484 = vand.u32 2147483647, %v1404
  %v1485 = vadd.f32 %v1469, 1e-08
  %v1486 = vadd.f32 %v1470, 1e-08
  %v1487 = vadd.f32 %v1471, 1e-08
  %v1488 = vadd.f32 %v1472, 1e-08
  %v1489 = vadd.f32 %v1473, 1e-08
  %v1490 = vadd.f32 %v1474, 1e-08
  %v1491 = vadd.f32 %v1475, 1e-08
  %v1492 = vadd.f32 %v1476, 1e-08
  %v1493 = vadd.f32 %v1477, 1e-08
  %v1494 = vadd.f32 %v1478, 1e-08
  %v1495 = vadd.f32 %v1479, 1e-08
  %v1496 = vadd.f32 %v1480, 1e-08
  %v1497 = vadd.f32 %v1481, 1e-08
  %v1498 = vadd.f32 %v1482, 1e-08
  %v1499 = vadd.f32 %v1483, 1e-08
  %v1500 = vadd.f32 %v1484, 1e-08
  %v1501 = vrsqrt.pop %v1485
  %v1502 = vmul.f32 %v1485, %v1501
  %vm1503 = vcmp.eq.f32.partialorder %v1485, inf
  %v1504 = vsel %vm1503, %v1485, %v1502
  %vm1505 = vcmp.eq.f32.partialorder %v1485, 0.0
  %v1506 = vand.u32 %v1485, 2147483648
  %v1507 = vsel %vm1505, %v1506, %v1504
  %v1508 = vrsqrt.pop %v1486
  %v1509 = vmul.f32 %v1486, %v1508
  %vm1510 = vcmp.eq.f32.partialorder %v1486, inf
  %v1511 = vsel %vm1510, %v1486, %v1509
  %vm1512 = vcmp.eq.f32.partialorder %v1486, 0.0
  %v1513 = vand.u32 %v1486, 2147483648
  %v1514 = vsel %vm1512, %v1513, %v1511
  %v1515 = vrsqrt.pop %v1487
  %v1516 = vmul.f32 %v1487, %v1515
  %vm1517 = vcmp.eq.f32.partialorder %v1487, inf
  %v1518 = vsel %vm1517, %v1487, %v1516
  %vm1519 = vcmp.eq.f32.partialorder %v1487, 0.0
  %v1520 = vand.u32 %v1487, 2147483648
  %v1521 = vsel %vm1519, %v1520, %v1518
  %v1522 = vrsqrt.pop %v1488
  %v1523 = vmul.f32 %v1488, %v1522
  %vm1524 = vcmp.eq.f32.partialorder %v1488, inf
  %v1525 = vsel %vm1524, %v1488, %v1523
  %vm1526 = vcmp.eq.f32.partialorder %v1488, 0.0
  %v1527 = vand.u32 %v1488, 2147483648
  %v1528 = vsel %vm1526, %v1527, %v1525
  %v1529 = vrsqrt.pop %v1489
  %v1530 = vmul.f32 %v1489, %v1529
  %vm1531 = vcmp.eq.f32.partialorder %v1489, inf
  %v1532 = vsel %vm1531, %v1489, %v1530
  %vm1533 = vcmp.eq.f32.partialorder %v1489, 0.0
  %v1534 = vand.u32 %v1489, 2147483648
  %v1535 = vsel %vm1533, %v1534, %v1532
  %v1536 = vrsqrt.pop %v1490
  %v1537 = vmul.f32 %v1490, %v1536
  %vm1538 = vcmp.eq.f32.partialorder %v1490, inf
  %v1539 = vsel %vm1538, %v1490, %v1537
  %vm1540 = vcmp.eq.f32.partialorder %v1490, 0.0
  %v1541 = vand.u32 %v1490, 2147483648
  %v1542 = vsel %vm1540, %v1541, %v1539
  %v1543 = vrsqrt.pop %v1491
  %v1544 = vmul.f32 %v1491, %v1543
  %vm1545 = vcmp.eq.f32.partialorder %v1491, inf
  %v1546 = vsel %vm1545, %v1491, %v1544
  %vm1547 = vcmp.eq.f32.partialorder %v1491, 0.0
  %v1548 = vand.u32 %v1491, 2147483648
  %v1549 = vsel %vm1547, %v1548, %v1546
  %v1550 = vrsqrt.pop %v1492
  %v1551 = vmul.f32 %v1492, %v1550
  %vm1552 = vcmp.eq.f32.partialorder %v1492, inf
  %v1553 = vsel %vm1552, %v1492, %v1551
  %vm1554 = vcmp.eq.f32.partialorder %v1492, 0.0
  %v1555 = vand.u32 %v1492, 2147483648
  %v1556 = vsel %vm1554, %v1555, %v1553
  %v1557 = vrsqrt.pop %v1493
  %v1558 = vmul.f32 %v1493, %v1557
  %vm1559 = vcmp.eq.f32.partialorder %v1493, inf
  %v1560 = vsel %vm1559, %v1493, %v1558
  %vm1561 = vcmp.eq.f32.partialorder %v1493, 0.0
  %v1562 = vand.u32 %v1493, 2147483648
  %v1563 = vsel %vm1561, %v1562, %v1560
  %v1564 = vrsqrt.pop %v1494
  %v1565 = vmul.f32 %v1494, %v1564
  %vm1566 = vcmp.eq.f32.partialorder %v1494, inf
  %v1567 = vsel %vm1566, %v1494, %v1565
  %vm1568 = vcmp.eq.f32.partialorder %v1494, 0.0
  %v1569 = vand.u32 %v1494, 2147483648
  %v1570 = vsel %vm1568, %v1569, %v1567
  %v1571 = vrsqrt.pop %v1495
  %v1572 = vmul.f32 %v1495, %v1571
  %vm1573 = vcmp.eq.f32.partialorder %v1495, inf
  %v1574 = vsel %vm1573, %v1495, %v1572
  %vm1575 = vcmp.eq.f32.partialorder %v1495, 0.0
  %v1576 = vand.u32 %v1495, 2147483648
  %v1577 = vsel %vm1575, %v1576, %v1574
  %v1578 = vrsqrt.pop %v1496
  %v1579 = vmul.f32 %v1496, %v1578
  %vm1580 = vcmp.eq.f32.partialorder %v1496, inf
  %v1581 = vsel %vm1580, %v1496, %v1579
  %vm1582 = vcmp.eq.f32.partialorder %v1496, 0.0
  %v1583 = vand.u32 %v1496, 2147483648
  %v1584 = vsel %vm1582, %v1583, %v1581
  %v1585 = vrsqrt.pop %v1497
  %v1586 = vmul.f32 %v1497, %v1585
  %vm1587 = vcmp.eq.f32.partialorder %v1497, inf
  %v1588 = vsel %vm1587, %v1497, %v1586
  %vm1589 = vcmp.eq.f32.partialorder %v1497, 0.0
  %v1590 = vand.u32 %v1497, 2147483648
  %v1591 = vsel %vm1589, %v1590, %v1588
  %v1592 = vrsqrt.pop %v1498
  %v1593 = vmul.f32 %v1498, %v1592
  %vm1594 = vcmp.eq.f32.partialorder %v1498, inf
  %v1595 = vsel %vm1594, %v1498, %v1593
  %vm1596 = vcmp.eq.f32.partialorder %v1498, 0.0
  %v1597 = vand.u32 %v1498, 2147483648
  %v1598 = vsel %vm1596, %v1597, %v1595
  %v1599 = vrsqrt.pop %v1499
  %v1600 = vmul.f32 %v1499, %v1599
  %vm1601 = vcmp.eq.f32.partialorder %v1499, inf
  %v1602 = vsel %vm1601, %v1499, %v1600
  %vm1603 = vcmp.eq.f32.partialorder %v1499, 0.0
  %v1604 = vand.u32 %v1499, 2147483648
  %v1605 = vsel %vm1603, %v1604, %v1602
  %v1606 = vrsqrt.pop %v1500
  %v1607 = vmul.f32 %v1500, %v1606
  %vm1608 = vcmp.eq.f32.partialorder %v1500, inf
  %v1609 = vsel %vm1608, %v1500, %v1607
  %vm1610 = vcmp.eq.f32.partialorder %v1500, 0.0
  %v1611 = vand.u32 %v1500, 2147483648
  %v1612 = vsel %vm1610, %v1611, %v1609
  %v1613 = vmul.f32 %v1453, %v1507
  %v1614 = vmul.f32 %v1454, %v1514
  %v1615 = vmul.f32 %v1455, %v1521
  %v1616 = vmul.f32 %v1456, %v1528
  %v1617 = vmul.f32 %v1457, %v1535
  %v1618 = vmul.f32 %v1458, %v1542
  %v1619 = vmul.f32 %v1459, %v1549
  %v1620 = vmul.f32 %v1460, %v1556
  %v1621 = vmul.f32 %v1461, %v1563
  %v1622 = vmul.f32 %v1462, %v1570
  %v1623 = vmul.f32 %v1463, %v1577
  %v1624 = vmul.f32 %v1464, %v1584
  %v1625 = vmul.f32 %v1465, %v1591
  %v1626 = vmul.f32 %v1466, %v1598
  %v1627 = vmul.f32 %v1467, %v1605
  %v1628 = vmul.f32 %v1468, %v1612
  %v1629 = vmul.f32 %v1613, %v1613
  %v1630 = vmul.f32 %v1614, %v1614
  %v1631 = vmul.f32 %v1615, %v1615
  %v1632 = vmul.f32 %v1616, %v1616
  %v1633 = vmul.f32 %v1617, %v1617
  %v1634 = vmul.f32 %v1618, %v1618
  %v1635 = vmul.f32 %v1619, %v1619
  %v1636 = vmul.f32 %v1620, %v1620
  %v1637 = vmul.f32 %v1621, %v1621
  %v1638 = vmul.f32 %v1622, %v1622
  %v1639 = vmul.f32 %v1623, %v1623
  %v1640 = vmul.f32 %v1624, %v1624
  %v1641 = vmul.f32 %v1625, %v1625
  %v1642 = vmul.f32 %v1626, %v1626
  %v1643 = vmul.f32 %v1627, %v1627
  %v1644 = vmul.f32 %v1628, %v1628
  %v1645 = vadd.f32 %v1629, %v1630
  %v1646 = vadd.f32 %v1645, %v1631
  %v1647 = vadd.f32 %v1646, %v1632
  %v1648 = vadd.f32 %v1647, %v1633
  %v1649 = vadd.f32 %v1648, %v1634
  %v1650 = vadd.f32 %v1649, %v1635
  %v1651 = vadd.f32 %v1650, %v1636
  %v1652 = vadd.f32 %v1651, %v1637
  %v1653 = vadd.f32 %v1652, %v1638
  %v1654 = vadd.f32 %v1653, %v1639
  %v1655 = vadd.f32 %v1654, %v1640
  %v1656 = vadd.f32 %v1655, %v1641
  %v1657 = vadd.f32 %v1656, %v1642
  %v1658 = vadd.f32 %v1657, %v1643
  %v1659 = vadd.f32 %v1658, %v1644
  %1660 = vadd.xlane.f32.xlu0 %v1659
  %v1661 = vpop.xlane.xlu0 %1660
  %v1662 = vrot.slane %v1661, 4
  %v1663 = vadd.f32 %v1661, %v1662
  %v1664 = vrot.slane %v1663, 2
  %v1665 = vadd.f32 %v1663, %v1664
  %v1666 = vrot.slane %v1665, 1
  %v1667 = vadd.f32 %v1665, %v1666
  %s1668 = vtos %v1667
  %v1669 = vstv %s1668
  %v1670 = vrsqrt.pop %v1669
  %v1671 = vmul.f32 %v1669, %v1670
  %vm1672 = vcmp.eq.f32.partialorder %v1669, inf
  %v1673 = vsel %vm1672, %v1669, %v1671
  %vm1674 = vcmp.eq.f32.partialorder %v1669, 0.0
  %v1675 = vand.u32 %v1669, 2147483648
  %v1676 = vsel %vm1674, %v1675, %v1673
  %s1677 = vtos %v1676
  %s1678 = smax.f32 %s1677, 1e-12
  %v1679 = vstv %s1678
  %v1680 = vrcp.pop %v1679
  %v1681 = vmul.f32 %v1613, %v1680
  %v1682 = vmul.f32 %v1614, %v1680
  %v1683 = vmul.f32 %v1615, %v1680
  %v1684 = vmul.f32 %v1616, %v1680
  %v1685 = vmul.f32 %v1617, %v1680
  %v1686 = vmul.f32 %v1618, %v1680
  %v1687 = vmul.f32 %v1619, %v1680
  %v1688 = vmul.f32 %v1620, %v1680
  %v1689 = vmul.f32 %v1621, %v1680
  %v1690 = vmul.f32 %v1622, %v1680
  %v1691 = vmul.f32 %v1623, %v1680
  %v1692 = vmul.f32 %v1624, %v1680
  %v1693 = vmul.f32 %v1625, %v1680
  %v1694 = vmul.f32 %v1626, %v1680
  %v1695 = vmul.f32 %v1627, %v1680
  %v1696 = vmul.f32 %v1628, %v1680
  %1697 = vst [vmem:[%s6] sm:$0xff] %v1681
  %1698 = vst [vmem:[%s6 + $0x8] sm:$0xff] %v1682
  %1699 = vst [vmem:[%s6 + $0x10] sm:$0xff] %v1683
  %1700 = vst [vmem:[%s6 + $0x18] sm:$0xff] %v1684
  %1701 = vst [vmem:[%s6 + $0x20] sm:$0xff] %v1685
  %1702 = vst [vmem:[%s6 + $0x28] sm:$0xff] %v1686
  %1703 = vst [vmem:[%s6 + $0x30] sm:$0xff] %v1687
  %1704 = vst [vmem:[%s6 + $0x38] sm:$0xff] %v1688
  %1705 = vst [vmem:[%s6 + $0x40] sm:$0xff] %v1689
  %1706 = vst [vmem:[%s6 + $0x48] sm:$0xff] %v1690
  %1707 = vst [vmem:[%s6 + $0x50] sm:$0xff] %v1691
  %1708 = vst [vmem:[%s6 + $0x58] sm:$0xff] %v1692
  %1709 = vst [vmem:[%s6 + $0x60] sm:$0xff] %v1693
  %1710 = vst [vmem:[%s6 + $0x68] sm:$0xff] %v1694
  %1711 = vst [vmem:[%s6 + $0x70] sm:$0xff] %v1695
  %1712 = vst [vmem:[%s6 + $0x78] sm:$0xff] %v1696
  %1713 = vmatprep.subr.mxu0 0.0
  %1714 = vmatpush1.msra.mxu0 %v102
  %1715 = vmatprep.subr.mxu0 0.0
  %1716 = vmatpush1.msra.mxu0 %v101
  %1717 = vmatprep.subr.mxu0 0.0
  %1718 = vmatpush1.msra.mxu0 %v100
  %1719 = vmatprep.subr.mxu0 0.0
  %1720 = vmatpush1.msra.mxu0 %v99
  %1721 = vmatprep.subr.mxu0 0.0
  %1722 = vmatpush1.msra.mxu0 %v98
  %1723 = vmatprep.subr.mxu0 0.0
  %1724 = vmatpush1.msra.mxu0 %v97
  %1725 = vmatprep.subr.mxu0 0.0
  %1726 = vmatpush1.msra.mxu0 %v96
  %1727 = vmatprep.subr.mxu0 0.0
  %1728 = vmatpush1.msra.mxu0 %v95
  %1729 = vmatprep.subr.mxu0 0.0
  %1730 = vmatpush1.msra.mxu0 %v94
  %1731 = vmatprep.subr.mxu0 0.0
  %1732 = vmatpush1.msra.mxu0 %v93
  %1733 = vmatprep.subr.mxu0 0.0
  %1734 = vmatpush1.msra.mxu0 %v92
  %1735 = vmatprep.subr.mxu0 0.0
  %1736 = vmatpush1.msra.mxu0 %v91
  %1737 = vmatprep.subr.mxu0 0.0
  %1738 = vmatpush1.msra.mxu0 %v90
  %1739 = vmatprep.subr.mxu0 0.0
  %1740 = vmatpush1.msra.mxu0 %v89
  %1741 = vmatprep.subr.mxu0 0.0
  %1742 = vmatpush1.msra.mxu0 %v88
  %1743 = vmatprep.subr.mxu0 0.0
  %1744 = vmatpush1.msra.mxu0 %v87
  %1745 = vmatprep.subr.mxu0 0.0
  %1746 = vmatpush2.msra.mxu0 0.0
  %1747 = vmatprep.subr.mxu0 0.0
  %1748 = vmatpush2.msra.mxu0 0.0
  %1749 = vmatprep.subr.mxu0 0.0
  %1750 = vmatpush2.msra.mxu0 0.0
  %1751 = vmatprep.subr.mxu0 0.0
  %1752 = vmatpush2.msra.mxu0 0.0
  %1753 = vmatprep.subr.mxu0 0.0
  %1754 = vmatpush2.msra.mxu0 0.0
  %1755 = vmatprep.subr.mxu0 0.0
  %1756 = vmatpush2.msra.mxu0 0.0
  %1757 = vmatprep.subr.mxu0 0.0
  %1758 = vmatpush2.msra.mxu0 0.0
  %1759 = vmatprep.subr.mxu0 0.0
  %1760 = vmatpush2.msra.mxu0 0.0
  %1761 = vmatprep.subr.mxu0 0.0
  %1762 = vmatpush2.msra.mxu0 0.0
  %1763 = vmatprep.subr.mxu0 0.0
  %1764 = vmatpush2.msra.mxu0 0.0
  %1765 = vmatprep.subr.mxu0 0.0
  %1766 = vmatpush2.msra.mxu0 0.0
  %1767 = vmatprep.subr.mxu0 0.0
  %1768 = vmatpush2.msra.mxu0 0.0
  %1769 = vmatprep.subr.mxu0 0.0
  %1770 = vmatpush2.msra.mxu0 0.0
  %1771 = vmatprep.subr.mxu0 0.0
  %1772 = vmatpush2.msra.mxu0 0.0
  %1773 = vmatprep.subr.mxu0 0.0
  %1774 = vmatpush2.msra.mxu0 0.0
  %1775 = vmatprep.subr.mxu0 0.0
  %1776 = vmatpush2.msra.mxu0 0.0
  %1777 = vmatprep.mubr.f32.mxu0 0.0
  %1778 = vmatmul.mubr.f32.gmra.mxu0 %v924
  %v1779 = vpop.f32.mrf.mxu0
  %v1780 = vadd.f32 0.0, %v1779
  %v1781 = vpop.f32.mrf.mxu0
  %1782 = vmatprep.mubr.f32.mxu0 0.0
  %1783 = vmatmul.mubr.f32.gmra.mxu0 %v926
  %v1784 = vpop.f32.mrf.mxu0
  %v1785 = vadd.f32 0.0, %v1784
  %v1786 = vpop.f32.mrf.mxu0
  %1787 = vmatprep.mubr.f32.mxu0 0.0
  %1788 = vmatmul.mubr.f32.gmra.mxu0 %v928
  %v1789 = vpop.f32.mrf.mxu0
  %v1790 = vadd.f32 0.0, %v1789
  %v1791 = vpop.f32.mrf.mxu0
  %1792 = vmatprep.mubr.f32.mxu0 0.0
  %1793 = vmatmul.mubr.f32.gmra.mxu0 %v930
  %v1794 = vpop.f32.mrf.mxu0
  %v1795 = vadd.f32 0.0, %v1794
  %v1796 = vpop.f32.mrf.mxu0
  %1797 = vmatprep.mubr.f32.mxu0 0.0
  %1798 = vmatmul.mubr.f32.gmra.mxu0 %v932
  %v1799 = vpop.f32.mrf.mxu0
  %v1800 = vadd.f32 0.0, %v1799
  %v1801 = vpop.f32.mrf.mxu0
  %1802 = vmatprep.mubr.f32.mxu0 0.0
  %1803 = vmatmul.mubr.f32.gmra.mxu0 %v934
  %v1804 = vpop.f32.mrf.mxu0
  %v1805 = vadd.f32 0.0, %v1804
  %v1806 = vpop.f32.mrf.mxu0
  %1807 = vmatprep.mubr.f32.mxu0 0.0
  %1808 = vmatmul.mubr.f32.gmra.mxu0 %v936
  %v1809 = vpop.f32.mrf.mxu0
  %v1810 = vadd.f32 0.0, %v1809
  %v1811 = vpop.f32.mrf.mxu0
  %1812 = vmatprep.mubr.f32.mxu0 0.0
  %1813 = vmatmul.mubr.f32.gmra.mxu0 %v938
  %v1814 = vpop.f32.mrf.mxu0
  %v1815 = vadd.f32 0.0, %v1814
  %v1816 = vpop.f32.mrf.mxu0
  %1817 = vmatprep.mubr.f32.mxu0 0.0
  %1818 = vmatmul.mubr.f32.gmra.mxu0 %v940
  %v1819 = vpop.f32.mrf.mxu0
  %v1820 = vadd.f32 0.0, %v1819
  %v1821 = vpop.f32.mrf.mxu0
  %1822 = vmatprep.mubr.f32.mxu0 0.0
  %1823 = vmatmul.mubr.f32.gmra.mxu0 %v942
  %v1824 = vpop.f32.mrf.mxu0
  %v1825 = vadd.f32 0.0, %v1824
  %v1826 = vpop.f32.mrf.mxu0
  %1827 = vmatprep.mubr.f32.mxu0 0.0
  %1828 = vmatmul.mubr.f32.gmra.mxu0 %v944
  %v1829 = vpop.f32.mrf.mxu0
  %v1830 = vadd.f32 0.0, %v1829
  %v1831 = vpop.f32.mrf.mxu0
  %1832 = vmatprep.mubr.f32.mxu0 0.0
  %1833 = vmatmul.mubr.f32.gmra.mxu0 %v946
  %v1834 = vpop.f32.mrf.mxu0
  %v1835 = vadd.f32 0.0, %v1834
  %v1836 = vpop.f32.mrf.mxu0
  %1837 = vmatprep.mubr.f32.mxu0 0.0
  %1838 = vmatmul.mubr.f32.gmra.mxu0 %v948
  %v1839 = vpop.f32.mrf.mxu0
  %v1840 = vadd.f32 0.0, %v1839
  %v1841 = vpop.f32.mrf.mxu0
  %1842 = vmatprep.mubr.f32.mxu0 0.0
  %1843 = vmatmul.mubr.f32.gmra.mxu0 %v950
  %v1844 = vpop.f32.mrf.mxu0
  %v1845 = vadd.f32 0.0, %v1844
  %v1846 = vpop.f32.mrf.mxu0
  %1847 = vmatprep.mubr.f32.mxu0 0.0
  %1848 = vmatmul.mubr.f32.gmra.mxu0 %v952
  %v1849 = vpop.f32.mrf.mxu0
  %v1850 = vadd.f32 0.0, %v1849
  %v1851 = vpop.f32.mrf.mxu0
  %1852 = vmatprep.mubr.f32.mxu0 0.0
  %1853 = vmatmul.mubr.f32.gmra.mxu0 %v954
  %v1854 = vpop.f32.mrf.mxu0
  %v1855 = vadd.f32 0.0, %v1854
  %v1856 = vpop.f32.mrf.mxu0
  %1857 = vdwg.mxu0
  %1858 = vmatprep.subr.mxu0 0.0
  %1859 = vmatpush1.msra.mxu0 %v118
  %1860 = vmatprep.subr.mxu0 0.0
  %1861 = vmatpush1.msra.mxu0 %v117
  %1862 = vmatprep.subr.mxu0 0.0
  %1863 = vmatpush1.msra.mxu0 %v116
  %1864 = vmatprep.subr.mxu0 0.0
  %1865 = vmatpush1.msra.mxu0 %v115
  %1866 = vmatprep.subr.mxu0 0.0
  %1867 = vmatpush1.msra.mxu0 %v114
  %1868 = vmatprep.subr.mxu0 0.0
  %1869 = vmatpush1.msra.mxu0 %v113
  %1870 = vmatprep.subr.mxu0 0.0
  %1871 = vmatpush1.msra.mxu0 %v112
  %1872 = vmatprep.subr.mxu0 0.0
  %1873 = vmatpush1.msra.mxu0 %v111
  %1874 = vmatprep.subr.mxu0 0.0
  %1875 = vmatpush1.msra.mxu0 %v110
  %1876 = vmatprep.subr.mxu0 0.0
  %1877 = vmatpush1.msra.mxu0 %v109
  %1878 = vmatprep.subr.mxu0 0.0
  %1879 = vmatpush1.msra.mxu0 %v108
  %1880 = vmatprep.subr.mxu0 0.0
  %1881 = vmatpush1.msra.mxu0 %v107
  %1882 = vmatprep.subr.mxu0 0.0
  %1883 = vmatpush1.msra.mxu0 %v106
  %1884 = vmatprep.subr.mxu0 0.0
  %1885 = vmatpush1.msra.mxu0 %v105
  %1886 = vmatprep.subr.mxu0 0.0
  %1887 = vmatpush1.msra.mxu0 %v104
  %1888 = vmatprep.subr.mxu0 0.0
  %1889 = vmatpush1.msra.mxu0 %v103
  %1890 = vmatprep.subr.mxu0 0.0
  %1891 = vmatpush2.msra.mxu0 0.0
  %1892 = vmatprep.subr.mxu0 0.0
  %1893 = vmatpush2.msra.mxu0 0.0
  %1894 = vmatprep.subr.mxu0 0.0
  %1895 = vmatpush2.msra.mxu0 0.0
  %1896 = vmatprep.subr.mxu0 0.0
  %1897 = vmatpush2.msra.mxu0 0.0
  %1898 = vmatprep.subr.mxu0 0.0
  %1899 = vmatpush2.msra.mxu0 0.0
  %1900 = vmatprep.subr.mxu0 0.0
  %1901 = vmatpush2.msra.mxu0 0.0
  %1902 = vmatprep.subr.mxu0 0.0
  %1903 = vmatpush2.msra.mxu0 0.0
  %1904 = vmatprep.subr.mxu0 0.0
  %1905 = vmatpush2.msra.mxu0 0.0
  %1906 = vmatprep.subr.mxu0 0.0
  %1907 = vmatpush2.msra.mxu0 0.0
  %1908 = vmatprep.subr.mxu0 0.0
  %1909 = vmatpush2.msra.mxu0 0.0
  %1910 = vmatprep.subr.mxu0 0.0
  %1911 = vmatpush2.msra.mxu0 0.0
  %1912 = vmatprep.subr.mxu0 0.0
  %1913 = vmatpush2.msra.mxu0 0.0
  %1914 = vmatprep.subr.mxu0 0.0
  %1915 = vmatpush2.msra.mxu0 0.0
  %1916 = vmatprep.subr.mxu0 0.0
  %1917 = vmatpush2.msra.mxu0 0.0
  %1918 = vmatprep.subr.mxu0 0.0
  %1919 = vmatpush2.msra.mxu0 0.0
  %1920 = vmatprep.subr.mxu0 0.0
  %1921 = vmatpush2.msra.mxu0 0.0
  %1922 = vmatprep.mubr.f32.mxu0 0.0
  %1923 = vmatmul.mubr.f32.gmra.mxu0 %v1020
  %v1924 = vpop.f32.mrf.mxu0
  %v1925 = vadd.f32 0.0, %v1924
  %v1926 = vpop.f32.mrf.mxu0
  %1927 = vmatprep.mubr.f32.mxu0 0.0
  %1928 = vmatmul.mubr.f32.gmra.mxu0 %v1022
  %v1929 = vpop.f32.mrf.mxu0
  %v1930 = vadd.f32 0.0, %v1929
  %v1931 = vpop.f32.mrf.mxu0
  %1932 = vmatprep.mubr.f32.mxu0 0.0
  %1933 = vmatmul.mubr.f32.gmra.mxu0 %v1024
  %v1934 = vpop.f32.mrf.mxu0
  %v1935 = vadd.f32 0.0, %v1934
  %v1936 = vpop.f32.mrf.mxu0
  %1937 = vmatprep.mubr.f32.mxu0 0.0
  %1938 = vmatmul.mubr.f32.gmra.mxu0 %v1026
  %v1939 = vpop.f32.mrf.mxu0
  %v1940 = vadd.f32 0.0, %v1939
  %v1941 = vpop.f32.mrf.mxu0
  %1942 = vmatprep.mubr.f32.mxu0 0.0
  %1943 = vmatmul.mubr.f32.gmra.mxu0 %v1028
  %v1944 = vpop.f32.mrf.mxu0
  %v1945 = vadd.f32 0.0, %v1944
  %v1946 = vpop.f32.mrf.mxu0
  %1947 = vmatprep.mubr.f32.mxu0 0.0
  %1948 = vmatmul.mubr.f32.gmra.mxu0 %v1030
  %v1949 = vpop.f32.mrf.mxu0
  %v1950 = vadd.f32 0.0, %v1949
  %v1951 = vpop.f32.mrf.mxu0
  %1952 = vmatprep.mubr.f32.mxu0 0.0
  %1953 = vmatmul.mubr.f32.gmra.mxu0 %v1032
  %v1954 = vpop.f32.mrf.mxu0
  %v1955 = vadd.f32 0.0, %v1954
  %v1956 = vpop.f32.mrf.mxu0
  %1957 = vmatprep.mubr.f32.mxu0 0.0
  %1958 = vmatmul.mubr.f32.gmra.mxu0 %v1034
  %v1959 = vpop.f32.mrf.mxu0
  %v1960 = vadd.f32 0.0, %v1959
  %v1961 = vpop.f32.mrf.mxu0
  %1962 = vmatprep.mubr.f32.mxu0 0.0
  %1963 = vmatmul.mubr.f32.gmra.mxu0 %v1036
  %v1964 = vpop.f32.mrf.mxu0
  %v1965 = vadd.f32 0.0, %v1964
  %v1966 = vpop.f32.mrf.mxu0
  %1967 = vmatprep.mubr.f32.mxu0 0.0
  %1968 = vmatmul.mubr.f32.gmra.mxu0 %v1038
  %v1969 = vpop.f32.mrf.mxu0
  %v1970 = vadd.f32 0.0, %v1969
  %v1971 = vpop.f32.mrf.mxu0
  %1972 = vmatprep.mubr.f32.mxu0 0.0
  %1973 = vmatmul.mubr.f32.gmra.mxu0 %v1040
  %v1974 = vpop.f32.mrf.mxu0
  %v1975 = vadd.f32 0.0, %v1974
  %v1976 = vpop.f32.mrf.mxu0
  %1977 = vmatprep.mubr.f32.mxu0 0.0
  %1978 = vmatmul.mubr.f32.gmra.mxu0 %v1042
  %v1979 = vpop.f32.mrf.mxu0
  %v1980 = vadd.f32 0.0, %v1979
  %v1981 = vpop.f32.mrf.mxu0
  %1982 = vmatprep.mubr.f32.mxu0 0.0
  %1983 = vmatmul.mubr.f32.gmra.mxu0 %v1044
  %v1984 = vpop.f32.mrf.mxu0
  %v1985 = vadd.f32 0.0, %v1984
  %v1986 = vpop.f32.mrf.mxu0
  %1987 = vmatprep.mubr.f32.mxu0 0.0
  %1988 = vmatmul.mubr.f32.gmra.mxu0 %v1046
  %v1989 = vpop.f32.mrf.mxu0
  %v1990 = vadd.f32 0.0, %v1989
  %v1991 = vpop.f32.mrf.mxu0
  %1992 = vmatprep.mubr.f32.mxu0 0.0
  %1993 = vmatmul.mubr.f32.gmra.mxu0 %v1048
  %v1994 = vpop.f32.mrf.mxu0
  %v1995 = vadd.f32 0.0, %v1994
  %v1996 = vpop.f32.mrf.mxu0
  %1997 = vmatprep.mubr.f32.mxu0 0.0
  %1998 = vmatmul.mubr.f32.gmra.mxu0 %v1050
  %v1999 = vpop.f32.mrf.mxu0
  %v2000 = vadd.f32 0.0, %v1999
  %v2001 = vpop.f32.mrf.mxu0
  %2002 = vdwg.mxu0
  %v2003 = vsub.f32 %v1780, %v1925
  %v2004 = vsub.f32 %v1785, %v1930
  %v2005 = vsub.f32 %v1790, %v1935
  %v2006 = vsub.f32 %v1795, %v1940
  %v2007 = vsub.f32 %v1800, %v1945
  %v2008 = vsub.f32 %v1805, %v1950
  %v2009 = vsub.f32 %v1810, %v1955
  %v2010 = vsub.f32 %v1815, %v1960
  %v2011 = vsub.f32 %v1820, %v1965
  %v2012 = vsub.f32 %v1825, %v1970
  %v2013 = vsub.f32 %v1830, %v1975
  %v2014 = vsub.f32 %v1835, %v1980
  %v2015 = vsub.f32 %v1840, %v1985
  %v2016 = vsub.f32 %v1845, %v1990
  %v2017 = vsub.f32 %v1850, %v1995
  %v2018 = vsub.f32 %v1855, %v2000
  %2019 = vxpose.xlu0.b32.start [1/16] %v2003, 128
  %2020 = vxpose.xlu0.b32.cont [2/16] %v2004, 128
  %2021 = vxpose.xlu0.b32.cont [3/16] %v2005, 128
  %2022 = vxpose.xlu0.b32.cont [4/16] %v2006, 128
  %2023 = vxpose.xlu0.b32.cont [5/16] %v2007, 128
  %2024 = vxpose.xlu0.b32.cont [6/16] %v2008, 128
  %2025 = vxpose.xlu0.b32.cont [7/16] %v2009, 128
  %2026 = vxpose.xlu0.b32.cont [8/16] %v2010, 128
  %2027 = vxpose.xlu0.b32.cont [9/16] %v2011, 128
  %2028 = vxpose.xlu0.b32.cont [10/16] %v2012, 128
  %2029 = vxpose.xlu0.b32.cont [11/16] %v2013, 128
  %2030 = vxpose.xlu0.b32.cont [12/16] %v2014, 128
  %2031 = vxpose.xlu0.b32.cont [13/16] %v2015, 128
  %2032 = vxpose.xlu0.b32.cont [14/16] %v2016, 128
  %2033 = vxpose.xlu0.b32.cont [15/16] %v2017, 128
  %2034 = vxpose.xlu0.b32.end [16/16] %v2018, 128
  %v2035 = vpop.trf.xlu0
  %v2036 = vpop.trf.xlu0
  %v2037 = vpop.trf.xlu0
  %v2038 = vpop.trf.xlu0
  %v2039 = vpop.trf.xlu0
  %v2040 = vpop.trf.xlu0
  %v2041 = vpop.trf.xlu0
  %v2042 = vpop.trf.xlu0
  %v2043 = vpop.trf.xlu0
  %v2044 = vpop.trf.xlu0
  %v2045 = vpop.trf.xlu0
  %v2046 = vpop.trf.xlu0
  %v2047 = vpop.trf.xlu0
  %v2048 = vpop.trf.xlu0
  %v2049 = vpop.trf.xlu0
  %v2050 = vpop.trf.xlu0
  %v2051 = vmul.f32 %v2035, 6.1035156e-05
  %v2052 = vmul.f32 %v2036, 6.1035156e-05
  %v2053 = vmul.f32 %v2037, 6.1035156e-05
  %v2054 = vmul.f32 %v2038, 6.1035156e-05
  %v2055 = vmul.f32 %v2039, 6.1035156e-05
  %v2056 = vmul.f32 %v2040, 6.1035156e-05
  %v2057 = vmul.f32 %v2041, 6.1035156e-05
  %v2058 = vmul.f32 %v2042, 6.1035156e-05
  %v2059 = vmul.f32 %v2043, 6.1035156e-05
  %v2060 = vmul.f32 %v2044, 6.1035156e-05
  %v2061 = vmul.f32 %v2045, 6.1035156e-05
  %v2062 = vmul.f32 %v2046, 6.1035156e-05
  %v2063 = vmul.f32 %v2047, 6.1035156e-05
  %v2064 = vmul.f32 %v2048, 6.1035156e-05
  %v2065 = vmul.f32 %v2049, 6.1035156e-05
  %v2066 = vmul.f32 %v2050, 6.1035156e-05
  %vm2067 = vcmp.gt.f32.partialorder %v2051, 0.0
  %vm2068 = vcmp.gt.f32.partialorder %v2052, 0.0
  %vm2069 = vcmp.gt.f32.partialorder %v2053, 0.0
  %vm2070 = vcmp.gt.f32.partialorder %v2054, 0.0
  %vm2071 = vcmp.gt.f32.partialorder %v2055, 0.0
  %vm2072 = vcmp.gt.f32.partialorder %v2056, 0.0
  %vm2073 = vcmp.gt.f32.partialorder %v2057, 0.0
  %vm2074 = vcmp.gt.f32.partialorder %v2058, 0.0
  %vm2075 = vcmp.gt.f32.partialorder %v2059, 0.0
  %vm2076 = vcmp.gt.f32.partialorder %v2060, 0.0
  %vm2077 = vcmp.gt.f32.partialorder %v2061, 0.0
  %vm2078 = vcmp.gt.f32.partialorder %v2062, 0.0
  %vm2079 = vcmp.gt.f32.partialorder %v2063, 0.0
  %vm2080 = vcmp.gt.f32.partialorder %v2064, 0.0
  %vm2081 = vcmp.gt.f32.partialorder %v2065, 0.0
  %vm2082 = vcmp.gt.f32.partialorder %v2066, 0.0
  %vm2083 = vcmp.lt.f32.partialorder %v2051, 0.0
  %vm2084 = vcmp.lt.f32.partialorder %v2052, 0.0
  %vm2085 = vcmp.lt.f32.partialorder %v2053, 0.0
  %vm2086 = vcmp.lt.f32.partialorder %v2054, 0.0
  %vm2087 = vcmp.lt.f32.partialorder %v2055, 0.0
  %vm2088 = vcmp.lt.f32.partialorder %v2056, 0.0
  %vm2089 = vcmp.lt.f32.partialorder %v2057, 0.0
  %vm2090 = vcmp.lt.f32.partialorder %v2058, 0.0
  %vm2091 = vcmp.lt.f32.partialorder %v2059, 0.0
  %vm2092 = vcmp.lt.f32.partialorder %v2060, 0.0
  %vm2093 = vcmp.lt.f32.partialorder %v2061, 0.0
  %vm2094 = vcmp.lt.f32.partialorder %v2062, 0.0
  %vm2095 = vcmp.lt.f32.partialorder %v2063, 0.0
  %vm2096 = vcmp.lt.f32.partialorder %v2064, 0.0
  %vm2097 = vcmp.lt.f32.partialorder %v2065, 0.0
  %vm2098 = vcmp.lt.f32.partialorder %v2066, 0.0
  %v2099 = vsel %vm2083, -1.0, 0.0
  %v2100 = vsel %vm2084, -1.0, 0.0
  %v2101 = vsel %vm2085, -1.0, 0.0
  %v2102 = vsel %vm2086, -1.0, 0.0
  %v2103 = vsel %vm2087, -1.0, 0.0
  %v2104 = vsel %vm2088, -1.0, 0.0
  %v2105 = vsel %vm2089, -1.0, 0.0
  %v2106 = vsel %vm2090, -1.0, 0.0
  %v2107 = vsel %vm2091, -1.0, 0.0
  %v2108 = vsel %vm2092, -1.0, 0.0
  %v2109 = vsel %vm2093, -1.0, 0.0
  %v2110 = vsel %vm2094, -1.0, 0.0
  %v2111 = vsel %vm2095, -1.0, 0.0
  %v2112 = vsel %vm2096, -1.0, 0.0
  %v2113 = vsel %vm2097, -1.0, 0.0
  %v2114 = vsel %vm2098, -1.0, 0.0
  %v2115 = vsel %vm2067, 1.0, %v2099
  %v2116 = vsel %vm2068, 1.0, %v2100
  %v2117 = vsel %vm2069, 1.0, %v2101
  %v2118 = vsel %vm2070, 1.0, %v2102
  %v2119 = vsel %vm2071, 1.0, %v2103
  %v2120 = vsel %vm2072, 1.0, %v2104
  %v2121 = vsel %vm2073, 1.0, %v2105
  %v2122 = vsel %vm2074, 1.0, %v2106
  %v2123 = vsel %vm2075, 1.0, %v2107
  %v2124 = vsel %vm2076, 1.0, %v2108
  %v2125 = vsel %vm2077, 1.0, %v2109
  %v2126 = vsel %vm2078, 1.0, %v2110
  %v2127 = vsel %vm2079, 1.0, %v2111
  %v2128 = vsel %vm2080, 1.0, %v2112
  %v2129 = vsel %vm2081, 1.0, %v2113
  %v2130 = vsel %vm2082, 1.0, %v2114
  %v2131 = vand.u32 2147483647, %v2051
  %v2132 = vand.u32 2147483647, %v2052
  %v2133 = vand.u32 2147483647, %v2053
  %v2134 = vand.u32 2147483647, %v2054
  %v2135 = vand.u32 2147483647, %v2055
  %v2136 = vand.u32 2147483647, %v2056
  %v2137 = vand.u32 2147483647, %v2057
  %v2138 = vand.u32 2147483647, %v2058
  %v2139 = vand.u32 2147483647, %v2059
  %v2140 = vand.u32 2147483647, %v2060
  %v2141 = vand.u32 2147483647, %v2061
  %v2142 = vand.u32 2147483647, %v2062
  %v2143 = vand.u32 2147483647, %v2063
  %v2144 = vand.u32 2147483647, %v2064
  %v2145 = vand.u32 2147483647, %v2065
  %v2146 = vand.u32 2147483647, %v2066
  %v2147 = vadd.f32 %v2131, 1e-08
  %v2148 = vadd.f32 %v2132, 1e-08
  %v2149 = vadd.f32 %v2133, 1e-08
  %v2150 = vadd.f32 %v2134, 1e-08
  %v2151 = vadd.f32 %v2135, 1e-08
  %v2152 = vadd.f32 %v2136, 1e-08
  %v2153 = vadd.f32 %v2137, 1e-08
  %v2154 = vadd.f32 %v2138, 1e-08
  %v2155 = vadd.f32 %v2139, 1e-08
  %v2156 = vadd.f32 %v2140, 1e-08
  %v2157 = vadd.f32 %v2141, 1e-08
  %v2158 = vadd.f32 %v2142, 1e-08
  %v2159 = vadd.f32 %v2143, 1e-08
  %v2160 = vadd.f32 %v2144, 1e-08
  %v2161 = vadd.f32 %v2145, 1e-08
  %v2162 = vadd.f32 %v2146, 1e-08
  %v2163 = vrsqrt.pop %v2147
  %v2164 = vmul.f32 %v2147, %v2163
  %vm2165 = vcmp.eq.f32.partialorder %v2147, inf
  %v2166 = vsel %vm2165, %v2147, %v2164
  %vm2167 = vcmp.eq.f32.partialorder %v2147, 0.0
  %v2168 = vand.u32 %v2147, 2147483648
  %v2169 = vsel %vm2167, %v2168, %v2166
  %v2170 = vrsqrt.pop %v2148
  %v2171 = vmul.f32 %v2148, %v2170
  %vm2172 = vcmp.eq.f32.partialorder %v2148, inf
  %v2173 = vsel %vm2172, %v2148, %v2171
  %vm2174 = vcmp.eq.f32.partialorder %v2148, 0.0
  %v2175 = vand.u32 %v2148, 2147483648
  %v2176 = vsel %vm2174, %v2175, %v2173
  %v2177 = vrsqrt.pop %v2149
  %v2178 = vmul.f32 %v2149, %v2177
  %vm2179 = vcmp.eq.f32.partialorder %v2149, inf
  %v2180 = vsel %vm2179, %v2149, %v2178
  %vm2181 = vcmp.eq.f32.partialorder %v2149, 0.0
  %v2182 = vand.u32 %v2149, 2147483648
  %v2183 = vsel %vm2181, %v2182, %v2180
  %v2184 = vrsqrt.pop %v2150
  %v2185 = vmul.f32 %v2150, %v2184
  %vm2186 = vcmp.eq.f32.partialorder %v2150, inf
  %v2187 = vsel %vm2186, %v2150, %v2185
  %vm2188 = vcmp.eq.f32.partialorder %v2150, 0.0
  %v2189 = vand.u32 %v2150, 2147483648
  %v2190 = vsel %vm2188, %v2189, %v2187
  %v2191 = vrsqrt.pop %v2151
  %v2192 = vmul.f32 %v2151, %v2191
  %vm2193 = vcmp.eq.f32.partialorder %v2151, inf
  %v2194 = vsel %vm2193, %v2151, %v2192
  %vm2195 = vcmp.eq.f32.partialorder %v2151, 0.0
  %v2196 = vand.u32 %v2151, 2147483648
  %v2197 = vsel %vm2195, %v2196, %v2194
  %v2198 = vrsqrt.pop %v2152
  %v2199 = vmul.f32 %v2152, %v2198
  %vm2200 = vcmp.eq.f32.partialorder %v2152, inf
  %v2201 = vsel %vm2200, %v2152, %v2199
  %vm2202 = vcmp.eq.f32.partialorder %v2152, 0.0
  %v2203 = vand.u32 %v2152, 2147483648
  %v2204 = vsel %vm2202, %v2203, %v2201
  %v2205 = vrsqrt.pop %v2153
  %v2206 = vmul.f32 %v2153, %v2205
  %vm2207 = vcmp.eq.f32.partialorder %v2153, inf
  %v2208 = vsel %vm2207, %v2153, %v2206
  %vm2209 = vcmp.eq.f32.partialorder %v2153, 0.0
  %v2210 = vand.u32 %v2153, 2147483648
  %v2211 = vsel %vm2209, %v2210, %v2208
  %v2212 = vrsqrt.pop %v2154
  %v2213 = vmul.f32 %v2154, %v2212
  %vm2214 = vcmp.eq.f32.partialorder %v2154, inf
  %v2215 = vsel %vm2214, %v2154, %v2213
  %vm2216 = vcmp.eq.f32.partialorder %v2154, 0.0
  %v2217 = vand.u32 %v2154, 2147483648
  %v2218 = vsel %vm2216, %v2217, %v2215
  %v2219 = vrsqrt.pop %v2155
  %v2220 = vmul.f32 %v2155, %v2219
  %vm2221 = vcmp.eq.f32.partialorder %v2155, inf
  %v2222 = vsel %vm2221, %v2155, %v2220
  %vm2223 = vcmp.eq.f32.partialorder %v2155, 0.0
  %v2224 = vand.u32 %v2155, 2147483648
  %v2225 = vsel %vm2223, %v2224, %v2222
  %v2226 = vrsqrt.pop %v2156
  %v2227 = vmul.f32 %v2156, %v2226
  %vm2228 = vcmp.eq.f32.partialorder %v2156, inf
  %v2229 = vsel %vm2228, %v2156, %v2227
  %vm2230 = vcmp.eq.f32.partialorder %v2156, 0.0
  %v2231 = vand.u32 %v2156, 2147483648
  %v2232 = vsel %vm2230, %v2231, %v2229
  %v2233 = vrsqrt.pop %v2157
  %v2234 = vmul.f32 %v2157, %v2233
  %vm2235 = vcmp.eq.f32.partialorder %v2157, inf
  %v2236 = vsel %vm2235, %v2157, %v2234
  %vm2237 = vcmp.eq.f32.partialorder %v2157, 0.0
  %v2238 = vand.u32 %v2157, 2147483648
  %v2239 = vsel %vm2237, %v2238, %v2236
  %v2240 = vrsqrt.pop %v2158
  %v2241 = vmul.f32 %v2158, %v2240
  %vm2242 = vcmp.eq.f32.partialorder %v2158, inf
  %v2243 = vsel %vm2242, %v2158, %v2241
  %vm2244 = vcmp.eq.f32.partialorder %v2158, 0.0
  %v2245 = vand.u32 %v2158, 2147483648
  %v2246 = vsel %vm2244, %v2245, %v2243
  %v2247 = vrsqrt.pop %v2159
  %v2248 = vmul.f32 %v2159, %v2247
  %vm2249 = vcmp.eq.f32.partialorder %v2159, inf
  %v2250 = vsel %vm2249, %v2159, %v2248
  %vm2251 = vcmp.eq.f32.partialorder %v2159, 0.0
  %v2252 = vand.u32 %v2159, 2147483648
  %v2253 = vsel %vm2251, %v2252, %v2250
  %v2254 = vrsqrt.pop %v2160
  %v2255 = vmul.f32 %v2160, %v2254
  %vm2256 = vcmp.eq.f32.partialorder %v2160, inf
  %v2257 = vsel %vm2256, %v2160, %v2255
  %vm2258 = vcmp.eq.f32.partialorder %v2160, 0.0
  %v2259 = vand.u32 %v2160, 2147483648
  %v2260 = vsel %vm2258, %v2259, %v2257
  %v2261 = vrsqrt.pop %v2161
  %v2262 = vmul.f32 %v2161, %v2261
  %vm2263 = vcmp.eq.f32.partialorder %v2161, inf
  %v2264 = vsel %vm2263, %v2161, %v2262
  %vm2265 = vcmp.eq.f32.partialorder %v2161, 0.0
  %v2266 = vand.u32 %v2161, 2147483648
  %v2267 = vsel %vm2265, %v2266, %v2264
  %v2268 = vrsqrt.pop %v2162
  %v2269 = vmul.f32 %v2162, %v2268
  %vm2270 = vcmp.eq.f32.partialorder %v2162, inf
  %v2271 = vsel %vm2270, %v2162, %v2269
  %vm2272 = vcmp.eq.f32.partialorder %v2162, 0.0
  %v2273 = vand.u32 %v2162, 2147483648
  %v2274 = vsel %vm2272, %v2273, %v2271
  %v2275 = vmul.f32 %v2115, %v2169
  %v2276 = vmul.f32 %v2116, %v2176
  %v2277 = vmul.f32 %v2117, %v2183
  %v2278 = vmul.f32 %v2118, %v2190
  %v2279 = vmul.f32 %v2119, %v2197
  %v2280 = vmul.f32 %v2120, %v2204
  %v2281 = vmul.f32 %v2121, %v2211
  %v2282 = vmul.f32 %v2122, %v2218
  %v2283 = vmul.f32 %v2123, %v2225
  %v2284 = vmul.f32 %v2124, %v2232
  %v2285 = vmul.f32 %v2125, %v2239
  %v2286 = vmul.f32 %v2126, %v2246
  %v2287 = vmul.f32 %v2127, %v2253
  %v2288 = vmul.f32 %v2128, %v2260
  %v2289 = vmul.f32 %v2129, %v2267
  %v2290 = vmul.f32 %v2130, %v2274
  %v2291 = vmul.f32 %v2275, %v2275
  %v2292 = vmul.f32 %v2276, %v2276
  %v2293 = vmul.f32 %v2277, %v2277
  %v2294 = vmul.f32 %v2278, %v2278
  %v2295 = vmul.f32 %v2279, %v2279
  %v2296 = vmul.f32 %v2280, %v2280
  %v2297 = vmul.f32 %v2281, %v2281
  %v2298 = vmul.f32 %v2282, %v2282
  %v2299 = vmul.f32 %v2283, %v2283
  %v2300 = vmul.f32 %v2284, %v2284
  %v2301 = vmul.f32 %v2285, %v2285
  %v2302 = vmul.f32 %v2286, %v2286
  %v2303 = vmul.f32 %v2287, %v2287
  %v2304 = vmul.f32 %v2288, %v2288
  %v2305 = vmul.f32 %v2289, %v2289
  %v2306 = vmul.f32 %v2290, %v2290
  %v2307 = vadd.f32 %v2291, %v2292
  %v2308 = vadd.f32 %v2307, %v2293
  %v2309 = vadd.f32 %v2308, %v2294
  %v2310 = vadd.f32 %v2309, %v2295
  %v2311 = vadd.f32 %v2310, %v2296
  %v2312 = vadd.f32 %v2311, %v2297
  %v2313 = vadd.f32 %v2312, %v2298
  %v2314 = vadd.f32 %v2313, %v2299
  %v2315 = vadd.f32 %v2314, %v2300
  %v2316 = vadd.f32 %v2315, %v2301
  %v2317 = vadd.f32 %v2316, %v2302
  %v2318 = vadd.f32 %v2317, %v2303
  %v2319 = vadd.f32 %v2318, %v2304
  %v2320 = vadd.f32 %v2319, %v2305
  %v2321 = vadd.f32 %v2320, %v2306
  %2322 = vadd.xlane.f32.xlu0 %v2321
  %v2323 = vpop.xlane.xlu0 %2322
  %v2324 = vrot.slane %v2323, 4
  %v2325 = vadd.f32 %v2323, %v2324
  %v2326 = vrot.slane %v2325, 2
  %v2327 = vadd.f32 %v2325, %v2326
  %v2328 = vrot.slane %v2327, 1
  %v2329 = vadd.f32 %v2327, %v2328
  %s2330 = vtos %v2329
  %v2331 = vstv %s2330
  %v2332 = vrsqrt.pop %v2331
  %v2333 = vmul.f32 %v2331, %v2332
  %vm2334 = vcmp.eq.f32.partialorder %v2331, inf
  %v2335 = vsel %vm2334, %v2331, %v2333
  %vm2336 = vcmp.eq.f32.partialorder %v2331, 0.0
  %v2337 = vand.u32 %v2331, 2147483648
  %v2338 = vsel %vm2336, %v2337, %v2335
  %s2339 = vtos %v2338
  %s2340 = smax.f32 %s2339, 1e-12
  %v2341 = vstv %s2340
  %v2342 = vrcp.pop %v2341
  %v2343 = vmul.f32 %v2275, %v2342
  %v2344 = vmul.f32 %v2276, %v2342
  %v2345 = vmul.f32 %v2277, %v2342
  %v2346 = vmul.f32 %v2278, %v2342
  %v2347 = vmul.f32 %v2279, %v2342
  %v2348 = vmul.f32 %v2280, %v2342
  %v2349 = vmul.f32 %v2281, %v2342
  %v2350 = vmul.f32 %v2282, %v2342
  %v2351 = vmul.f32 %v2283, %v2342
  %v2352 = vmul.f32 %v2284, %v2342
  %v2353 = vmul.f32 %v2285, %v2342
  %v2354 = vmul.f32 %v2286, %v2342
  %v2355 = vmul.f32 %v2287, %v2342
  %v2356 = vmul.f32 %v2288, %v2342
  %v2357 = vmul.f32 %v2289, %v2342
  %v2358 = vmul.f32 %v2290, %v2342
  %s2359 = scalar_lea.vmem %s6, 128
  %2360 = vst [vmem:[%s2359] sm:$0xff] %v2343
  %2361 = vst [vmem:[%s2359 + $0x8] sm:$0xff] %v2344
  %2362 = vst [vmem:[%s2359 + $0x10] sm:$0xff] %v2345
  %2363 = vst [vmem:[%s2359 + $0x18] sm:$0xff] %v2346
  %2364 = vst [vmem:[%s2359 + $0x20] sm:$0xff] %v2347
  %2365 = vst [vmem:[%s2359 + $0x28] sm:$0xff] %v2348
  %2366 = vst [vmem:[%s2359 + $0x30] sm:$0xff] %v2349
  %2367 = vst [vmem:[%s2359 + $0x38] sm:$0xff] %v2350
  %2368 = vst [vmem:[%s2359 + $0x40] sm:$0xff] %v2351
  %2369 = vst [vmem:[%s2359 + $0x48] sm:$0xff] %v2352
  %2370 = vst [vmem:[%s2359 + $0x50] sm:$0xff] %v2353
  %2371 = vst [vmem:[%s2359 + $0x58] sm:$0xff] %v2354
  %2372 = vst [vmem:[%s2359 + $0x60] sm:$0xff] %v2355
  %2373 = vst [vmem:[%s2359 + $0x68] sm:$0xff] %v2356
  %2374 = vst [vmem:[%s2359 + $0x70] sm:$0xff] %v2357
  %2375 = vst [vmem:[%s2359 + $0x78] sm:$0xff] %v2358
  // Predicated region
  $region26: #{pooling_cbp_forward.3} parent=0 // pred_check
    _
  $region27: #{pooling_cbp_forward.3} parent=0 // pred_check_branch
    %2377 = sbr.rel (0) target = $region29
  $region28: #{pooling_cbp_forward.3} parent=0 // pred_region
    _
  $region29: #{pooling_cbp_forward.3} parent=0 // pred_fallthru
    _
  // Predicated region
  $region30: #{pooling_cbp_forward.3} parent=0 // pred_check
    _
  $region31: #{pooling_cbp_forward.3} parent=0 // pred_check_branch
    %2379 = sbr.rel (0) target = $region33
  $region32: #{pooling_cbp_forward.3} parent=0 // pred_region
    _
  $region33: #{pooling_cbp_forward.3} parent=0 // pred_fallthru
    _

</llo_original>
